<compile_context>
chip_gen: v6e
topology: v6e:2x2x1
jax: 0.10.0
libtpu: 0.0.40
codegen_flags: <defaults>
</compile_context>

<pallas_src>
import jax
import jax.numpy as jnp
from jax.experimental import pallas as pl
from jax.experimental.pallas import tpu as pltpu


def _pairwise_logits_kernel(a_ref, bt_ref, w_ref, out_ref):
    """out[k, i, j] = sum_d |a[i, d] - bt[d, j]| * w[k, d],  k in {0, 1}."""
    tm = a_ref.shape[0]
    tn = bt_ref.shape[1]
    dsz = a_ref.shape[1]

    acc0 = jnp.zeros((tm, tn), jnp.float32)
    acc1 = jnp.zeros((tm, tn), jnp.float32)

    # Fused reduction over D (statically unrolled: D is small for this head).
    # Per step: one (tm, 1) column of a (lane-broadcast), one (1, tn) row of b^T
    # (cheap sublane-broadcast), and 6 VPU ops on the (tm, tn) tile.  No (tm, D, tn)
    # intermediate, no XLU sublane reduction, no relayout of the full a tile.
    for d in range(dsz):
        a_col = a_ref[:, d:d + 1]         # (tm, 1)
        b_row = bt_ref[d:d + 1, :]        # (1, tn)
        diff = jnp.abs(a_col - b_row)     # (tm, tn), pure VPU
        acc0 = acc0 + diff * w_ref[0, d]  # scalar weights straight from SMEM
        acc1 = acc1 + diff * w_ref[1, d]

    # Lane-dense stores: last dim is the (multiple-of-128) Nb tile, not 2.
    out_ref[0, :, :] = acc0.astype(out_ref.dtype)
    out_ref[1, :, :] = acc1.astype(out_ref.dtype)


def _round_up(x, m):
    return (x + m - 1) // m * m


def _pick_tiles(na, nb):
    """Tile sizes + padded extents.

    Lane (Nb) tile is 128 or 256 (always lane-dense, minimal padding); the sublane (Na)
    tile is a multiple of 8 capped so 2 f32 accumulators + temporaries stay in vregs.
    """
    nb_p = _round_up(nb, 128)
    if nb_p <= 256:
        tn = nb_p
    elif nb_p % 256 == 0:
        tn = 256
    else:
        tn = 128                 # e.g. 384 stays 384 (3 tiles) instead of padding to 512
    nb_pad = nb_p

    tm_cap = max(8, ((12288 // tn) // 8) * 8)   # 96 for tn=128, 48 for tn=256
    na_p = _round_up(na, 8)
    if na_p <= tm_cap:
        tm, na_pad = na_p, na_p
    else:
        cands = []
        for t in range(tm_cap, 7, -8):
            pad = _round_up(na_p, t)
            cands.append((pad // t, pad, -t, t))   # fewest tiles, least pad, widest tile
        _, na_pad, _, tm = min(cands)
    return tm, tn, na_pad, nb_pad


def binary_classifier(a, b, weight):
    """a: (Na, D), b: (Nb, D), weight: (2, D)  ->  logits (Na*Nb, 2) float32."""
    na, d = a.shape
    nb, d2 = b.shape
    assert d == d2 and weight.shape == (2, d)

    tm, tn, na_pad, nb_pad = _pick_tiles(na, nb)
    if na_pad != na:
        a = jnp.pad(a, ((0, na_pad - na), (0, 0)))
    if nb_pad != nb:
        b = jnp.pad(b, ((0, nb_pad - nb), (0, 0)))
    bt = b.T                                   # (D, Nb_pad): Nb on the lane axis
    grid = (na_pad // tm, nb_pad // tn)

    # Advisory cost (a re-read per j-tile, bt per i-tile) + modest VMEM request
    # (double-buffered a / b^T / output tiles only; weight lives in SMEM).
    flops = 6 * na_pad * nb_pad * d
    bytes_accessed = 4 * (na_pad * d * grid[1] + nb_pad * d * grid[0]
                          + 2 * na_pad * nb_pad + 2 * d)
    vmem_needed = 4 * (2 * tm * d + 2 * d * tn + 2 * 2 * tm * tn)
    vmem_limit = int(min(32 * 1024 * 1024, max(16 * 1024 * 1024, 4 * vmem_needed)))

    out = pl.pallas_call(
        _pairwise_logits_kernel,
        out_shape=jax.ShapeDtypeStruct((2, na_pad, nb_pad), jnp.float32),
        grid_spec=pltpu.PrefetchScalarGridSpec(
            num_scalar_prefetch=0,
            grid=grid,
            in_specs=[
                pl.BlockSpec((tm, d), lambda i, j: (i, 0)),          # a tile   (VMEM)
                pl.BlockSpec((d, tn), lambda i, j: (0, j)),          # b^T tile (VMEM)
                pl.BlockSpec(memory_space=pltpu.MemorySpace.SMEM),   # (2, D) weights
            ],
            out_specs=pl.BlockSpec((2, tm, tn), lambda i, j: (0, i, j)),
        ),
        compiler_params=pltpu.CompilerParams(
            dimension_semantics=("parallel", "parallel"),
            vmem_limit_bytes=vmem_limit,
        ),
        cost_estimate=pl.CostEstimate(
            flops=flops, transcendentals=0, bytes_accessed=bytes_accessed),
    )(a, bt, weight)

    # (2, Na_pad, Nb_pad) -> drop padding -> (Na, Nb, 2) -> (Na*Nb, 2) (PyTorch layout).
    out = out[:, :na, :nb]
    return out.transpose(1, 2, 0).reshape(na * nb, 2)


if __name__ == "__main__":
    key = jax.random.PRNGKey(0)
    in_planes = 32
    na, nb = 72, 300   # small, but exercises the tiled/padded grid path (grid = (1, 3))

    ka, kb, kw = jax.random.split(key, 3)
    a = jax.random.normal(ka, (na, in_planes), dtype=jnp.float32)
    b = jax.random.normal(kb, (nb, in_planes), dtype=jnp.float32)
    # weights_init_classifier: normal(std=0.001) for the Linear weight, no bias
    w = 0.001 * jax.random.normal(kw, (2, in_planes), dtype=jnp.float32)

    logits = binary_classifier(a, b, w)
    logits = jax.block_until_ready(logits)

    # pure-JAX reference (original PyTorch semantics)
    diff = jnp.abs(a[:, None, :] - b[None, :, :]).reshape(-1, in_planes)
    ref = diff @ w.T
    assert logits.shape == (na * nb, 2)
    assert jnp.allclose(logits, ref, atol=1e-5, rtol=1e-5), float(
        jnp.max(jnp.abs(logits - ref)))

    print("KERNEL_OK")
</pallas_src>

<mosaic_0001>
module attributes {stable_mosaic.version = 11 : i64} {
  func.func @_pairwise_logits_kernel(%arg0: i32, %arg1: i32, %arg2: memref<72x32xf32, #tpu.memory_space<vmem>>, %arg3: memref<32x128xf32, #tpu.memory_space<vmem>>, %arg4: memref<2x32xf32, #tpu.memory_space<smem>>, %arg5: memref<2x72x128xf32, #tpu.memory_space<vmem>>) attributes {dimension_semantics = [#tpu.dimension_semantics<parallel>, #tpu.dimension_semantics<parallel>], iteration_bounds = array<i64: 1, 3>, scalar_prefetch = 0 : i64, scratch_operands = 0 : i64, tpu.core_type = #tpu.core_type<tc>, window_params = [{transform_indices = @transform_0, window_bounds = array<i64: 72, 32>}, {transform_indices = @transform_1, window_bounds = array<i64: 32, 128>}, {transform_indices = @transform_2, window_bounds = array<i64: 2, 32>}, {transform_indices = @transform_3, window_bounds = array<i64: 2, 72, 128>}]} {
    %cst = arith.constant 0.000000e+00 : f32
    %0 = vector.broadcast %cst : f32 to vector<72x128xf32>
    %cst_0 = arith.constant 0.000000e+00 : f32
    %1 = vector.broadcast %cst_0 : f32 to vector<72x128xf32>
    %c0 = arith.constant 0 : index
    %c0_1 = arith.constant 0 : index
    %2 = vector.load %arg2[%c0, %c0_1] : memref<72x32xf32, #tpu.memory_space<vmem>>, vector<72x1xf32>
    %c0_2 = arith.constant 0 : index
    %c0_3 = arith.constant 0 : index
    %3 = vector.load %arg3[%c0_2, %c0_3] : memref<32x128xf32, #tpu.memory_space<vmem>>, vector<1x128xf32>
    %4 = vector.broadcast %2 : vector<72x1xf32> to vector<72x128xf32>
    %5 = vector.broadcast %3 : vector<1x128xf32> to vector<72x128xf32>
    %6 = arith.subf %4, %5 : vector<72x128xf32>
    %7 = math.absf %6 : vector<72x128xf32>
    %c0_4 = arith.constant 0 : index
    %c0_5 = arith.constant 0 : index
    %8 = memref.load %arg4[%c0_4, %c0_5] : memref<2x32xf32, #tpu.memory_space<smem>>
    %9 = vector.broadcast %8 : f32 to vector<72x128xf32>
    %10 = arith.mulf %7, %9 : vector<72x128xf32>
    %11 = arith.addf %0, %10 : vector<72x128xf32>
    %c1 = arith.constant 1 : index
    %c0_6 = arith.constant 0 : index
    %12 = memref.load %arg4[%c1, %c0_6] : memref<2x32xf32, #tpu.memory_space<smem>>
    %13 = vector.broadcast %12 : f32 to vector<72x128xf32>
    %14 = arith.mulf %7, %13 : vector<72x128xf32>
    %15 = arith.addf %1, %14 : vector<72x128xf32>
    %c0_7 = arith.constant 0 : index
    %c1_8 = arith.constant 1 : index
    %16 = vector.load %arg2[%c0_7, %c1_8] : memref<72x32xf32, #tpu.memory_space<vmem>>, vector<72x1xf32>
    %c1_9 = arith.constant 1 : index
    %c0_10 = arith.constant 0 : index
    %17 = vector.load %arg3[%c1_9, %c0_10] : memref<32x128xf32, #tpu.memory_space<vmem>>, vector<1x128xf32>
    %18 = vector.broadcast %16 : vector<72x1xf32> to vector<72x128xf32>
    %19 = vector.broadcast %17 : vector<1x128xf32> to vector<72x128xf32>
    %20 = arith.subf %18, %19 : vector<72x128xf32>
    %21 = math.absf %20 : vector<72x128xf32>
    %c0_11 = arith.constant 0 : index
    %c1_12 = arith.constant 1 : index
    %22 = memref.load %arg4[%c0_11, %c1_12] : memref<2x32xf32, #tpu.memory_space<smem>>
    %23 = vector.broadcast %22 : f32 to vector<72x128xf32>
    %24 = arith.mulf %21, %23 : vector<72x128xf32>
    %25 = arith.addf %11, %24 : vector<72x128xf32>
    %c1_13 = arith.constant 1 : index
    %c1_14 = arith.constant 1 : index
    %26 = memref.load %arg4[%c1_13, %c1_14] : memref<2x32xf32, #tpu.memory_space<smem>>
    %27 = vector.broadcast %26 : f32 to vector<72x128xf32>
    %28 = arith.mulf %21, %27 : vector<72x128xf32>
    %29 = arith.addf %15, %28 : vector<72x128xf32>
    %c0_15 = arith.constant 0 : index
    %c2 = arith.constant 2 : index
    %30 = vector.load %arg2[%c0_15, %c2] : memref<72x32xf32, #tpu.memory_space<vmem>>, vector<72x1xf32>
    %c2_16 = arith.constant 2 : index
    %c0_17 = arith.constant 0 : index
    %31 = vector.load %arg3[%c2_16, %c0_17] : memref<32x128xf32, #tpu.memory_space<vmem>>, vector<1x128xf32>
    %32 = vector.broadcast %30 : vector<72x1xf32> to vector<72x128xf32>
    %33 = vector.broadcast %31 : vector<1x128xf32> to vector<72x128xf32>
    %34 = arith.subf %32, %33 : vector<72x128xf32>
    %35 = math.absf %34 : vector<72x128xf32>
    %c0_18 = arith.constant 0 : index
    %c2_19 = arith.constant 2 : index
    %36 = memref.load %arg4[%c0_18, %c2_19] : memref<2x32xf32, #tpu.memory_space<smem>>
    %37 = vector.broadcast %36 : f32 to vector<72x128xf32>
    %38 = arith.mulf %35, %37 : vector<72x128xf32>
    %39 = arith.addf %25, %38 : vector<72x128xf32>
    %c1_20 = arith.constant 1 : index
    %c2_21 = arith.constant 2 : index
    %40 = memref.load %arg4[%c1_20, %c2_21] : memref<2x32xf32, #tpu.memory_space<smem>>
    %41 = vector.broadcast %40 : f32 to vector<72x128xf32>
    %42 = arith.mulf %35, %41 : vector<72x128xf32>
    %43 = arith.addf %29, %42 : vector<72x128xf32>
    %c0_22 = arith.constant 0 : index
    %c3 = arith.constant 3 : index
    %44 = vector.load %arg2[%c0_22, %c3] : memref<72x32xf32, #tpu.memory_space<vmem>>, vector<72x1xf32>
    %c3_23 = arith.constant 3 : index
    %c0_24 = arith.constant 0 : index
    %45 = vector.load %arg3[%c3_23, %c0_24] : memref<32x128xf32, #tpu.memory_space<vmem>>, vector<1x128xf32>
    %46 = vector.broadcast %44 : vector<72x1xf32> to vector<72x128xf32>
    %47 = vector.broadcast %45 : vector<1x128xf32> to vector<72x128xf32>
    %48 = arith.subf %46, %47 : vector<72x128xf32>
    %49 = math.absf %48 : vector<72x128xf32>
    %c0_25 = arith.constant 0 : index
    %c3_26 = arith.constant 3 : index
    %50 = memref.load %arg4[%c0_25, %c3_26] : memref<2x32xf32, #tpu.memory_space<smem>>
    %51 = vector.broadcast %50 : f32 to vector<72x128xf32>
    %52 = arith.mulf %49, %51 : vector<72x128xf32>
    %53 = arith.addf %39, %52 : vector<72x128xf32>
    %c1_27 = arith.constant 1 : index
    %c3_28 = arith.constant 3 : index
    %54 = memref.load %arg4[%c1_27, %c3_28] : memref<2x32xf32, #tpu.memory_space<smem>>
    %55 = vector.broadcast %54 : f32 to vector<72x128xf32>
    %56 = arith.mulf %49, %55 : vector<72x128xf32>
    %57 = arith.addf %43, %56 : vector<72x128xf32>
    %c0_29 = arith.constant 0 : index
    %c4 = arith.constant 4 : index
    %58 = vector.load %arg2[%c0_29, %c4] : memref<72x32xf32, #tpu.memory_space<vmem>>, vector<72x1xf32>
    %c4_30 = arith.constant 4 : index
    %c0_31 = arith.constant 0 : index
    %59 = vector.load %arg3[%c4_30, %c0_31] : memref<32x128xf32, #tpu.memory_space<vmem>>, vector<1x128xf32>
    %60 = vector.broadcast %58 : vector<72x1xf32> to vector<72x128xf32>
    %61 = vector.broadcast %59 : vector<1x128xf32> to vector<72x128xf32>
    %62 = arith.subf %60, %61 : vector<72x128xf32>
    %63 = math.absf %62 : vector<72x128xf32>
    %c0_32 = arith.constant 0 : index
    %c4_33 = arith.constant 4 : index
    %64 = memref.load %arg4[%c0_32, %c4_33] : memref<2x32xf32, #tpu.memory_space<smem>>
    %65 = vector.broadcast %64 : f32 to vector<72x128xf32>
    %66 = arith.mulf %63, %65 : vector<72x128xf32>
    %67 = arith.addf %53, %66 : vector<72x128xf32>
    %c1_34 = arith.constant 1 : index
    %c4_35 = arith.constant 4 : index
    %68 = memref.load %arg4[%c1_34, %c4_35] : memref<2x32xf32, #tpu.memory_space<smem>>
    %69 = vector.broadcast %68 : f32 to vector<72x128xf32>
    %70 = arith.mulf %63, %69 : vector<72x128xf32>
    %71 = arith.addf %57, %70 : vector<72x128xf32>
    %c0_36 = arith.constant 0 : index
    %c5 = arith.constant 5 : index
    %72 = vector.load %arg2[%c0_36, %c5] : memref<72x32xf32, #tpu.memory_space<vmem>>, vector<72x1xf32>
    %c5_37 = arith.constant 5 : index
    %c0_38 = arith.constant 0 : index
    %73 = vector.load %arg3[%c5_37, %c0_38] : memref<32x128xf32, #tpu.memory_space<vmem>>, vector<1x128xf32>
    %74 = vector.broadcast %72 : vector<72x1xf32> to vector<72x128xf32>
    %75 = vector.broadcast %73 : vector<1x128xf32> to vector<72x128xf32>
    %76 = arith.subf %74, %75 : vector<72x128xf32>
    %77 = math.absf %76 : vector<72x128xf32>
    %c0_39 = arith.constant 0 : index
    %c5_40 = arith.constant 5 : index
    %78 = memref.load %arg4[%c0_39, %c5_40] : memref<2x32xf32, #tpu.memory_space<smem>>
    %79 = vector.broadcast %78 : f32 to vector<72x128xf32>
    %80 = arith.mulf %77, %79 : vector<72x128xf32>
    %81 = arith.addf %67, %80 : vector<72x128xf32>
    %c1_41 = arith.constant 1 : index
    %c5_42 = arith.constant 5 : index
    %82 = memref.load %arg4[%c1_41, %c5_42] : memref<2x32xf32, #tpu.memory_space<smem>>
    %83 = vector.broadcast %82 : f32 to vector<72x128xf32>
    %84 = arith.mulf %77, %83 : vector<72x128xf32>
    %85 = arith.addf %71, %84 : vector<72x128xf32>
    %c0_43 = arith.constant 0 : index
    %c6 = arith.constant 6 : index
    %86 = vector.load %arg2[%c0_43, %c6] : memref<72x32xf32, #tpu.memory_space<vmem>>, vector<72x1xf32>
    %c6_44 = arith.constant 6 : index
    %c0_45 = arith.constant 0 : index
    %87 = vector.load %arg3[%c6_44, %c0_45] : memref<32x128xf32, #tpu.memory_space<vmem>>, vector<1x128xf32>
    %88 = vector.broadcast %86 : vector<72x1xf32> to vector<72x128xf32>
    %89 = vector.broadcast %87 : vector<1x128xf32> to vector<72x128xf32>
    %90 = arith.subf %88, %89 : vector<72x128xf32>
    %91 = math.absf %90 : vector<72x128xf32>
    %c0_46 = arith.constant 0 : index
    %c6_47 = arith.constant 6 : index
    %92 = memref.load %arg4[%c0_46, %c6_47] : memref<2x32xf32, #tpu.memory_space<smem>>
    %93 = vector.broadcast %92 : f32 to vector<72x128xf32>
    %94 = arith.mulf %91, %93 : vector<72x128xf32>
    %95 = arith.addf %81, %94 : vector<72x128xf32>
    %c1_48 = arith.constant 1 : index
    %c6_49 = arith.constant 6 : index
    %96 = memref.load %arg4[%c1_48, %c6_49] : memref<2x32xf32, #tpu.memory_space<smem>>
    %97 = vector.broadcast %96 : f32 to vector<72x128xf32>
    %98 = arith.mulf %91, %97 : vector<72x128xf32>
    %99 = arith.addf %85, %98 : vector<72x128xf32>
    %c0_50 = arith.constant 0 : index
    %c7 = arith.constant 7 : index
    %100 = vector.load %arg2[%c0_50, %c7] : memref<72x32xf32, #tpu.memory_space<vmem>>, vector<72x1xf32>
    %c7_51 = arith.constant 7 : index
    %c0_52 = arith.constant 0 : index
    %101 = vector.load %arg3[%c7_51, %c0_52] : memref<32x128xf32, #tpu.memory_space<vmem>>, vector<1x128xf32>
    %102 = vector.broadcast %100 : vector<72x1xf32> to vector<72x128xf32>
    %103 = vector.broadcast %101 : vector<1x128xf32> to vector<72x128xf32>
    %104 = arith.subf %102, %103 : vector<72x128xf32>
    %105 = math.absf %104 : vector<72x128xf32>
    %c0_53 = arith.constant 0 : index
    %c7_54 = arith.constant 7 : index
    %106 = memref.load %arg4[%c0_53, %c7_54] : memref<2x32xf32, #tpu.memory_space<smem>>
    %107 = vector.broadcast %106 : f32 to vector<72x128xf32>
    %108 = arith.mulf %105, %107 : vector<72x128xf32>
    %109 = arith.addf %95, %108 : vector<72x128xf32>
    %c1_55 = arith.constant 1 : index
    %c7_56 = arith.constant 7 : index
    %110 = memref.load %arg4[%c1_55, %c7_56] : memref<2x32xf32, #tpu.memory_space<smem>>
    %111 = vector.broadcast %110 : f32 to vector<72x128xf32>
    %112 = arith.mulf %105, %111 : vector<72x128xf32>
    %113 = arith.addf %99, %112 : vector<72x128xf32>
    %c0_57 = arith.constant 0 : index
    %c8 = arith.constant 8 : index
    %114 = vector.load %arg2[%c0_57, %c8] : memref<72x32xf32, #tpu.memory_space<vmem>>, vector<72x1xf32>
    %c8_58 = arith.constant 8 : index
    %c0_59 = arith.constant 0 : index
    %115 = vector.load %arg3[%c8_58, %c0_59] : memref<32x128xf32, #tpu.memory_space<vmem>>, vector<1x128xf32>
    %116 = vector.broadcast %114 : vector<72x1xf32> to vector<72x128xf32>
    %117 = vector.broadcast %115 : vector<1x128xf32> to vector<72x128xf32>
    %118 = arith.subf %116, %117 : vector<72x128xf32>
    %119 = math.absf %118 : vector<72x128xf32>
    %c0_60 = arith.constant 0 : index
    %c8_61 = arith.constant 8 : index
    %120 = memref.load %arg4[%c0_60, %c8_61] : memref<2x32xf32, #tpu.memory_space<smem>>
    %121 = vector.broadcast %120 : f32 to vector<72x128xf32>
    %122 = arith.mulf %119, %121 : vector<72x128xf32>
    %123 = arith.addf %109, %122 : vector<72x128xf32>
    %c1_62 = arith.constant 1 : index
    %c8_63 = arith.constant 8 : index
    %124 = memref.load %arg4[%c1_62, %c8_63] : memref<2x32xf32, #tpu.memory_space<smem>>
    %125 = vector.broadcast %124 : f32 to vector<72x128xf32>
    %126 = arith.mulf %119, %125 : vector<72x128xf32>
    %127 = arith.addf %113, %126 : vector<72x128xf32>
    %c0_64 = arith.constant 0 : index
    %c9 = arith.constant 9 : index
    %128 = vector.load %arg2[%c0_64, %c9] : memref<72x32xf32, #tpu.memory_space<vmem>>, vector<72x1xf32>
    %c9_65 = arith.constant 9 : index
    %c0_66 = arith.constant 0 : index
    %129 = vector.load %arg3[%c9_65, %c0_66] : memref<32x128xf32, #tpu.memory_space<vmem>>, vector<1x128xf32>
    %130 = vector.broadcast %128 : vector<72x1xf32> to vector<72x128xf32>
    %131 = vector.broadcast %129 : vector<1x128xf32> to vector<72x128xf32>
    %132 = arith.subf %130, %131 : vector<72x128xf32>
    %133 = math.absf %132 : vector<72x128xf32>
    %c0_67 = arith.constant 0 : index
    %c9_68 = arith.constant 9 : index
    %134 = memref.load %arg4[%c0_67, %c9_68] : memref<2x32xf32, #tpu.memory_space<smem>>
    %135 = vector.broadcast %134 : f32 to vector<72x128xf32>
    %136 = arith.mulf %133, %135 : vector<72x128xf32>
    %137 = arith.addf %123, %136 : vector<72x128xf32>
    %c1_69 = arith.constant 1 : index
    %c9_70 = arith.constant 9 : index
    %138 = memref.load %arg4[%c1_69, %c9_70] : memref<2x32xf32, #tpu.memory_space<smem>>
    %139 = vector.broadcast %138 : f32 to vector<72x128xf32>
    %140 = arith.mulf %133, %139 : vector<72x128xf32>
    %141 = arith.addf %127, %140 : vector<72x128xf32>
    %c0_71 = arith.constant 0 : index
    %c10 = arith.constant 10 : index
    %142 = vector.load %arg2[%c0_71, %c10] : memref<72x32xf32, #tpu.memory_space<vmem>>, vector<72x1xf32>
    %c10_72 = arith.constant 10 : index
    %c0_73 = arith.constant 0 : index
    %143 = vector.load %arg3[%c10_72, %c0_73] : memref<32x128xf32, #tpu.memory_space<vmem>>, vector<1x128xf32>
    %144 = vector.broadcast %142 : vector<72x1xf32> to vector<72x128xf32>
    %145 = vector.broadcast %143 : vector<1x128xf32> to vector<72x128xf32>
    %146 = arith.subf %144, %145 : vector<72x128xf32>
    %147 = math.absf %146 : vector<72x128xf32>
    %c0_74 = arith.constant 0 : index
    %c10_75 = arith.constant 10 : index
    %148 = memref.load %arg4[%c0_74, %c10_75] : memref<2x32xf32, #tpu.memory_space<smem>>
    %149 = vector.broadcast %148 : f32 to vector<72x128xf32>
    %150 = arith.mulf %147, %149 : vector<72x128xf32>
    %151 = arith.addf %137, %150 : vector<72x128xf32>
    %c1_76 = arith.constant 1 : index
    %c10_77 = arith.constant 10 : index
    %152 = memref.load %arg4[%c1_76, %c10_77] : memref<2x32xf32, #tpu.memory_space<smem>>
    %153 = vector.broadcast %152 : f32 to vector<72x128xf32>
    %154 = arith.mulf %147, %153 : vector<72x128xf32>
    %155 = arith.addf %141, %154 : vector<72x128xf32>
    %c0_78 = arith.constant 0 : index
    %c11 = arith.constant 11 : index
    %156 = vector.load %arg2[%c0_78, %c11] : memref<72x32xf32, #tpu.memory_space<vmem>>, vector<72x1xf32>
    %c11_79 = arith.constant 11 : index
    %c0_80 = arith.constant 0 : index
    %157 = vector.load %arg3[%c11_79, %c0_80] : memref<32x128xf32, #tpu.memory_space<vmem>>, vector<1x128xf32>
    %158 = vector.broadcast %156 : vector<72x1xf32> to vector<72x128xf32>
    %159 = vector.broadcast %157 : vector<1x128xf32> to vector<72x128xf32>
    %160 = arith.subf %158, %159 : vector<72x128xf32>
    %161 = math.absf %160 : vector<72x128xf32>
    %c0_81 = arith.constant 0 : index
    %c11_82 = arith.constant 11 : index
    %162 = memref.load %arg4[%c0_81, %c11_82] : memref<2x32xf32, #tpu.memory_space<smem>>
    %163 = vector.broadcast %162 : f32 to vector<72x128xf32>
    %164 = arith.mulf %161, %163 : vector<72x128xf32>
    %165 = arith.addf %151, %164 : vector<72x128xf32>
    %c1_83 = arith.constant 1 : index
    %c11_84 = arith.constant 11 : index
    %166 = memref.load %arg4[%c1_83, %c11_84] : memref<2x32xf32, #tpu.memory_space<smem>>
    %167 = vector.broadcast %166 : f32 to vector<72x128xf32>
    %168 = arith.mulf %161, %167 : vector<72x128xf32>
    %169 = arith.addf %155, %168 : vector<72x128xf32>
    %c0_85 = arith.constant 0 : index
    %c12 = arith.constant 12 : index
    %170 = vector.load %arg2[%c0_85, %c12] : memref<72x32xf32, #tpu.memory_space<vmem>>, vector<72x1xf32>
    %c12_86 = arith.constant 12 : index
    %c0_87 = arith.constant 0 : index
    %171 = vector.load %arg3[%c12_86, %c0_87] : memref<32x128xf32, #tpu.memory_space<vmem>>, vector<1x128xf32>
    %172 = vector.broadcast %170 : vector<72x1xf32> to vector<72x128xf32>
    %173 = vector.broadcast %171 : vector<1x128xf32> to vector<72x128xf32>
    %174 = arith.subf %172, %173 : vector<72x128xf32>
    %175 = math.absf %174 : vector<72x128xf32>
    %c0_88 = arith.constant 0 : index
    %c12_89 = arith.constant 12 : index
    %176 = memref.load %arg4[%c0_88, %c12_89] : memref<2x32xf32, #tpu.memory_space<smem>>
    %177 = vector.broadcast %176 : f32 to vector<72x128xf32>
    %178 = arith.mulf %175, %177 : vector<72x128xf32>
    %179 = arith.addf %165, %178 : vector<72x128xf32>
    %c1_90 = arith.constant 1 : index
    %c12_91 = arith.constant 12 : index
    %180 = memref.load %arg4[%c1_90, %c12_91] : memref<2x32xf32, #tpu.memory_space<smem>>
    %181 = vector.broadcast %180 : f32 to vector<72x128xf32>
    %182 = arith.mulf %175, %181 : vector<72x128xf32>
    %183 = arith.addf %169, %182 : vector<72x128xf32>
    %c0_92 = arith.constant 0 : index
    %c13 = arith.constant 13 : index
    %184 = vector.load %arg2[%c0_92, %c13] : memref<72x32xf32, #tpu.memory_space<vmem>>, vector<72x1xf32>
    %c13_93 = arith.constant 13 : index
    %c0_94 = arith.constant 0 : index
    %185 = vector.load %arg3[%c13_93, %c0_94] : memref<32x128xf32, #tpu.memory_space<vmem>>, vector<1x128xf32>
    %186 = vector.broadcast %184 : vector<72x1xf32> to vector<72x128xf32>
    %187 = vector.broadcast %185 : vector<1x128xf32> to vector<72x128xf32>
    %188 = arith.subf %186, %187 : vector<72x128xf32>
    %189 = math.absf %188 : vector<72x128xf32>
    %c0_95 = arith.constant 0 : index
    %c13_96 = arith.constant 13 : index
    %190 = memref.load %arg4[%c0_95, %c13_96] : memref<2x32xf32, #tpu.memory_space<smem>>
    %191 = vector.broadcast %190 : f32 to vector<72x128xf32>
    %192 = arith.mulf %189, %191 : vector<72x128xf32>
    %193 = arith.addf %179, %192 : vector<72x128xf32>
    %c1_97 = arith.constant 1 : index
    %c13_98 = arith.constant 13 : index
    %194 = memref.load %arg4[%c1_97, %c13_98] : memref<2x32xf32, #tpu.memory_space<smem>>
    %195 = vector.broadcast %194 : f32 to vector<72x128xf32>
    %196 = arith.mulf %189, %195 : vector<72x128xf32>
    %197 = arith.addf %183, %196 : vector<72x128xf32>
    %c0_99 = arith.constant 0 : index
    %c14 = arith.constant 14 : index
    %198 = vector.load %arg2[%c0_99, %c14] : memref<72x32xf32, #tpu.memory_space<vmem>>, vector<72x1xf32>
    %c14_100 = arith.constant 14 : index
    %c0_101 = arith.constant 0 : index
    %199 = vector.load %arg3[%c14_100, %c0_101] : memref<32x128xf32, #tpu.memory_space<vmem>>, vector<1x128xf32>
    %200 = vector.broadcast %198 : vector<72x1xf32> to vector<72x128xf32>
    %201 = vector.broadcast %199 : vector<1x128xf32> to vector<72x128xf32>
    %202 = arith.subf %200, %201 : vector<72x128xf32>
    %203 = math.absf %202 : vector<72x128xf32>
    %c0_102 = arith.constant 0 : index
    %c14_103 = arith.constant 14 : index
    %204 = memref.load %arg4[%c0_102, %c14_103] : memref<2x32xf32, #tpu.memory_space<smem>>
    %205 = vector.broadcast %204 : f32 to vector<72x128xf32>
    %206 = arith.mulf %203, %205 : vector<72x128xf32>
    %207 = arith.addf %193, %206 : vector<72x128xf32>
    %c1_104 = arith.constant 1 : index
    %c14_105 = arith.constant 14 : index
    %208 = memref.load %arg4[%c1_104, %c14_105] : memref<2x32xf32, #tpu.memory_space<smem>>
    %209 = vector.broadcast %208 : f32 to vector<72x128xf32>
    %210 = arith.mulf %203, %209 : vector<72x128xf32>
    %211 = arith.addf %197, %210 : vector<72x128xf32>
    %c0_106 = arith.constant 0 : index
    %c15 = arith.constant 15 : index
    %212 = vector.load %arg2[%c0_106, %c15] : memref<72x32xf32, #tpu.memory_space<vmem>>, vector<72x1xf32>
    %c15_107 = arith.constant 15 : index
    %c0_108 = arith.constant 0 : index
    %213 = vector.load %arg3[%c15_107, %c0_108] : memref<32x128xf32, #tpu.memory_space<vmem>>, vector<1x128xf32>
    %214 = vector.broadcast %212 : vector<72x1xf32> to vector<72x128xf32>
    %215 = vector.broadcast %213 : vector<1x128xf32> to vector<72x128xf32>
    %216 = arith.subf %214, %215 : vector<72x128xf32>
    %217 = math.absf %216 : vector<72x128xf32>
    %c0_109 = arith.constant 0 : index
    %c15_110 = arith.constant 15 : index
    %218 = memref.load %arg4[%c0_109, %c15_110] : memref<2x32xf32, #tpu.memory_space<smem>>
    %219 = vector.broadcast %218 : f32 to vector<72x128xf32>
    %220 = arith.mulf %217, %219 : vector<72x128xf32>
    %221 = arith.addf %207, %220 : vector<72x128xf32>
    %c1_111 = arith.constant 1 : index
    %c15_112 = arith.constant 15 : index
    %222 = memref.load %arg4[%c1_111, %c15_112] : memref<2x32xf32, #tpu.memory_space<smem>>
    %223 = vector.broadcast %222 : f32 to vector<72x128xf32>
    %224 = arith.mulf %217, %223 : vector<72x128xf32>
    %225 = arith.addf %211, %224 : vector<72x128xf32>
    %c0_113 = arith.constant 0 : index
    %c16 = arith.constant 16 : index
    %226 = vector.load %arg2[%c0_113, %c16] : memref<72x32xf32, #tpu.memory_space<vmem>>, vector<72x1xf32>
    %c16_114 = arith.constant 16 : index
    %c0_115 = arith.constant 0 : index
    %227 = vector.load %arg3[%c16_114, %c0_115] : memref<32x128xf32, #tpu.memory_space<vmem>>, vector<1x128xf32>
    %228 = vector.broadcast %226 : vector<72x1xf32> to vector<72x128xf32>
    %229 = vector.broadcast %227 : vector<1x128xf32> to vector<72x128xf32>
    %230 = arith.subf %228, %229 : vector<72x128xf32>
    %231 = math.absf %230 : vector<72x128xf32>
    %c0_116 = arith.constant 0 : index
    %c16_117 = arith.constant 16 : index
    %232 = memref.load %arg4[%c0_116, %c16_117] : memref<2x32xf32, #tpu.memory_space<smem>>
    %233 = vector.broadcast %232 : f32 to vector<72x128xf32>
    %234 = arith.mulf %231, %233 : vector<72x128xf32>
    %235 = arith.addf %221, %234 : vector<72x128xf32>
    %c1_118 = arith.constant 1 : index
    %c16_119 = arith.constant 16 : index
    %236 = memref.load %arg4[%c1_118, %c16_119] : memref<2x32xf32, #tpu.memory_space<smem>>
    %237 = vector.broadcast %236 : f32 to vector<72x128xf32>
    %238 = arith.mulf %231, %237 : vector<72x128xf32>
    %239 = arith.addf %225, %238 : vector<72x128xf32>
    %c0_120 = arith.constant 0 : index
    %c17 = arith.constant 17 : index
    %240 = vector.load %arg2[%c0_120, %c17] : memref<72x32xf32, #tpu.memory_space<vmem>>, vector<72x1xf32>
    %c17_121 = arith.constant 17 : index
    %c0_122 = arith.constant 0 : index
    %241 = vector.load %arg3[%c17_121, %c0_122] : memref<32x128xf32, #tpu.memory_space<vmem>>, vector<1x128xf32>
    %242 = vector.broadcast %240 : vector<72x1xf32> to vector<72x128xf32>
    %243 = vector.broadcast %241 : vector<1x128xf32> to vector<72x128xf32>
    %244 = arith.subf %242, %243 : vector<72x128xf32>
    %245 = math.absf %244 : vector<72x128xf32>
    %c0_123 = arith.constant 0 : index
    %c17_124 = arith.constant 17 : index
    %246 = memref.load %arg4[%c0_123, %c17_124] : memref<2x32xf32, #tpu.memory_space<smem>>
    %247 = vector.broadcast %246 : f32 to vector<72x128xf32>
    %248 = arith.mulf %245, %247 : vector<72x128xf32>
    %249 = arith.addf %235, %248 : vector<72x128xf32>
    %c1_125 = arith.constant 1 : index
    %c17_126 = arith.constant 17 : index
    %250 = memref.load %arg4[%c1_125, %c17_126] : memref<2x32xf32, #tpu.memory_space<smem>>
    %251 = vector.broadcast %250 : f32 to vector<72x128xf32>
    %252 = arith.mulf %245, %251 : vector<72x128xf32>
    %253 = arith.addf %239, %252 : vector<72x128xf32>
    %c0_127 = arith.constant 0 : index
    %c18 = arith.constant 18 : index
    %254 = vector.load %arg2[%c0_127, %c18] : memref<72x32xf32, #tpu.memory_space<vmem>>, vector<72x1xf32>
    %c18_128 = arith.constant 18 : index
    %c0_129 = arith.constant 0 : index
    %255 = vector.load %arg3[%c18_128, %c0_129] : memref<32x128xf32, #tpu.memory_space<vmem>>, vector<1x128xf32>
    %256 = vector.broadcast %254 : vector<72x1xf32> to vector<72x128xf32>
    %257 = vector.broadcast %255 : vector<1x128xf32> to vector<72x128xf32>
    %258 = arith.subf %256, %257 : vector<72x128xf32>
    %259 = math.absf %258 : vector<72x128xf32>
    %c0_130 = arith.constant 0 : index
    %c18_131 = arith.constant 18 : index
    %260 = memref.load %arg4[%c0_130, %c18_131] : memref<2x32xf32, #tpu.memory_space<smem>>
    %261 = vector.broadcast %260 : f32 to vector<72x128xf32>
    %262 = arith.mulf %259, %261 : vector<72x128xf32>
    %263 = arith.addf %249, %262 : vector<72x128xf32>
    %c1_132 = arith.constant 1 : index
    %c18_133 = arith.constant 18 : index
    %264 = memref.load %arg4[%c1_132, %c18_133] : memref<2x32xf32, #tpu.memory_space<smem>>
    %265 = vector.broadcast %264 : f32 to vector<72x128xf32>
    %266 = arith.mulf %259, %265 : vector<72x128xf32>
    %267 = arith.addf %253, %266 : vector<72x128xf32>
    %c0_134 = arith.constant 0 : index
    %c19 = arith.constant 19 : index
    %268 = vector.load %arg2[%c0_134, %c19] : memref<72x32xf32, #tpu.memory_space<vmem>>, vector<72x1xf32>
    %c19_135 = arith.constant 19 : index
    %c0_136 = arith.constant 0 : index
    %269 = vector.load %arg3[%c19_135, %c0_136] : memref<32x128xf32, #tpu.memory_space<vmem>>, vector<1x128xf32>
    %270 = vector.broadcast %268 : vector<72x1xf32> to vector<72x128xf32>
    %271 = vector.broadcast %269 : vector<1x128xf32> to vector<72x128xf32>
    %272 = arith.subf %270, %271 : vector<72x128xf32>
    %273 = math.absf %272 : vector<72x128xf32>
    %c0_137 = arith.constant 0 : index
    %c19_138 = arith.constant 19 : index
    %274 = memref.load %arg4[%c0_137, %c19_138] : memref<2x32xf32, #tpu.memory_space<smem>>
    %275 = vector.broadcast %274 : f32 to vector<72x128xf32>
    %276 = arith.mulf %273, %275 : vector<72x128xf32>
    %277 = arith.addf %263, %276 : vector<72x128xf32>
    %c1_139 = arith.constant 1 : index
    %c19_140 = arith.constant 19 : index
    %278 = memref.load %arg4[%c1_139, %c19_140] : memref<2x32xf32, #tpu.memory_space<smem>>
    %279 = vector.broadcast %278 : f32 to vector<72x128xf32>
    %280 = arith.mulf %273, %279 : vector<72x128xf32>
    %281 = arith.addf %267, %280 : vector<72x128xf32>
    %c0_141 = arith.constant 0 : index
    %c20 = arith.constant 20 : index
    %282 = vector.load %arg2[%c0_141, %c20] : memref<72x32xf32, #tpu.memory_space<vmem>>, vector<72x1xf32>
    %c20_142 = arith.constant 20 : index
    %c0_143 = arith.constant 0 : index
    %283 = vector.load %arg3[%c20_142, %c0_143] : memref<32x128xf32, #tpu.memory_space<vmem>>, vector<1x128xf32>
    %284 = vector.broadcast %282 : vector<72x1xf32> to vector<72x128xf32>
    %285 = vector.broadcast %283 : vector<1x128xf32> to vector<72x128xf32>
    %286 = arith.subf %284, %285 : vector<72x128xf32>
    %287 = math.absf %286 : vector<72x128xf32>
    %c0_144 = arith.constant 0 : index
    %c20_145 = arith.constant 20 : index
    %288 = memref.load %arg4[%c0_144, %c20_145] : memref<2x32xf32, #tpu.memory_space<smem>>
    %289 = vector.broadcast %288 : f32 to vector<72x128xf32>
    %290 = arith.mulf %287, %289 : vector<72x128xf32>
    %291 = arith.addf %277, %290 : vector<72x128xf32>
    %c1_146 = arith.constant 1 : index
    %c20_147 = arith.constant 20 : index
    %292 = memref.load %arg4[%c1_146, %c20_147] : memref<2x32xf32, #tpu.memory_space<smem>>
    %293 = vector.broadcast %292 : f32 to vector<72x128xf32>
    %294 = arith.mulf %287, %293 : vector<72x128xf32>
    %295 = arith.addf %281, %294 : vector<72x128xf32>
    %c0_148 = arith.constant 0 : index
    %c21 = arith.constant 21 : index
    %296 = vector.load %arg2[%c0_148, %c21] : memref<72x32xf32, #tpu.memory_space<vmem>>, vector<72x1xf32>
    %c21_149 = arith.constant 21 : index
    %c0_150 = arith.constant 0 : index
    %297 = vector.load %arg3[%c21_149, %c0_150] : memref<32x128xf32, #tpu.memory_space<vmem>>, vector<1x128xf32>
    %298 = vector.broadcast %296 : vector<72x1xf32> to vector<72x128xf32>
    %299 = vector.broadcast %297 : vector<1x128xf32> to vector<72x128xf32>
    %300 = arith.subf %298, %299 : vector<72x128xf32>
    %301 = math.absf %300 : vector<72x128xf32>
    %c0_151 = arith.constant 0 : index
    %c21_152 = arith.constant 21 : index
    %302 = memref.load %arg4[%c0_151, %c21_152] : memref<2x32xf32, #tpu.memory_space<smem>>
    %303 = vector.broadcast %302 : f32 to vector<72x128xf32>
    %304 = arith.mulf %301, %303 : vector<72x128xf32>
    %305 = arith.addf %291, %304 : vector<72x128xf32>
    %c1_153 = arith.constant 1 : index
    %c21_154 = arith.constant 21 : index
    %306 = memref.load %arg4[%c1_153, %c21_154] : memref<2x32xf32, #tpu.memory_space<smem>>
    %307 = vector.broadcast %306 : f32 to vector<72x128xf32>
    %308 = arith.mulf %301, %307 : vector<72x128xf32>
    %309 = arith.addf %295, %308 : vector<72x128xf32>
    %c0_155 = arith.constant 0 : index
    %c22 = arith.constant 22 : index
    %310 = vector.load %arg2[%c0_155, %c22] : memref<72x32xf32, #tpu.memory_space<vmem>>, vector<72x1xf32>
    %c22_156 = arith.constant 22 : index
    %c0_157 = arith.constant 0 : index
    %311 = vector.load %arg3[%c22_156, %c0_157] : memref<32x128xf32, #tpu.memory_space<vmem>>, vector<1x128xf32>
    %312 = vector.broadcast %310 : vector<72x1xf32> to vector<72x128xf32>
    %313 = vector.broadcast %311 : vector<1x128xf32> to vector<72x128xf32>
    %314 = arith.subf %312, %313 : vector<72x128xf32>
    %315 = math.absf %314 : vector<72x128xf32>
    %c0_158 = arith.constant 0 : index
    %c22_159 = arith.constant 22 : index
    %316 = memref.load %arg4[%c0_158, %c22_159] : memref<2x32xf32, #tpu.memory_space<smem>>
    %317 = vector.broadcast %316 : f32 to vector<72x128xf32>
    %318 = arith.mulf %315, %317 : vector<72x128xf32>
    %319 = arith.addf %305, %318 : vector<72x128xf32>
    %c1_160 = arith.constant 1 : index
    %c22_161 = arith.constant 22 : index
    %320 = memref.load %arg4[%c1_160, %c22_161] : memref<2x32xf32, #tpu.memory_space<smem>>
    %321 = vector.broadcast %320 : f32 to vector<72x128xf32>
    %322 = arith.mulf %315, %321 : vector<72x128xf32>
    %323 = arith.addf %309, %322 : vector<72x128xf32>
    %c0_162 = arith.constant 0 : index
    %c23 = arith.constant 23 : index
    %324 = vector.load %arg2[%c0_162, %c23] : memref<72x32xf32, #tpu.memory_space<vmem>>, vector<72x1xf32>
    %c23_163 = arith.constant 23 : index
    %c0_164 = arith.constant 0 : index
    %325 = vector.load %arg3[%c23_163, %c0_164] : memref<32x128xf32, #tpu.memory_space<vmem>>, vector<1x128xf32>
    %326 = vector.broadcast %324 : vector<72x1xf32> to vector<72x128xf32>
    %327 = vector.broadcast %325 : vector<1x128xf32> to vector<72x128xf32>
    %328 = arith.subf %326, %327 : vector<72x128xf32>
    %329 = math.absf %328 : vector<72x128xf32>
    %c0_165 = arith.constant 0 : index
    %c23_166 = arith.constant 23 : index
    %330 = memref.load %arg4[%c0_165, %c23_166] : memref<2x32xf32, #tpu.memory_space<smem>>
    %331 = vector.broadcast %330 : f32 to vector<72x128xf32>
    %332 = arith.mulf %329, %331 : vector<72x128xf32>
    %333 = arith.addf %319, %332 : vector<72x128xf32>
    %c1_167 = arith.constant 1 : index
    %c23_168 = arith.constant 23 : index
    %334 = memref.load %arg4[%c1_167, %c23_168] : memref<2x32xf32, #tpu.memory_space<smem>>
    %335 = vector.broadcast %334 : f32 to vector<72x128xf32>
    %336 = arith.mulf %329, %335 : vector<72x128xf32>
    %337 = arith.addf %323, %336 : vector<72x128xf32>
    %c0_169 = arith.constant 0 : index
    %c24 = arith.constant 24 : index
    %338 = vector.load %arg2[%c0_169, %c24] : memref<72x32xf32, #tpu.memory_space<vmem>>, vector<72x1xf32>
    %c24_170 = arith.constant 24 : index
    %c0_171 = arith.constant 0 : index
    %339 = vector.load %arg3[%c24_170, %c0_171] : memref<32x128xf32, #tpu.memory_space<vmem>>, vector<1x128xf32>
    %340 = vector.broadcast %338 : vector<72x1xf32> to vector<72x128xf32>
    %341 = vector.broadcast %339 : vector<1x128xf32> to vector<72x128xf32>
    %342 = arith.subf %340, %341 : vector<72x128xf32>
    %343 = math.absf %342 : vector<72x128xf32>
    %c0_172 = arith.constant 0 : index
    %c24_173 = arith.constant 24 : index
    %344 = memref.load %arg4[%c0_172, %c24_173] : memref<2x32xf32, #tpu.memory_space<smem>>
    %345 = vector.broadcast %344 : f32 to vector<72x128xf32>
    %346 = arith.mulf %343, %345 : vector<72x128xf32>
    %347 = arith.addf %333, %346 : vector<72x128xf32>
    %c1_174 = arith.constant 1 : index
    %c24_175 = arith.constant 24 : index
    %348 = memref.load %arg4[%c1_174, %c24_175] : memref<2x32xf32, #tpu.memory_space<smem>>
    %349 = vector.broadcast %348 : f32 to vector<72x128xf32>
    %350 = arith.mulf %343, %349 : vector<72x128xf32>
    %351 = arith.addf %337, %350 : vector<72x128xf32>
    %c0_176 = arith.constant 0 : index
    %c25 = arith.constant 25 : index
    %352 = vector.load %arg2[%c0_176, %c25] : memref<72x32xf32, #tpu.memory_space<vmem>>, vector<72x1xf32>
    %c25_177 = arith.constant 25 : index
    %c0_178 = arith.constant 0 : index
    %353 = vector.load %arg3[%c25_177, %c0_178] : memref<32x128xf32, #tpu.memory_space<vmem>>, vector<1x128xf32>
    %354 = vector.broadcast %352 : vector<72x1xf32> to vector<72x128xf32>
    %355 = vector.broadcast %353 : vector<1x128xf32> to vector<72x128xf32>
    %356 = arith.subf %354, %355 : vector<72x128xf32>
    %357 = math.absf %356 : vector<72x128xf32>
    %c0_179 = arith.constant 0 : index
    %c25_180 = arith.constant 25 : index
    %358 = memref.load %arg4[%c0_179, %c25_180] : memref<2x32xf32, #tpu.memory_space<smem>>
    %359 = vector.broadcast %358 : f32 to vector<72x128xf32>
    %360 = arith.mulf %357, %359 : vector<72x128xf32>
    %361 = arith.addf %347, %360 : vector<72x128xf32>
    %c1_181 = arith.constant 1 : index
    %c25_182 = arith.constant 25 : index
    %362 = memref.load %arg4[%c1_181, %c25_182] : memref<2x32xf32, #tpu.memory_space<smem>>
    %363 = vector.broadcast %362 : f32 to vector<72x128xf32>
    %364 = arith.mulf %357, %363 : vector<72x128xf32>
    %365 = arith.addf %351, %364 : vector<72x128xf32>
    %c0_183 = arith.constant 0 : index
    %c26 = arith.constant 26 : index
    %366 = vector.load %arg2[%c0_183, %c26] : memref<72x32xf32, #tpu.memory_space<vmem>>, vector<72x1xf32>
    %c26_184 = arith.constant 26 : index
    %c0_185 = arith.constant 0 : index
    %367 = vector.load %arg3[%c26_184, %c0_185] : memref<32x128xf32, #tpu.memory_space<vmem>>, vector<1x128xf32>
    %368 = vector.broadcast %366 : vector<72x1xf32> to vector<72x128xf32>
    %369 = vector.broadcast %367 : vector<1x128xf32> to vector<72x128xf32>
    %370 = arith.subf %368, %369 : vector<72x128xf32>
    %371 = math.absf %370 : vector<72x128xf32>
    %c0_186 = arith.constant 0 : index
    %c26_187 = arith.constant 26 : index
    %372 = memref.load %arg4[%c0_186, %c26_187] : memref<2x32xf32, #tpu.memory_space<smem>>
    %373 = vector.broadcast %372 : f32 to vector<72x128xf32>
    %374 = arith.mulf %371, %373 : vector<72x128xf32>
    %375 = arith.addf %361, %374 : vector<72x128xf32>
    %c1_188 = arith.constant 1 : index
    %c26_189 = arith.constant 26 : index
    %376 = memref.load %arg4[%c1_188, %c26_189] : memref<2x32xf32, #tpu.memory_space<smem>>
    %377 = vector.broadcast %376 : f32 to vector<72x128xf32>
    %378 = arith.mulf %371, %377 : vector<72x128xf32>
    %379 = arith.addf %365, %378 : vector<72x128xf32>
    %c0_190 = arith.constant 0 : index
    %c27 = arith.constant 27 : index
    %380 = vector.load %arg2[%c0_190, %c27] : memref<72x32xf32, #tpu.memory_space<vmem>>, vector<72x1xf32>
    %c27_191 = arith.constant 27 : index
    %c0_192 = arith.constant 0 : index
    %381 = vector.load %arg3[%c27_191, %c0_192] : memref<32x128xf32, #tpu.memory_space<vmem>>, vector<1x128xf32>
    %382 = vector.broadcast %380 : vector<72x1xf32> to vector<72x128xf32>
    %383 = vector.broadcast %381 : vector<1x128xf32> to vector<72x128xf32>
    %384 = arith.subf %382, %383 : vector<72x128xf32>
    %385 = math.absf %384 : vector<72x128xf32>
    %c0_193 = arith.constant 0 : index
    %c27_194 = arith.constant 27 : index
    %386 = memref.load %arg4[%c0_193, %c27_194] : memref<2x32xf32, #tpu.memory_space<smem>>
    %387 = vector.broadcast %386 : f32 to vector<72x128xf32>
    %388 = arith.mulf %385, %387 : vector<72x128xf32>
    %389 = arith.addf %375, %388 : vector<72x128xf32>
    %c1_195 = arith.constant 1 : index
    %c27_196 = arith.constant 27 : index
    %390 = memref.load %arg4[%c1_195, %c27_196] : memref<2x32xf32, #tpu.memory_space<smem>>
    %391 = vector.broadcast %390 : f32 to vector<72x128xf32>
    %392 = arith.mulf %385, %391 : vector<72x128xf32>
    %393 = arith.addf %379, %392 : vector<72x128xf32>
    %c0_197 = arith.constant 0 : index
    %c28 = arith.constant 28 : index
    %394 = vector.load %arg2[%c0_197, %c28] : memref<72x32xf32, #tpu.memory_space<vmem>>, vector<72x1xf32>
    %c28_198 = arith.constant 28 : index
    %c0_199 = arith.constant 0 : index
    %395 = vector.load %arg3[%c28_198, %c0_199] : memref<32x128xf32, #tpu.memory_space<vmem>>, vector<1x128xf32>
    %396 = vector.broadcast %394 : vector<72x1xf32> to vector<72x128xf32>
    %397 = vector.broadcast %395 : vector<1x128xf32> to vector<72x128xf32>
    %398 = arith.subf %396, %397 : vector<72x128xf32>
    %399 = math.absf %398 : vector<72x128xf32>
    %c0_200 = arith.constant 0 : index
    %c28_201 = arith.constant 28 : index
    %400 = memref.load %arg4[%c0_200, %c28_201] : memref<2x32xf32, #tpu.memory_space<smem>>
    %401 = vector.broadcast %400 : f32 to vector<72x128xf32>
    %402 = arith.mulf %399, %401 : vector<72x128xf32>
    %403 = arith.addf %389, %402 : vector<72x128xf32>
    %c1_202 = arith.constant 1 : index
    %c28_203 = arith.constant 28 : index
    %404 = memref.load %arg4[%c1_202, %c28_203] : memref<2x32xf32, #tpu.memory_space<smem>>
    %405 = vector.broadcast %404 : f32 to vector<72x128xf32>
    %406 = arith.mulf %399, %405 : vector<72x128xf32>
    %407 = arith.addf %393, %406 : vector<72x128xf32>
    %c0_204 = arith.constant 0 : index
    %c29 = arith.constant 29 : index
    %408 = vector.load %arg2[%c0_204, %c29] : memref<72x32xf32, #tpu.memory_space<vmem>>, vector<72x1xf32>
    %c29_205 = arith.constant 29 : index
    %c0_206 = arith.constant 0 : index
    %409 = vector.load %arg3[%c29_205, %c0_206] : memref<32x128xf32, #tpu.memory_space<vmem>>, vector<1x128xf32>
    %410 = vector.broadcast %408 : vector<72x1xf32> to vector<72x128xf32>
    %411 = vector.broadcast %409 : vector<1x128xf32> to vector<72x128xf32>
    %412 = arith.subf %410, %411 : vector<72x128xf32>
    %413 = math.absf %412 : vector<72x128xf32>
    %c0_207 = arith.constant 0 : index
    %c29_208 = arith.constant 29 : index
    %414 = memref.load %arg4[%c0_207, %c29_208] : memref<2x32xf32, #tpu.memory_space<smem>>
    %415 = vector.broadcast %414 : f32 to vector<72x128xf32>
    %416 = arith.mulf %413, %415 : vector<72x128xf32>
    %417 = arith.addf %403, %416 : vector<72x128xf32>
    %c1_209 = arith.constant 1 : index
    %c29_210 = arith.constant 29 : index
    %418 = memref.load %arg4[%c1_209, %c29_210] : memref<2x32xf32, #tpu.memory_space<smem>>
    %419 = vector.broadcast %418 : f32 to vector<72x128xf32>
    %420 = arith.mulf %413, %419 : vector<72x128xf32>
    %421 = arith.addf %407, %420 : vector<72x128xf32>
    %c0_211 = arith.constant 0 : index
    %c30 = arith.constant 30 : index
    %422 = vector.load %arg2[%c0_211, %c30] : memref<72x32xf32, #tpu.memory_space<vmem>>, vector<72x1xf32>
    %c30_212 = arith.constant 30 : index
    %c0_213 = arith.constant 0 : index
    %423 = vector.load %arg3[%c30_212, %c0_213] : memref<32x128xf32, #tpu.memory_space<vmem>>, vector<1x128xf32>
    %424 = vector.broadcast %422 : vector<72x1xf32> to vector<72x128xf32>
    %425 = vector.broadcast %423 : vector<1x128xf32> to vector<72x128xf32>
    %426 = arith.subf %424, %425 : vector<72x128xf32>
    %427 = math.absf %426 : vector<72x128xf32>
    %c0_214 = arith.constant 0 : index
    %c30_215 = arith.constant 30 : index
    %428 = memref.load %arg4[%c0_214, %c30_215] : memref<2x32xf32, #tpu.memory_space<smem>>
    %429 = vector.broadcast %428 : f32 to vector<72x128xf32>
    %430 = arith.mulf %427, %429 : vector<72x128xf32>
    %431 = arith.addf %417, %430 : vector<72x128xf32>
    %c1_216 = arith.constant 1 : index
    %c30_217 = arith.constant 30 : index
    %432 = memref.load %arg4[%c1_216, %c30_217] : memref<2x32xf32, #tpu.memory_space<smem>>
    %433 = vector.broadcast %432 : f32 to vector<72x128xf32>
    %434 = arith.mulf %427, %433 : vector<72x128xf32>
    %435 = arith.addf %421, %434 : vector<72x128xf32>
    %c0_218 = arith.constant 0 : index
    %c31 = arith.constant 31 : index
    %436 = vector.load %arg2[%c0_218, %c31] : memref<72x32xf32, #tpu.memory_space<vmem>>, vector<72x1xf32>
    %c31_219 = arith.constant 31 : index
    %c0_220 = arith.constant 0 : index
    %437 = vector.load %arg3[%c31_219, %c0_220] : memref<32x128xf32, #tpu.memory_space<vmem>>, vector<1x128xf32>
    %438 = vector.broadcast %436 : vector<72x1xf32> to vector<72x128xf32>
    %439 = vector.broadcast %437 : vector<1x128xf32> to vector<72x128xf32>
    %440 = arith.subf %438, %439 : vector<72x128xf32>
    %441 = math.absf %440 : vector<72x128xf32>
    %c0_221 = arith.constant 0 : index
    %c31_222 = arith.constant 31 : index
    %442 = memref.load %arg4[%c0_221, %c31_222] : memref<2x32xf32, #tpu.memory_space<smem>>
    %443 = vector.broadcast %442 : f32 to vector<72x128xf32>
    %444 = arith.mulf %441, %443 : vector<72x128xf32>
    %445 = arith.addf %431, %444 : vector<72x128xf32>
    %c1_223 = arith.constant 1 : index
    %c31_224 = arith.constant 31 : index
    %446 = memref.load %arg4[%c1_223, %c31_224] : memref<2x32xf32, #tpu.memory_space<smem>>
    %447 = vector.broadcast %446 : f32 to vector<72x128xf32>
    %448 = arith.mulf %441, %447 : vector<72x128xf32>
    %449 = arith.addf %435, %448 : vector<72x128xf32>
    %c0_225 = arith.constant 0 : index
    %c0_226 = arith.constant 0 : index
    %c0_227 = arith.constant 0 : index
    %450 = vector.load %arg5[%c0_225, %c0_226, %c0_227] : memref<2x72x128xf32, #tpu.memory_space<vmem>>, vector<1x72x128xf32>
    %451 = vector.shape_cast %450 : vector<1x72x128xf32> to vector<72x128xf32>
    %452 = vector.shape_cast %445 : vector<72x128xf32> to vector<1x72x128xf32>
    tpu.vector_store %arg5[%c0_225, %c0_226, %c0_227], %452 {strides = array<i32>} : memref<2x72x128xf32, #tpu.memory_space<vmem>>, vector<1x72x128xf32>,
    %c1_228 = arith.constant 1 : index
    %c0_229 = arith.constant 0 : index
    %c0_230 = arith.constant 0 : index
    %453 = vector.load %arg5[%c1_228, %c0_229, %c0_230] : memref<2x72x128xf32, #tpu.memory_space<vmem>>, vector<1x72x128xf32>
    %454 = vector.shape_cast %453 : vector<1x72x128xf32> to vector<72x128xf32>
    %455 = vector.shape_cast %449 : vector<72x128xf32> to vector<1x72x128xf32>
    tpu.vector_store %arg5[%c1_228, %c0_229, %c0_230], %455 {strides = array<i32>} : memref<2x72x128xf32, #tpu.memory_space<vmem>>, vector<1x72x128xf32>,
    return
  }
  func.func @transform_0(%arg0: i32, %arg1: i32) -> (i32, i32) {
    %c0_i32 = arith.constant 0 : i32
    %c0_i32_0 = arith.constant 0 : i32
    return %arg0, %c0_i32 : i32, i32
  }
  func.func @transform_1(%arg0: i32, %arg1: i32) -> (i32, i32) {
    %c0_i32 = arith.constant 0 : i32
    %c0_i32_0 = arith.constant 0 : i32
    return %c0_i32, %arg1 : i32, i32
  }
  func.func @transform_2(%arg0: i32, %arg1: i32) -> (i32, i32) {
    %c0_i32 = arith.constant 0 : i32
    %c0_i32_0 = arith.constant 0 : i32
    %c0_i32_1 = arith.constant 0 : i32
    return %c0_i32, %c0_i32_0 : i32, i32
  }
  func.func @transform_3(%arg0: i32, %arg1: i32) -> (i32, i32, i32) {
    %c0_i32 = arith.constant 0 : i32
    %c0_i32_0 = arith.constant 0 : i32
    return %c0_i32, %arg0, %arg1 : i32, i32, i32
  }
}

</mosaic_0001>

<llo_original>
// kernel: tpu_custom_call.1
$region0: #{tpu_custom_call.1}
  #allocation0 [shape = 'u32[]', space=smem, size = 0x4, offset = 0x4, fixed_abs, tag = 'smem constant byte address 0x4 - core index']
  #allocation1 [shape = 'u32[144,128]{1,0:T(1,128)}', space=vmem, size = 0x12000, scoped, tag = 'internal scratch']
  %s0 = inlined_call_operand.vmem [shape: f32[72,32], index: 0, kind: input, shape index: {}]
  %s1 = inlined_call_operand.vmem [shape: f32[32,384], index: 1, kind: input, shape index: {}]
  %s2 = inlined_call_operand.vmem [shape: f32[2,32], index: 2, kind: input, shape index: {}]
  %s3 = inlined_call_operand.hbm [shape: f32[2,72,384], index: 3, kind: output, shape index: {}]
  %s4 = sld [smem:[#allocation0]]
  $region87: #{tpu_custom_call.1} parent=0
    _
  %s6 = ssub.s32 1, %s4
  %s7 = scalar_select 0, %s6, %s4
  $region1: #{tpu_custom_call.1} parent=0
    #allocation2 [shape = 'u8[32768]{0}', space=vmem, size = 0x8000, scoped, tag = 'input window, operand 1']
    #allocation3 [shape = 'u8[1024]{0}', space=smem, size = 0x400, scoped, tag = 'input window, operand 2, single buffered']
    #allocation4 [shape = 's32[2]{0}', space=sflag, size = 0x8, scoped, tag = 'scoped memory for tpu_custom_call.1']
    #allocation5 [shape = 's32[2]{0}', space=sflag, size = 0x8, scoped, tag = 'scoped memory for tpu_custom_call.1']
    #allocation6 [shape = 'u8[147456]{0}', space=vmem, size = 0x24000, scoped, tag = 'output window, operand 0']
    %8 = vsyncpa [#allocation5], 0
    %9 = vsyncpa [#allocation4], 0
    %s10 = scalar_lea.sflag [#allocation4], 1
    %11 = vsyncpa %s10, 0
    loop: start=0, step=1, limit=5
    $region2: #{tpu_custom_call.1} parent=1 // loop_pre_header
      _
    $region3: #{tpu_custom_call.1} parent=1 // loop_header
      %s13 = sphi 0, %s17
      %p14 = scmp.ge.s32.totalorder %s13, 5
      %s20 = sphi 0, %s32
      %s21 = sphi 0, %s28
      %s22 = sphi 0, %s20
      %s23 = sphi 0, %s21
      %s24 = sphi 0, %s22
      %s25 = sphi 0, %s23
      %s35 = sphi 0, %s37
      %s38 = sphi 0, %s35
      %s39 = sphi 0, %s38
      %s55 = sphi 0, %s39
      %s61 = sphi 0, %s63
      %s64 = sphi 0, %s61
      %s65 = sphi 0, %s64
      %s81 = sphi 0, %s65
      %s85 = sphi 0, %s85
      %s87 = sphi 0, %s85
      %s88 = sphi 0, %s87
      %s102 = sphi 0, %s88
      %s110 = sphi 0, %s112
      %s113 = sphi 0, %s110
      %s114 = sphi 0, %s113
      %s130 = sphi 0, %s114
    $region4: #{tpu_custom_call.1} parent=1 // loop_header_branch
      %16 = sbr.rel (%p14) target = $region8
    $region5: #{tpu_custom_call.1} parent=1 // loop_body
      %s18 = ssub.s32 %s13, 1
      %s19 = ssub.s32 %s13, 2
      %s26 = sadd.s32 1, %s21
      %p27 = scmp.ge.s32.totalorder %s26, 3
      %s28 = scalar_select %p27, 0, %s26
      %s29 = sadd.s32 1, %s20
      %s30 = scalar_select %p27, %s29, %s20
      %p31 = scmp.ge.s32.totalorder %s30, 1
      %s32 = scalar_select %p31, 0, %s30
      %s33 = ssub.s32 %s20, %s32
      %p34 = scmp.eq.s32.totalorder %s33, 0
      %s36 = sadd.s32 %s35, 1
      %s37 = scalar_select %p34, %s35, %s36
      %p40 = pneg %p34
      %p41 = scmp.eq.s32.totalorder %s13, 2
      %p42 = por %p40, %p41
      %p43 = scmp.ne.s32.totalorder %s35, %s38
      %p44 = scmp.eq.s32.totalorder %s13, 0
      %p45 = por %p43, %p44
      %p46 = scmp.ne.s32.totalorder %s35, %s38
      %p47 = scmp.eq.s32.totalorder %s18, 2
      %p48 = por %p46, %p47
      %p49 = scmp.ne.s32.totalorder %s38, %s39
      %p50 = scmp.eq.s32.totalorder %s18, 0
      %p51 = por %p49, %p50
      %p52 = scmp.ne.s32.totalorder %s38, %s39
      %p53 = scmp.eq.s32.totalorder %s19, 2
      %p54 = por %p52, %p53
      %p56 = scmp.ne.s32.totalorder %s39, %s55
      %p57 = scmp.eq.s32.totalorder %s19, 0
      %p58 = por %p56, %p57
      %s59 = ssub.s32 %s21, %s28
      %p60 = scmp.eq.s32.totalorder %s59, 0
      %s62 = sadd.s32 %s61, 1
      %s63 = scalar_select %p60, %s61, %s62
      %p66 = pneg %p60
      %p67 = scmp.eq.s32.totalorder %s13, 2
      %p68 = por %p66, %p67
      %p69 = scmp.ne.s32.totalorder %s61, %s64
      %p70 = scmp.eq.s32.totalorder %s13, 0
      %p71 = por %p69, %p70
      %p72 = scmp.ne.s32.totalorder %s61, %s64
      %p73 = scmp.eq.s32.totalorder %s18, 2
      %p74 = por %p72, %p73
      %p75 = scmp.ne.s32.totalorder %s64, %s65
      %p76 = scmp.eq.s32.totalorder %s18, 0
      %p77 = por %p75, %p76
      %p78 = scmp.ne.s32.totalorder %s64, %s65
      %p79 = scmp.eq.s32.totalorder %s19, 2
      %p80 = por %p78, %p79
      %p82 = scmp.ne.s32.totalorder %s65, %s81
      %p83 = scmp.eq.s32.totalorder %s19, 0
      %p84 = por %p82, %p83
      %s86 = sadd.s32 %s85, 1
      %p89 = scmp.eq.s32.totalorder %s13, 2
      %p90 = scmp.ne.s32.totalorder %s85, %s87
      %p91 = scmp.eq.s32.totalorder %s13, 0
      %p92 = por %p90, %p91
      %p93 = scmp.ne.s32.totalorder %s85, %s87
      %p94 = scmp.eq.s32.totalorder %s18, 2
      %p95 = por %p93, %p94
      %p96 = scmp.ne.s32.totalorder %s87, %s88
      %p97 = scmp.eq.s32.totalorder %s18, 0
      %p98 = por %p96, %p97
      %p99 = scmp.ne.s32.totalorder %s87, %s88
      %p100 = scmp.eq.s32.totalorder %s19, 2
      %p101 = por %p99, %p100
      %p103 = scmp.ne.s32.totalorder %s88, %s102
      %p104 = scmp.eq.s32.totalorder %s19, 0
      %p105 = por %p103, %p104
      %s106 = ssub.s32 %s20, %s32
      %s107 = ssub.s32 %s21, %s28
      %s108 = sor.u32 %s106, %s107
      %p109 = scmp.eq.s32.totalorder %s108, 0
      %s111 = sadd.s32 %s110, 1
      %s112 = scalar_select %p109, %s110, %s111
      %p115 = pneg %p109
      %p116 = scmp.eq.s32.totalorder %s13, 2
      %p117 = por %p115, %p116
      %p118 = scmp.ne.s32.totalorder %s110, %s113
      %p119 = scmp.eq.s32.totalorder %s13, 0
      %p120 = por %p118, %p119
      %p121 = scmp.ne.s32.totalorder %s110, %s113
      %p122 = scmp.eq.s32.totalorder %s18, 2
      %p123 = por %p121, %p122
      %p124 = scmp.ne.s32.totalorder %s113, %s114
      %p125 = scmp.eq.s32.totalorder %s18, 0
      %p126 = por %p124, %p125
      %p127 = scmp.ne.s32.totalorder %s113, %s114
      %p128 = scmp.eq.s32.totalorder %s19, 2
      %p129 = por %p127, %p128
      %p131 = scmp.ne.s32.totalorder %s114, %s130
      %p132 = scmp.eq.s32.totalorder %s19, 0
      %p133 = por %p131, %p132
      %p134 = scmp.le.s32.totalorder 1, %s13
      %p135 = scmp.lt.s32.totalorder %s13, 4
      %p136 = pnand %p134, %p135
      %p137 = pneg %p136
      // Predicated region
      $region9: #{tpu_custom_call.1} parent=5 // pred_check
        _
      $region10: #{tpu_custom_call.1} parent=5 // pred_check_branch
        %139 = sbr.rel (%p136) target = $region12
      $region11: #{tpu_custom_call.1} parent=5 // pred_region
        %s140 = ssub.s32 %s13, 1
        // Predicated region
        $region13: #{tpu_custom_call.1} parent=11 // pred_check
          %p141 = pneg %p51
        $region14: #{tpu_custom_call.1} parent=11 // pred_check_branch
          %143 = sbr.rel (%p141) target = $region16
        $region15: #{tpu_custom_call.1} parent=11 // pred_region
          %s144 = smul.u32 9, %s22
          %p145 = scmp.lt.s32.totalorder %s144, 8
          %s146 = scalar_select %p145, %s144, 8
          %s147 = smul.addr %s146, 8
          %s148 = scalar_lea.vmem %s0, %s147
          %s149 = smul.u32 9, %s22
        $region16: #{tpu_custom_call.1} parent=11 // pred_fallthru
          _
        // Predicated region
        $region17: #{tpu_custom_call.1} parent=11 // pred_check
          %p150 = pneg %p98
        $region18: #{tpu_custom_call.1} parent=11 // pred_check_branch
          %152 = sbr.rel (%p150) target = $region20
        $region19: #{tpu_custom_call.1} parent=11 // pred_region
          %s154 = ssub.s32 32, 32
          %155 = vsyncadd [#allocation5], %s154
          %s157 = sshll.u32 %s2, 4
          %s158 = int_to_ptr.vmem [resolvable:$true] %s157
          %160 = dma.vmem_to_smem %s158, 32, [#allocation3], [#allocation5]
        $region20: #{tpu_custom_call.1} parent=11 // pred_fallthru
          _
      $region12: #{tpu_custom_call.1} parent=5 // pred_fallthru
        _
      %p161 = scmp.lt.s32.totalorder %s13, 3
      // Predicated region
      $region21: #{tpu_custom_call.1} parent=5 // pred_check
        %p162 = pneg %p161
      $region22: #{tpu_custom_call.1} parent=5 // pred_check_branch
        %164 = sbr.rel (%p162) target = $region24
      $region23: #{tpu_custom_call.1} parent=5 // pred_region
        // Predicated region
        $region25: #{tpu_custom_call.1} parent=23 // pred_check
          %p165 = pneg %p71
        $region26: #{tpu_custom_call.1} parent=23 // pred_check_branch
          %167 = sbr.rel (%p165) target = $region28
        $region27: #{tpu_custom_call.1} parent=23 // pred_region
          %s168 = sand.u32 %s61, 1
          %s169 = sand.u32 %s61, 1
          %s170 = smul.addr %s169, 32
          %s171 = scalar_lea.vmem [#allocation2], %s170
          %s172 = smul.addr %s21, 8
          %s173 = scalar_lea.vmem %s1, %s172
          // Predicated region
          $region29: #{tpu_custom_call.1} parent=27 // pred_check
            _
          $region30: #{tpu_custom_call.1} parent=27 // pred_check_branch
            %175 = sbr.rel (0) target = $region32
          $region31: #{tpu_custom_call.1} parent=27 // pred_region
            // Predicated region
            $region33: #{tpu_custom_call.1} parent=31 // pred_check
              _
            $region34: #{tpu_custom_call.1} parent=31 // pred_check_branch
              %177 = sbr.rel (0) target = $region36
            $region35: #{tpu_custom_call.1} parent=31 // pred_region
              // Predicated region
              $region48: #{tpu_custom_call.1} parent=35 // pred_check
                _
              $region49: #{tpu_custom_call.1} parent=35 // pred_check_branch
                %199 = sbr.rel (0) target = $region51
              $region50: #{tpu_custom_call.1} parent=35 // pred_region
                loop: start=0, step=1, limit=1
                $region52: #{tpu_custom_call.1} parent=50 // loop_pre_header
                  _
                $region53: #{tpu_custom_call.1} parent=50 // loop_header
                  %s201 = sphi 0, %s205
                  %p202 = scmp.ge.s32.totalorder %s201, 1
                  %s206 = sphi %s173, %s173
                  %s207 = sphi %s171, %s171
                $region54: #{tpu_custom_call.1} parent=50 // loop_header_branch
                  %204 = sbr.rel (%p202) target = $region58
                $region55: #{tpu_custom_call.1} parent=50 // loop_body
                  %v208 = vld [vmem:[%s206] sm:$0xff]
                  %209 = vst [vmem:[%s207] sm:$0xff] %v208
                  %v210 = vld [vmem:[%s206 + $0x18] sm:$0xff]
                  %211 = vst [vmem:[%s207 + $0x8] sm:$0xff] %v210
                  %v212 = vld [vmem:[%s206 + $0x30] sm:$0xff]
                  %213 = vst [vmem:[%s207 + $0x10] sm:$0xff] %v212
                  %v214 = vld [vmem:[%s206 + $0x48] sm:$0xff]
                  %215 = vst [vmem:[%s207 + $0x18] sm:$0xff] %v214
                $region56: #{tpu_custom_call.1} parent=50 // loop_footer
                  %s205 = sadd.s32 1, %s201
                $region57: #{tpu_custom_call.1} parent=50 // loop_footer_branch
                  %200 = sbr.rel target = $region53
                $region58: #{tpu_custom_call.1} parent=50 // loop_exit
                  _
              $region51: #{tpu_custom_call.1} parent=35 // pred_fallthru
                _
              // Predicated region
              $region59: #{tpu_custom_call.1} parent=35 // pred_check
                _
              $region60: #{tpu_custom_call.1} parent=35 // pred_check_branch
                %217 = sbr.rel target = $region62
              $region61: #{tpu_custom_call.1} parent=35 // pred_region
                _
              $region62: #{tpu_custom_call.1} parent=35 // pred_fallthru
                _
            $region36: #{tpu_custom_call.1} parent=31 // pred_fallthru
              _
            // Predicated region
            $region37: #{tpu_custom_call.1} parent=31 // pred_check
              _
            $region38: #{tpu_custom_call.1} parent=31 // pred_check_branch
              %179 = sbr.rel target = $region40
            $region39: #{tpu_custom_call.1} parent=31 // pred_region
              %s181 = ssub.s32 256, 1
              loop: start=0, step=1, limit=1
              $region41: #{tpu_custom_call.1} parent=39 // loop_pre_header
                _
              $region42: #{tpu_custom_call.1} parent=39 // loop_header
                %s183 = sphi 0, %s187
                %p184 = scmp.ge.s32.totalorder %s183, 1
                %s188 = sphi %s173, %s173
                %s189 = sphi %s171, %s171
              $region43: #{tpu_custom_call.1} parent=39 // loop_header_branch
                %186 = sbr.rel (%p184) target = $region47
              $region44: #{tpu_custom_call.1} parent=39 // loop_body
                %v190 = vld [vmem:[%s188] sm:%s181]
                %191 = vst [vmem:[%s189] sm:%s181] %v190
                %v192 = vld [vmem:[%s188 + $0x18] sm:%s181]
                %193 = vst [vmem:[%s189 + $0x8] sm:%s181] %v192
                %v194 = vld [vmem:[%s188 + $0x30] sm:%s181]
                %195 = vst [vmem:[%s189 + $0x10] sm:%s181] %v194
                %v196 = vld [vmem:[%s188 + $0x48] sm:%s181]
                %197 = vst [vmem:[%s189 + $0x18] sm:%s181] %v196
              $region45: #{tpu_custom_call.1} parent=39 // loop_footer
                %s187 = sadd.s32 1, %s183
              $region46: #{tpu_custom_call.1} parent=39 // loop_footer_branch
                %182 = sbr.rel target = $region42
              $region47: #{tpu_custom_call.1} parent=39 // loop_exit
                _
            $region40: #{tpu_custom_call.1} parent=31 // pred_fallthru
              _
          $region32: #{tpu_custom_call.1} parent=27 // pred_fallthru
            _
          %218 = vnop
        $region28: #{tpu_custom_call.1} parent=23 // pred_fallthru
          _
      $region24: #{tpu_custom_call.1} parent=5 // pred_fallthru
        _
      %p219 = scmp.le.s32.totalorder 1, %s13
      %p220 = scmp.lt.s32.totalorder %s13, 4
      %p221 = pnand %p219, %p220
      %p222 = pneg %p221
      // Predicated region
      $region63: #{tpu_custom_call.1} parent=5 // pred_check
        _
      $region64: #{tpu_custom_call.1} parent=5 // pred_check_branch
        %224 = sbr.rel (%p221) target = $region66
      $region65: #{tpu_custom_call.1} parent=5 // pred_region
        %s225 = ssub.s32 %s13, 1
        %s226 = sand.u32 %s64, 1
        %s227 = sand.u32 %s64, 1
        %s228 = smul.addr %s227, 32
        %s229 = scalar_lea.vmem [#allocation2], %s228
        // Predicated region
        $region67: #{tpu_custom_call.1} parent=65 // pred_check
          %p230 = pneg %p77
        $region68: #{tpu_custom_call.1} parent=65 // pred_check_branch
          %232 = sbr.rel (%p230) target = $region70
        $region69: #{tpu_custom_call.1} parent=65 // pred_region
          _
        $region70: #{tpu_custom_call.1} parent=65 // pred_fallthru
          _
        // Predicated region
        $region71: #{tpu_custom_call.1} parent=65 // pred_check
          %p233 = pneg %p98
        $region72: #{tpu_custom_call.1} parent=65 // pred_check_branch
          %235 = sbr.rel (%p233) target = $region74
        $region73: #{tpu_custom_call.1} parent=65 // pred_region
          %236 = dma.done [#allocation5], 32
        $region74: #{tpu_custom_call.1} parent=65 // pred_fallthru
          _
        %237 = sfence
        %s238 = smul.u32 9, %s22
        %p239 = scmp.lt.s32.totalorder %s238, 8
        %s240 = scalar_select %p239, %s238, 8
        %s241 = smul.addr %s240, 8
        %s242 = scalar_lea.vmem %s0, %s241
        %p243 = pneg %p51
        %p244 = pneg %p48
        %s245 = sand.u32 %s64, 1
        %s246 = sand.u32 %s64, 1
        %s247 = smul.addr %s246, 32
        %s248 = scalar_lea.vmem [#allocation2], %s247
        %p249 = pneg %p77
        %p250 = pneg %p74
        %p251 = pneg %p98
        %p252 = pneg %p95
        %p253 = pneg %p126
        %p254 = pneg %p123
        %s255 = sand.u32 %s113, 1
        %s256 = scalar_lea.sflag [#allocation4], %s255
        %s257 = sand.u32 %s113, 1
        %s258 = smul.addr %s257, 144
        %s259 = scalar_lea.vmem [#allocation6], %s258
        %s260 = smul.u32 9, %s22
        %p261 = scmp.lt.s32.totalorder %s260, 8
        %s262 = scalar_select %p261, %s260, 8
        %s263 = smul.addr %s262, 8
        %s264 = scalar_lea.vmem %s0, %s263
        %s265 = smul.u32 9, %s22
        %s266 = smul.u32 9, %s22
        %v267 = vld [vmem:[%s264] sm:$0xff]
        %v268 = vld [vmem:[%s264 + $0x8] sm:$0xff]
        %v269 = vld [vmem:[%s264 + $0x10] sm:$0xff]
        %v270 = vld [vmem:[%s264 + $0x18] sm:$0xff]
        %v271 = vld [vmem:[%s264 + $0x20] sm:$0xff]
        %v272 = vld [vmem:[%s264 + $0x28] sm:$0xff]
        %v273 = vld [vmem:[%s264 + $0x30] sm:$0xff]
        %v274 = vld [vmem:[%s264 + $0x38] sm:$0xff]
        %v275 = vld [vmem:[%s264 + $0x40] sm:$0xff]
        %v276 = vld [vmem:[%s229] sm:$0x1]
        %278 = vset.pattern.permute.xlu0 0
        %279 = vperm.xlu0 %278, %v267
        %v280 = vpop.permute.xlu0 %279
        %283 = vset.pattern.permute.xlu0 0
        %284 = vperm.xlu0 %283, %v268
        %v285 = vpop.permute.xlu0 %284
        %288 = vset.pattern.permute.xlu0 0
        %289 = vperm.xlu0 %288, %v269
        %v290 = vpop.permute.xlu0 %289
        %293 = vset.pattern.permute.xlu0 0
        %294 = vperm.xlu0 %293, %v270
        %v295 = vpop.permute.xlu0 %294
        %298 = vset.pattern.permute.xlu0 0
        %299 = vperm.xlu0 %298, %v271
        %v300 = vpop.permute.xlu0 %299
        %303 = vset.pattern.permute.xlu0 0
        %304 = vperm.xlu0 %303, %v272
        %v305 = vpop.permute.xlu0 %304
        %308 = vset.pattern.permute.xlu0 0
        %309 = vperm.xlu0 %308, %v273
        %v310 = vpop.permute.xlu0 %309
        %313 = vset.pattern.permute.xlu0 0
        %314 = vperm.xlu0 %313, %v274
        %v315 = vpop.permute.xlu0 %314
        %318 = vset.pattern.permute.xlu0 0
        %319 = vperm.xlu0 %318, %v275
        %v320 = vpop.permute.xlu0 %319
        %v322 = vlaneseq
        %v323 = vshrl.u32 %v322, 7
        %v324 = vsub.s32 0, %v323
        %v325 = vrot.slane %v276, %v324
        %v326 = vsub.f32 %v280, %v325
        %v327 = vsub.f32 %v285, %v325
        %v328 = vsub.f32 %v290, %v325
        %v329 = vsub.f32 %v295, %v325
        %v330 = vsub.f32 %v300, %v325
        %v331 = vsub.f32 %v305, %v325
        %v332 = vsub.f32 %v310, %v325
        %v333 = vsub.f32 %v315, %v325
        %v334 = vsub.f32 %v320, %v325
        %v335 = vand.u32 2147483647, %v326
        %v336 = vand.u32 2147483647, %v327
        %v337 = vand.u32 2147483647, %v328
        %v338 = vand.u32 2147483647, %v329
        %v339 = vand.u32 2147483647, %v330
        %v340 = vand.u32 2147483647, %v331
        %v341 = vand.u32 2147483647, %v332
        %v342 = vand.u32 2147483647, %v333
        %v343 = vand.u32 2147483647, %v334
        %s344 = sld [smem:[#allocation3]]
        %v345 = vstv %s344
        %v346 = vmul.f32 %v335, %v345
        %v347 = vmul.f32 %v336, %v345
        %v348 = vmul.f32 %v337, %v345
        %v349 = vmul.f32 %v338, %v345
        %v350 = vmul.f32 %v339, %v345
        %v351 = vmul.f32 %v340, %v345
        %v352 = vmul.f32 %v341, %v345
        %v353 = vmul.f32 %v342, %v345
        %v354 = vmul.f32 %v343, %v345
        %v355 = vadd.f32 %v346, 0.0
        %v356 = vadd.f32 %v347, 0.0
        %v357 = vadd.f32 %v348, 0.0
        %v358 = vadd.f32 %v349, 0.0
        %v359 = vadd.f32 %v350, 0.0
        %v360 = vadd.f32 %v351, 0.0
        %v361 = vadd.f32 %v352, 0.0
        %v362 = vadd.f32 %v353, 0.0
        %v363 = vadd.f32 %v354, 0.0
        %s364 = sld [smem:[#allocation3 + $0x80]]
        %v365 = vstv %s364
        %v366 = vmul.f32 %v335, %v365
        %v367 = vmul.f32 %v336, %v365
        %v368 = vmul.f32 %v337, %v365
        %v369 = vmul.f32 %v338, %v365
        %v370 = vmul.f32 %v339, %v365
        %v371 = vmul.f32 %v340, %v365
        %v372 = vmul.f32 %v341, %v365
        %v373 = vmul.f32 %v342, %v365
        %v374 = vmul.f32 %v343, %v365
        %v375 = vadd.f32 %v366, 0.0
        %v376 = vadd.f32 %v367, 0.0
        %v377 = vadd.f32 %v368, 0.0
        %v378 = vadd.f32 %v369, 0.0
        %v379 = vadd.f32 %v370, 0.0
        %v380 = vadd.f32 %v371, 0.0
        %v381 = vadd.f32 %v372, 0.0
        %v382 = vadd.f32 %v373, 0.0
        %v383 = vadd.f32 %v374, 0.0
        %v384 = vld [vmem:[%s229 + $0x1] sm:$0x1]
        %385 = vset.pattern.permute.xlu0 1
        %386 = vperm.xlu0 %385, %v267
        %v387 = vpop.permute.xlu0 %386
        %389 = vset.pattern.permute.xlu0 1
        %390 = vperm.xlu0 %389, %v268
        %v391 = vpop.permute.xlu0 %390
        %393 = vset.pattern.permute.xlu0 1
        %394 = vperm.xlu0 %393, %v269
        %v395 = vpop.permute.xlu0 %394
        %397 = vset.pattern.permute.xlu0 1
        %398 = vperm.xlu0 %397, %v270
        %v399 = vpop.permute.xlu0 %398
        %401 = vset.pattern.permute.xlu0 1
        %402 = vperm.xlu0 %401, %v271
        %v403 = vpop.permute.xlu0 %402
        %405 = vset.pattern.permute.xlu0 1
        %406 = vperm.xlu0 %405, %v272
        %v407 = vpop.permute.xlu0 %406
        %409 = vset.pattern.permute.xlu0 1
        %410 = vperm.xlu0 %409, %v273
        %v411 = vpop.permute.xlu0 %410
        %413 = vset.pattern.permute.xlu0 1
        %414 = vperm.xlu0 %413, %v274
        %v415 = vpop.permute.xlu0 %414
        %417 = vset.pattern.permute.xlu0 1
        %418 = vperm.xlu0 %417, %v275
        %v419 = vpop.permute.xlu0 %418
        %v421 = vlaneseq
        %v422 = vshrl.u32 %v421, 7
        %v423 = vsub.s32 0, %v422
        %v424 = vrot.slane %v384, %v423
        %v425 = vsub.f32 %v387, %v424
        %v426 = vsub.f32 %v391, %v424
        %v427 = vsub.f32 %v395, %v424
        %v428 = vsub.f32 %v399, %v424
        %v429 = vsub.f32 %v403, %v424
        %v430 = vsub.f32 %v407, %v424
        %v431 = vsub.f32 %v411, %v424
        %v432 = vsub.f32 %v415, %v424
        %v433 = vsub.f32 %v419, %v424
        %v434 = vand.u32 2147483647, %v425
        %v435 = vand.u32 2147483647, %v426
        %v436 = vand.u32 2147483647, %v427
        %v437 = vand.u32 2147483647, %v428
        %v438 = vand.u32 2147483647, %v429
        %v439 = vand.u32 2147483647, %v430
        %v440 = vand.u32 2147483647, %v431
        %v441 = vand.u32 2147483647, %v432
        %v442 = vand.u32 2147483647, %v433
        %s443 = sld [smem:[#allocation3 + $0x1]]
        %v444 = vstv %s443
        %v445 = vmul.f32 %v434, %v444
        %v446 = vmul.f32 %v435, %v444
        %v447 = vmul.f32 %v436, %v444
        %v448 = vmul.f32 %v437, %v444
        %v449 = vmul.f32 %v438, %v444
        %v450 = vmul.f32 %v439, %v444
        %v451 = vmul.f32 %v440, %v444
        %v452 = vmul.f32 %v441, %v444
        %v453 = vmul.f32 %v442, %v444
        %v454 = vadd.f32 %v355, %v445
        %v455 = vadd.f32 %v356, %v446
        %v456 = vadd.f32 %v357, %v447
        %v457 = vadd.f32 %v358, %v448
        %v458 = vadd.f32 %v359, %v449
        %v459 = vadd.f32 %v360, %v450
        %v460 = vadd.f32 %v361, %v451
        %v461 = vadd.f32 %v362, %v452
        %v462 = vadd.f32 %v363, %v453
        %s463 = sld [smem:[#allocation3 + $0x81]]
        %v464 = vstv %s463
        %v465 = vmul.f32 %v434, %v464
        %v466 = vmul.f32 %v435, %v464
        %v467 = vmul.f32 %v436, %v464
        %v468 = vmul.f32 %v437, %v464
        %v469 = vmul.f32 %v438, %v464
        %v470 = vmul.f32 %v439, %v464
        %v471 = vmul.f32 %v440, %v464
        %v472 = vmul.f32 %v441, %v464
        %v473 = vmul.f32 %v442, %v464
        %v474 = vadd.f32 %v375, %v465
        %v475 = vadd.f32 %v376, %v466
        %v476 = vadd.f32 %v377, %v467
        %v477 = vadd.f32 %v378, %v468
        %v478 = vadd.f32 %v379, %v469
        %v479 = vadd.f32 %v380, %v470
        %v480 = vadd.f32 %v381, %v471
        %v481 = vadd.f32 %v382, %v472
        %v482 = vadd.f32 %v383, %v473
        %v483 = vld [vmem:[%s229 + $0x2] sm:$0x1]
        %484 = vset.pattern.permute.xlu0 2
        %485 = vperm.xlu0 %484, %v267
        %v486 = vpop.permute.xlu0 %485
        %488 = vset.pattern.permute.xlu0 2
        %489 = vperm.xlu0 %488, %v268
        %v490 = vpop.permute.xlu0 %489
        %492 = vset.pattern.permute.xlu0 2
        %493 = vperm.xlu0 %492, %v269
        %v494 = vpop.permute.xlu0 %493
        %496 = vset.pattern.permute.xlu0 2
        %497 = vperm.xlu0 %496, %v270
        %v498 = vpop.permute.xlu0 %497
        %500 = vset.pattern.permute.xlu0 2
        %501 = vperm.xlu0 %500, %v271
        %v502 = vpop.permute.xlu0 %501
        %504 = vset.pattern.permute.xlu0 2
        %505 = vperm.xlu0 %504, %v272
        %v506 = vpop.permute.xlu0 %505
        %508 = vset.pattern.permute.xlu0 2
        %509 = vperm.xlu0 %508, %v273
        %v510 = vpop.permute.xlu0 %509
        %512 = vset.pattern.permute.xlu0 2
        %513 = vperm.xlu0 %512, %v274
        %v514 = vpop.permute.xlu0 %513
        %516 = vset.pattern.permute.xlu0 2
        %517 = vperm.xlu0 %516, %v275
        %v518 = vpop.permute.xlu0 %517
        %v520 = vlaneseq
        %v521 = vshrl.u32 %v520, 7
        %v522 = vsub.s32 0, %v521
        %v523 = vrot.slane %v483, %v522
        %v524 = vsub.f32 %v486, %v523
        %v525 = vsub.f32 %v490, %v523
        %v526 = vsub.f32 %v494, %v523
        %v527 = vsub.f32 %v498, %v523
        %v528 = vsub.f32 %v502, %v523
        %v529 = vsub.f32 %v506, %v523
        %v530 = vsub.f32 %v510, %v523
        %v531 = vsub.f32 %v514, %v523
        %v532 = vsub.f32 %v518, %v523
        %v533 = vand.u32 2147483647, %v524
        %v534 = vand.u32 2147483647, %v525
        %v535 = vand.u32 2147483647, %v526
        %v536 = vand.u32 2147483647, %v527
        %v537 = vand.u32 2147483647, %v528
        %v538 = vand.u32 2147483647, %v529
        %v539 = vand.u32 2147483647, %v530
        %v540 = vand.u32 2147483647, %v531
        %v541 = vand.u32 2147483647, %v532
        %s542 = sld [smem:[#allocation3 + $0x2]]
        %v543 = vstv %s542
        %v544 = vmul.f32 %v533, %v543
        %v545 = vmul.f32 %v534, %v543
        %v546 = vmul.f32 %v535, %v543
        %v547 = vmul.f32 %v536, %v543
        %v548 = vmul.f32 %v537, %v543
        %v549 = vmul.f32 %v538, %v543
        %v550 = vmul.f32 %v539, %v543
        %v551 = vmul.f32 %v540, %v543
        %v552 = vmul.f32 %v541, %v543
        %v553 = vadd.f32 %v454, %v544
        %v554 = vadd.f32 %v455, %v545
        %v555 = vadd.f32 %v456, %v546
        %v556 = vadd.f32 %v457, %v547
        %v557 = vadd.f32 %v458, %v548
        %v558 = vadd.f32 %v459, %v549
        %v559 = vadd.f32 %v460, %v550
        %v560 = vadd.f32 %v461, %v551
        %v561 = vadd.f32 %v462, %v552
        %s562 = sld [smem:[#allocation3 + $0x82]]
        %v563 = vstv %s562
        %v564 = vmul.f32 %v533, %v563
        %v565 = vmul.f32 %v534, %v563
        %v566 = vmul.f32 %v535, %v563
        %v567 = vmul.f32 %v536, %v563
        %v568 = vmul.f32 %v537, %v563
        %v569 = vmul.f32 %v538, %v563
        %v570 = vmul.f32 %v539, %v563
        %v571 = vmul.f32 %v540, %v563
        %v572 = vmul.f32 %v541, %v563
        %v573 = vadd.f32 %v474, %v564
        %v574 = vadd.f32 %v475, %v565
        %v575 = vadd.f32 %v476, %v566
        %v576 = vadd.f32 %v477, %v567
        %v577 = vadd.f32 %v478, %v568
        %v578 = vadd.f32 %v479, %v569
        %v579 = vadd.f32 %v480, %v570
        %v580 = vadd.f32 %v481, %v571
        %v581 = vadd.f32 %v482, %v572
        %v582 = vld [vmem:[%s229 + $0x3] sm:$0x1]
        %583 = vset.pattern.permute.xlu0 3
        %584 = vperm.xlu0 %583, %v267
        %v585 = vpop.permute.xlu0 %584
        %587 = vset.pattern.permute.xlu0 3
        %588 = vperm.xlu0 %587, %v268
        %v589 = vpop.permute.xlu0 %588
        %591 = vset.pattern.permute.xlu0 3
        %592 = vperm.xlu0 %591, %v269
        %v593 = vpop.permute.xlu0 %592
        %595 = vset.pattern.permute.xlu0 3
        %596 = vperm.xlu0 %595, %v270
        %v597 = vpop.permute.xlu0 %596
        %599 = vset.pattern.permute.xlu0 3
        %600 = vperm.xlu0 %599, %v271
        %v601 = vpop.permute.xlu0 %600
        %603 = vset.pattern.permute.xlu0 3
        %604 = vperm.xlu0 %603, %v272
        %v605 = vpop.permute.xlu0 %604
        %607 = vset.pattern.permute.xlu0 3
        %608 = vperm.xlu0 %607, %v273
        %v609 = vpop.permute.xlu0 %608
        %611 = vset.pattern.permute.xlu0 3
        %612 = vperm.xlu0 %611, %v274
        %v613 = vpop.permute.xlu0 %612
        %615 = vset.pattern.permute.xlu0 3
        %616 = vperm.xlu0 %615, %v275
        %v617 = vpop.permute.xlu0 %616
        %v619 = vlaneseq
        %v620 = vshrl.u32 %v619, 7
        %v621 = vsub.s32 0, %v620
        %v622 = vrot.slane %v582, %v621
        %v623 = vsub.f32 %v585, %v622
        %v624 = vsub.f32 %v589, %v622
        %v625 = vsub.f32 %v593, %v622
        %v626 = vsub.f32 %v597, %v622
        %v627 = vsub.f32 %v601, %v622
        %v628 = vsub.f32 %v605, %v622
        %v629 = vsub.f32 %v609, %v622
        %v630 = vsub.f32 %v613, %v622
        %v631 = vsub.f32 %v617, %v622
        %v632 = vand.u32 2147483647, %v623
        %v633 = vand.u32 2147483647, %v624
        %v634 = vand.u32 2147483647, %v625
        %v635 = vand.u32 2147483647, %v626
        %v636 = vand.u32 2147483647, %v627
        %v637 = vand.u32 2147483647, %v628
        %v638 = vand.u32 2147483647, %v629
        %v639 = vand.u32 2147483647, %v630
        %v640 = vand.u32 2147483647, %v631
        %s641 = sld [smem:[#allocation3 + $0x3]]
        %v642 = vstv %s641
        %v643 = vmul.f32 %v632, %v642
        %v644 = vmul.f32 %v633, %v642
        %v645 = vmul.f32 %v634, %v642
        %v646 = vmul.f32 %v635, %v642
        %v647 = vmul.f32 %v636, %v642
        %v648 = vmul.f32 %v637, %v642
        %v649 = vmul.f32 %v638, %v642
        %v650 = vmul.f32 %v639, %v642
        %v651 = vmul.f32 %v640, %v642
        %v652 = vadd.f32 %v553, %v643
        %v653 = vadd.f32 %v554, %v644
        %v654 = vadd.f32 %v555, %v645
        %v655 = vadd.f32 %v556, %v646
        %v656 = vadd.f32 %v557, %v647
        %v657 = vadd.f32 %v558, %v648
        %v658 = vadd.f32 %v559, %v649
        %v659 = vadd.f32 %v560, %v650
        %v660 = vadd.f32 %v561, %v651
        %s661 = sld [smem:[#allocation3 + $0x83]]
        %v662 = vstv %s661
        %v663 = vmul.f32 %v632, %v662
        %v664 = vmul.f32 %v633, %v662
        %v665 = vmul.f32 %v634, %v662
        %v666 = vmul.f32 %v635, %v662
        %v667 = vmul.f32 %v636, %v662
        %v668 = vmul.f32 %v637, %v662
        %v669 = vmul.f32 %v638, %v662
        %v670 = vmul.f32 %v639, %v662
        %v671 = vmul.f32 %v640, %v662
        %v672 = vadd.f32 %v573, %v663
        %v673 = vadd.f32 %v574, %v664
        %v674 = vadd.f32 %v575, %v665
        %v675 = vadd.f32 %v576, %v666
        %v676 = vadd.f32 %v577, %v667
        %v677 = vadd.f32 %v578, %v668
        %v678 = vadd.f32 %v579, %v669
        %v679 = vadd.f32 %v580, %v670
        %v680 = vadd.f32 %v581, %v671
        %v681 = vld [vmem:[%s229 + $0x4] sm:$0x1]
        %682 = vset.pattern.permute.xlu0 4
        %683 = vperm.xlu0 %682, %v267
        %v684 = vpop.permute.xlu0 %683
        %686 = vset.pattern.permute.xlu0 4
        %687 = vperm.xlu0 %686, %v268
        %v688 = vpop.permute.xlu0 %687
        %690 = vset.pattern.permute.xlu0 4
        %691 = vperm.xlu0 %690, %v269
        %v692 = vpop.permute.xlu0 %691
        %694 = vset.pattern.permute.xlu0 4
        %695 = vperm.xlu0 %694, %v270
        %v696 = vpop.permute.xlu0 %695
        %698 = vset.pattern.permute.xlu0 4
        %699 = vperm.xlu0 %698, %v271
        %v700 = vpop.permute.xlu0 %699
        %702 = vset.pattern.permute.xlu0 4
        %703 = vperm.xlu0 %702, %v272
        %v704 = vpop.permute.xlu0 %703
        %706 = vset.pattern.permute.xlu0 4
        %707 = vperm.xlu0 %706, %v273
        %v708 = vpop.permute.xlu0 %707
        %710 = vset.pattern.permute.xlu0 4
        %711 = vperm.xlu0 %710, %v274
        %v712 = vpop.permute.xlu0 %711
        %714 = vset.pattern.permute.xlu0 4
        %715 = vperm.xlu0 %714, %v275
        %v716 = vpop.permute.xlu0 %715
        %v718 = vlaneseq
        %v719 = vshrl.u32 %v718, 7
        %v720 = vsub.s32 0, %v719
        %v721 = vrot.slane %v681, %v720
        %v722 = vsub.f32 %v684, %v721
        %v723 = vsub.f32 %v688, %v721
        %v724 = vsub.f32 %v692, %v721
        %v725 = vsub.f32 %v696, %v721
        %v726 = vsub.f32 %v700, %v721
        %v727 = vsub.f32 %v704, %v721
        %v728 = vsub.f32 %v708, %v721
        %v729 = vsub.f32 %v712, %v721
        %v730 = vsub.f32 %v716, %v721
        %v731 = vand.u32 2147483647, %v722
        %v732 = vand.u32 2147483647, %v723
        %v733 = vand.u32 2147483647, %v724
        %v734 = vand.u32 2147483647, %v725
        %v735 = vand.u32 2147483647, %v726
        %v736 = vand.u32 2147483647, %v727
        %v737 = vand.u32 2147483647, %v728
        %v738 = vand.u32 2147483647, %v729
        %v739 = vand.u32 2147483647, %v730
        %s740 = sld [smem:[#allocation3 + $0x4]]
        %v741 = vstv %s740
        %v742 = vmul.f32 %v731, %v741
        %v743 = vmul.f32 %v732, %v741
        %v744 = vmul.f32 %v733, %v741
        %v745 = vmul.f32 %v734, %v741
        %v746 = vmul.f32 %v735, %v741
        %v747 = vmul.f32 %v736, %v741
        %v748 = vmul.f32 %v737, %v741
        %v749 = vmul.f32 %v738, %v741
        %v750 = vmul.f32 %v739, %v741
        %v751 = vadd.f32 %v652, %v742
        %v752 = vadd.f32 %v653, %v743
        %v753 = vadd.f32 %v654, %v744
        %v754 = vadd.f32 %v655, %v745
        %v755 = vadd.f32 %v656, %v746
        %v756 = vadd.f32 %v657, %v747
        %v757 = vadd.f32 %v658, %v748
        %v758 = vadd.f32 %v659, %v749
        %v759 = vadd.f32 %v660, %v750
        %s760 = sld [smem:[#allocation3 + $0x84]]
        %v761 = vstv %s760
        %v762 = vmul.f32 %v731, %v761
        %v763 = vmul.f32 %v732, %v761
        %v764 = vmul.f32 %v733, %v761
        %v765 = vmul.f32 %v734, %v761
        %v766 = vmul.f32 %v735, %v761
        %v767 = vmul.f32 %v736, %v761
        %v768 = vmul.f32 %v737, %v761
        %v769 = vmul.f32 %v738, %v761
        %v770 = vmul.f32 %v739, %v761
        %v771 = vadd.f32 %v672, %v762
        %v772 = vadd.f32 %v673, %v763
        %v773 = vadd.f32 %v674, %v764
        %v774 = vadd.f32 %v675, %v765
        %v775 = vadd.f32 %v676, %v766
        %v776 = vadd.f32 %v677, %v767
        %v777 = vadd.f32 %v678, %v768
        %v778 = vadd.f32 %v679, %v769
        %v779 = vadd.f32 %v680, %v770
        %v780 = vld [vmem:[%s229 + $0x5] sm:$0x1]
        %781 = vset.pattern.permute.xlu0 5
        %782 = vperm.xlu0 %781, %v267
        %v783 = vpop.permute.xlu0 %782
        %785 = vset.pattern.permute.xlu0 5
        %786 = vperm.xlu0 %785, %v268
        %v787 = vpop.permute.xlu0 %786
        %789 = vset.pattern.permute.xlu0 5
        %790 = vperm.xlu0 %789, %v269
        %v791 = vpop.permute.xlu0 %790
        %793 = vset.pattern.permute.xlu0 5
        %794 = vperm.xlu0 %793, %v270
        %v795 = vpop.permute.xlu0 %794
        %797 = vset.pattern.permute.xlu0 5
        %798 = vperm.xlu0 %797, %v271
        %v799 = vpop.permute.xlu0 %798
        %801 = vset.pattern.permute.xlu0 5
        %802 = vperm.xlu0 %801, %v272
        %v803 = vpop.permute.xlu0 %802
        %805 = vset.pattern.permute.xlu0 5
        %806 = vperm.xlu0 %805, %v273
        %v807 = vpop.permute.xlu0 %806
        %809 = vset.pattern.permute.xlu0 5
        %810 = vperm.xlu0 %809, %v274
        %v811 = vpop.permute.xlu0 %810
        %813 = vset.pattern.permute.xlu0 5
        %814 = vperm.xlu0 %813, %v275
        %v815 = vpop.permute.xlu0 %814
        %v817 = vlaneseq
        %v818 = vshrl.u32 %v817, 7
        %v819 = vsub.s32 0, %v818
        %v820 = vrot.slane %v780, %v819
        %v821 = vsub.f32 %v783, %v820
        %v822 = vsub.f32 %v787, %v820
        %v823 = vsub.f32 %v791, %v820
        %v824 = vsub.f32 %v795, %v820
        %v825 = vsub.f32 %v799, %v820
        %v826 = vsub.f32 %v803, %v820
        %v827 = vsub.f32 %v807, %v820
        %v828 = vsub.f32 %v811, %v820
        %v829 = vsub.f32 %v815, %v820
        %v830 = vand.u32 2147483647, %v821
        %v831 = vand.u32 2147483647, %v822
        %v832 = vand.u32 2147483647, %v823
        %v833 = vand.u32 2147483647, %v824
        %v834 = vand.u32 2147483647, %v825
        %v835 = vand.u32 2147483647, %v826
        %v836 = vand.u32 2147483647, %v827
        %v837 = vand.u32 2147483647, %v828
        %v838 = vand.u32 2147483647, %v829
        %s839 = sld [smem:[#allocation3 + $0x5]]
        %v840 = vstv %s839
        %v841 = vmul.f32 %v830, %v840
        %v842 = vmul.f32 %v831, %v840
        %v843 = vmul.f32 %v832, %v840
        %v844 = vmul.f32 %v833, %v840
        %v845 = vmul.f32 %v834, %v840
        %v846 = vmul.f32 %v835, %v840
        %v847 = vmul.f32 %v836, %v840
        %v848 = vmul.f32 %v837, %v840
        %v849 = vmul.f32 %v838, %v840
        %v850 = vadd.f32 %v751, %v841
        %v851 = vadd.f32 %v752, %v842
        %v852 = vadd.f32 %v753, %v843
        %v853 = vadd.f32 %v754, %v844
        %v854 = vadd.f32 %v755, %v845
        %v855 = vadd.f32 %v756, %v846
        %v856 = vadd.f32 %v757, %v847
        %v857 = vadd.f32 %v758, %v848
        %v858 = vadd.f32 %v759, %v849
        %s859 = sld [smem:[#allocation3 + $0x85]]
        %v860 = vstv %s859
        %v861 = vmul.f32 %v830, %v860
        %v862 = vmul.f32 %v831, %v860
        %v863 = vmul.f32 %v832, %v860
        %v864 = vmul.f32 %v833, %v860
        %v865 = vmul.f32 %v834, %v860
        %v866 = vmul.f32 %v835, %v860
        %v867 = vmul.f32 %v836, %v860
        %v868 = vmul.f32 %v837, %v860
        %v869 = vmul.f32 %v838, %v860
        %v870 = vadd.f32 %v771, %v861
        %v871 = vadd.f32 %v772, %v862
        %v872 = vadd.f32 %v773, %v863
        %v873 = vadd.f32 %v774, %v864
        %v874 = vadd.f32 %v775, %v865
        %v875 = vadd.f32 %v776, %v866
        %v876 = vadd.f32 %v777, %v867
        %v877 = vadd.f32 %v778, %v868
        %v878 = vadd.f32 %v779, %v869
        %v879 = vld [vmem:[%s229 + $0x6] sm:$0x1]
        %880 = vset.pattern.permute.xlu0 6
        %881 = vperm.xlu0 %880, %v267
        %v882 = vpop.permute.xlu0 %881
        %884 = vset.pattern.permute.xlu0 6
        %885 = vperm.xlu0 %884, %v268
        %v886 = vpop.permute.xlu0 %885
        %888 = vset.pattern.permute.xlu0 6
        %889 = vperm.xlu0 %888, %v269
        %v890 = vpop.permute.xlu0 %889
        %892 = vset.pattern.permute.xlu0 6
        %893 = vperm.xlu0 %892, %v270
        %v894 = vpop.permute.xlu0 %893
        %896 = vset.pattern.permute.xlu0 6
        %897 = vperm.xlu0 %896, %v271
        %v898 = vpop.permute.xlu0 %897
        %900 = vset.pattern.permute.xlu0 6
        %901 = vperm.xlu0 %900, %v272
        %v902 = vpop.permute.xlu0 %901
        %904 = vset.pattern.permute.xlu0 6
        %905 = vperm.xlu0 %904, %v273
        %v906 = vpop.permute.xlu0 %905
        %908 = vset.pattern.permute.xlu0 6
        %909 = vperm.xlu0 %908, %v274
        %v910 = vpop.permute.xlu0 %909
        %912 = vset.pattern.permute.xlu0 6
        %913 = vperm.xlu0 %912, %v275
        %v914 = vpop.permute.xlu0 %913
        %v916 = vlaneseq
        %v917 = vshrl.u32 %v916, 7
        %v918 = vsub.s32 0, %v917
        %v919 = vrot.slane %v879, %v918
        %v920 = vsub.f32 %v882, %v919
        %v921 = vsub.f32 %v886, %v919
        %v922 = vsub.f32 %v890, %v919
        %v923 = vsub.f32 %v894, %v919
        %v924 = vsub.f32 %v898, %v919
        %v925 = vsub.f32 %v902, %v919
        %v926 = vsub.f32 %v906, %v919
        %v927 = vsub.f32 %v910, %v919
        %v928 = vsub.f32 %v914, %v919
        %v929 = vand.u32 2147483647, %v920
        %v930 = vand.u32 2147483647, %v921
        %v931 = vand.u32 2147483647, %v922
        %v932 = vand.u32 2147483647, %v923
        %v933 = vand.u32 2147483647, %v924
        %v934 = vand.u32 2147483647, %v925
        %v935 = vand.u32 2147483647, %v926
        %v936 = vand.u32 2147483647, %v927
        %v937 = vand.u32 2147483647, %v928
        %s938 = sld [smem:[#allocation3 + $0x6]]
        %v939 = vstv %s938
        %v940 = vmul.f32 %v929, %v939
        %v941 = vmul.f32 %v930, %v939
        %v942 = vmul.f32 %v931, %v939
        %v943 = vmul.f32 %v932, %v939
        %v944 = vmul.f32 %v933, %v939
        %v945 = vmul.f32 %v934, %v939
        %v946 = vmul.f32 %v935, %v939
        %v947 = vmul.f32 %v936, %v939
        %v948 = vmul.f32 %v937, %v939
        %v949 = vadd.f32 %v850, %v940
        %v950 = vadd.f32 %v851, %v941
        %v951 = vadd.f32 %v852, %v942
        %v952 = vadd.f32 %v853, %v943
        %v953 = vadd.f32 %v854, %v944
        %v954 = vadd.f32 %v855, %v945
        %v955 = vadd.f32 %v856, %v946
        %v956 = vadd.f32 %v857, %v947
        %v957 = vadd.f32 %v858, %v948
        %s958 = sld [smem:[#allocation3 + $0x86]]
        %v959 = vstv %s958
        %v960 = vmul.f32 %v929, %v959
        %v961 = vmul.f32 %v930, %v959
        %v962 = vmul.f32 %v931, %v959
        %v963 = vmul.f32 %v932, %v959
        %v964 = vmul.f32 %v933, %v959
        %v965 = vmul.f32 %v934, %v959
        %v966 = vmul.f32 %v935, %v959
        %v967 = vmul.f32 %v936, %v959
        %v968 = vmul.f32 %v937, %v959
        %v969 = vadd.f32 %v870, %v960
        %v970 = vadd.f32 %v871, %v961
        %v971 = vadd.f32 %v872, %v962
        %v972 = vadd.f32 %v873, %v963
        %v973 = vadd.f32 %v874, %v964
        %v974 = vadd.f32 %v875, %v965
        %v975 = vadd.f32 %v876, %v966
        %v976 = vadd.f32 %v877, %v967
        %v977 = vadd.f32 %v878, %v968
        %v978 = vld [vmem:[%s229 + $0x7] sm:$0x1]
        %979 = vset.pattern.permute.xlu0 7
        %980 = vperm.xlu0 %979, %v267
        %v981 = vpop.permute.xlu0 %980
        %983 = vset.pattern.permute.xlu0 7
        %984 = vperm.xlu0 %983, %v268
        %v985 = vpop.permute.xlu0 %984
        %987 = vset.pattern.permute.xlu0 7
        %988 = vperm.xlu0 %987, %v269
        %v989 = vpop.permute.xlu0 %988
        %991 = vset.pattern.permute.xlu0 7
        %992 = vperm.xlu0 %991, %v270
        %v993 = vpop.permute.xlu0 %992
        %995 = vset.pattern.permute.xlu0 7
        %996 = vperm.xlu0 %995, %v271
        %v997 = vpop.permute.xlu0 %996
        %999 = vset.pattern.permute.xlu0 7
        %1000 = vperm.xlu0 %999, %v272
        %v1001 = vpop.permute.xlu0 %1000
        %1003 = vset.pattern.permute.xlu0 7
        %1004 = vperm.xlu0 %1003, %v273
        %v1005 = vpop.permute.xlu0 %1004
        %1007 = vset.pattern.permute.xlu0 7
        %1008 = vperm.xlu0 %1007, %v274
        %v1009 = vpop.permute.xlu0 %1008
        %1011 = vset.pattern.permute.xlu0 7
        %1012 = vperm.xlu0 %1011, %v275
        %v1013 = vpop.permute.xlu0 %1012
        %v1015 = vlaneseq
        %v1016 = vshrl.u32 %v1015, 7
        %v1017 = vsub.s32 0, %v1016
        %v1018 = vrot.slane %v978, %v1017
        %v1019 = vsub.f32 %v981, %v1018
        %v1020 = vsub.f32 %v985, %v1018
        %v1021 = vsub.f32 %v989, %v1018
        %v1022 = vsub.f32 %v993, %v1018
        %v1023 = vsub.f32 %v997, %v1018
        %v1024 = vsub.f32 %v1001, %v1018
        %v1025 = vsub.f32 %v1005, %v1018
        %v1026 = vsub.f32 %v1009, %v1018
        %v1027 = vsub.f32 %v1013, %v1018
        %v1028 = vand.u32 2147483647, %v1019
        %v1029 = vand.u32 2147483647, %v1020
        %v1030 = vand.u32 2147483647, %v1021
        %v1031 = vand.u32 2147483647, %v1022
        %v1032 = vand.u32 2147483647, %v1023
        %v1033 = vand.u32 2147483647, %v1024
        %v1034 = vand.u32 2147483647, %v1025
        %v1035 = vand.u32 2147483647, %v1026
        %v1036 = vand.u32 2147483647, %v1027
        %s1037 = sld [smem:[#allocation3 + $0x7]]
        %v1038 = vstv %s1037
        %v1039 = vmul.f32 %v1028, %v1038
        %v1040 = vmul.f32 %v1029, %v1038
        %v1041 = vmul.f32 %v1030, %v1038
        %v1042 = vmul.f32 %v1031, %v1038
        %v1043 = vmul.f32 %v1032, %v1038
        %v1044 = vmul.f32 %v1033, %v1038
        %v1045 = vmul.f32 %v1034, %v1038
        %v1046 = vmul.f32 %v1035, %v1038
        %v1047 = vmul.f32 %v1036, %v1038
        %v1048 = vadd.f32 %v949, %v1039
        %v1049 = vadd.f32 %v950, %v1040
        %v1050 = vadd.f32 %v951, %v1041
        %v1051 = vadd.f32 %v952, %v1042
        %v1052 = vadd.f32 %v953, %v1043
        %v1053 = vadd.f32 %v954, %v1044
        %v1054 = vadd.f32 %v955, %v1045
        %v1055 = vadd.f32 %v956, %v1046
        %v1056 = vadd.f32 %v957, %v1047
        %s1057 = sld [smem:[#allocation3 + $0x87]]
        %v1058 = vstv %s1057
        %v1059 = vmul.f32 %v1028, %v1058
        %v1060 = vmul.f32 %v1029, %v1058
        %v1061 = vmul.f32 %v1030, %v1058
        %v1062 = vmul.f32 %v1031, %v1058
        %v1063 = vmul.f32 %v1032, %v1058
        %v1064 = vmul.f32 %v1033, %v1058
        %v1065 = vmul.f32 %v1034, %v1058
        %v1066 = vmul.f32 %v1035, %v1058
        %v1067 = vmul.f32 %v1036, %v1058
        %v1068 = vadd.f32 %v969, %v1059
        %v1069 = vadd.f32 %v970, %v1060
        %v1070 = vadd.f32 %v971, %v1061
        %v1071 = vadd.f32 %v972, %v1062
        %v1072 = vadd.f32 %v973, %v1063
        %v1073 = vadd.f32 %v974, %v1064
        %v1074 = vadd.f32 %v975, %v1065
        %v1075 = vadd.f32 %v976, %v1066
        %v1076 = vadd.f32 %v977, %v1067
        %v1077 = vld [vmem:[%s229 + $0x8] sm:$0x1]
        %1078 = vset.pattern.permute.xlu0 8
        %1079 = vperm.xlu0 %1078, %v267
        %v1080 = vpop.permute.xlu0 %1079
        %1082 = vset.pattern.permute.xlu0 8
        %1083 = vperm.xlu0 %1082, %v268
        %v1084 = vpop.permute.xlu0 %1083
        %1086 = vset.pattern.permute.xlu0 8
        %1087 = vperm.xlu0 %1086, %v269
        %v1088 = vpop.permute.xlu0 %1087
        %1090 = vset.pattern.permute.xlu0 8
        %1091 = vperm.xlu0 %1090, %v270
        %v1092 = vpop.permute.xlu0 %1091
        %1094 = vset.pattern.permute.xlu0 8
        %1095 = vperm.xlu0 %1094, %v271
        %v1096 = vpop.permute.xlu0 %1095
        %1098 = vset.pattern.permute.xlu0 8
        %1099 = vperm.xlu0 %1098, %v272
        %v1100 = vpop.permute.xlu0 %1099
        %1102 = vset.pattern.permute.xlu0 8
        %1103 = vperm.xlu0 %1102, %v273
        %v1104 = vpop.permute.xlu0 %1103
        %1106 = vset.pattern.permute.xlu0 8
        %1107 = vperm.xlu0 %1106, %v274
        %v1108 = vpop.permute.xlu0 %1107
        %1110 = vset.pattern.permute.xlu0 8
        %1111 = vperm.xlu0 %1110, %v275
        %v1112 = vpop.permute.xlu0 %1111
        %v1114 = vlaneseq
        %v1115 = vshrl.u32 %v1114, 7
        %v1116 = vsub.s32 0, %v1115
        %v1117 = vrot.slane %v1077, %v1116
        %v1118 = vsub.f32 %v1080, %v1117
        %v1119 = vsub.f32 %v1084, %v1117
        %v1120 = vsub.f32 %v1088, %v1117
        %v1121 = vsub.f32 %v1092, %v1117
        %v1122 = vsub.f32 %v1096, %v1117
        %v1123 = vsub.f32 %v1100, %v1117
        %v1124 = vsub.f32 %v1104, %v1117
        %v1125 = vsub.f32 %v1108, %v1117
        %v1126 = vsub.f32 %v1112, %v1117
        %v1127 = vand.u32 2147483647, %v1118
        %v1128 = vand.u32 2147483647, %v1119
        %v1129 = vand.u32 2147483647, %v1120
        %v1130 = vand.u32 2147483647, %v1121
        %v1131 = vand.u32 2147483647, %v1122
        %v1132 = vand.u32 2147483647, %v1123
        %v1133 = vand.u32 2147483647, %v1124
        %v1134 = vand.u32 2147483647, %v1125
        %v1135 = vand.u32 2147483647, %v1126
        %s1136 = sld [smem:[#allocation3 + $0x8]]
        %v1137 = vstv %s1136
        %v1138 = vmul.f32 %v1127, %v1137
        %v1139 = vmul.f32 %v1128, %v1137
        %v1140 = vmul.f32 %v1129, %v1137
        %v1141 = vmul.f32 %v1130, %v1137
        %v1142 = vmul.f32 %v1131, %v1137
        %v1143 = vmul.f32 %v1132, %v1137
        %v1144 = vmul.f32 %v1133, %v1137
        %v1145 = vmul.f32 %v1134, %v1137
        %v1146 = vmul.f32 %v1135, %v1137
        %v1147 = vadd.f32 %v1048, %v1138
        %v1148 = vadd.f32 %v1049, %v1139
        %v1149 = vadd.f32 %v1050, %v1140
        %v1150 = vadd.f32 %v1051, %v1141
        %v1151 = vadd.f32 %v1052, %v1142
        %v1152 = vadd.f32 %v1053, %v1143
        %v1153 = vadd.f32 %v1054, %v1144
        %v1154 = vadd.f32 %v1055, %v1145
        %v1155 = vadd.f32 %v1056, %v1146
        %s1156 = sld [smem:[#allocation3 + $0x88]]
        %v1157 = vstv %s1156
        %v1158 = vmul.f32 %v1127, %v1157
        %v1159 = vmul.f32 %v1128, %v1157
        %v1160 = vmul.f32 %v1129, %v1157
        %v1161 = vmul.f32 %v1130, %v1157
        %v1162 = vmul.f32 %v1131, %v1157
        %v1163 = vmul.f32 %v1132, %v1157
        %v1164 = vmul.f32 %v1133, %v1157
        %v1165 = vmul.f32 %v1134, %v1157
        %v1166 = vmul.f32 %v1135, %v1157
        %v1167 = vadd.f32 %v1068, %v1158
        %v1168 = vadd.f32 %v1069, %v1159
        %v1169 = vadd.f32 %v1070, %v1160
        %v1170 = vadd.f32 %v1071, %v1161
        %v1171 = vadd.f32 %v1072, %v1162
        %v1172 = vadd.f32 %v1073, %v1163
        %v1173 = vadd.f32 %v1074, %v1164
        %v1174 = vadd.f32 %v1075, %v1165
        %v1175 = vadd.f32 %v1076, %v1166
        %v1176 = vld [vmem:[%s229 + $0x9] sm:$0x1]
        %1177 = vset.pattern.permute.xlu0 9
        %1178 = vperm.xlu0 %1177, %v267
        %v1179 = vpop.permute.xlu0 %1178
        %1181 = vset.pattern.permute.xlu0 9
        %1182 = vperm.xlu0 %1181, %v268
        %v1183 = vpop.permute.xlu0 %1182
        %1185 = vset.pattern.permute.xlu0 9
        %1186 = vperm.xlu0 %1185, %v269
        %v1187 = vpop.permute.xlu0 %1186
        %1189 = vset.pattern.permute.xlu0 9
        %1190 = vperm.xlu0 %1189, %v270
        %v1191 = vpop.permute.xlu0 %1190
        %1193 = vset.pattern.permute.xlu0 9
        %1194 = vperm.xlu0 %1193, %v271
        %v1195 = vpop.permute.xlu0 %1194
        %1197 = vset.pattern.permute.xlu0 9
        %1198 = vperm.xlu0 %1197, %v272
        %v1199 = vpop.permute.xlu0 %1198
        %1201 = vset.pattern.permute.xlu0 9
        %1202 = vperm.xlu0 %1201, %v273
        %v1203 = vpop.permute.xlu0 %1202
        %1205 = vset.pattern.permute.xlu0 9
        %1206 = vperm.xlu0 %1205, %v274
        %v1207 = vpop.permute.xlu0 %1206
        %1209 = vset.pattern.permute.xlu0 9
        %1210 = vperm.xlu0 %1209, %v275
        %v1211 = vpop.permute.xlu0 %1210
        %v1213 = vlaneseq
        %v1214 = vshrl.u32 %v1213, 7
        %v1215 = vsub.s32 0, %v1214
        %v1216 = vrot.slane %v1176, %v1215
        %v1217 = vsub.f32 %v1179, %v1216
        %v1218 = vsub.f32 %v1183, %v1216
        %v1219 = vsub.f32 %v1187, %v1216
        %v1220 = vsub.f32 %v1191, %v1216
        %v1221 = vsub.f32 %v1195, %v1216
        %v1222 = vsub.f32 %v1199, %v1216
        %v1223 = vsub.f32 %v1203, %v1216
        %v1224 = vsub.f32 %v1207, %v1216
        %v1225 = vsub.f32 %v1211, %v1216
        %v1226 = vand.u32 2147483647, %v1217
        %v1227 = vand.u32 2147483647, %v1218
        %v1228 = vand.u32 2147483647, %v1219
        %v1229 = vand.u32 2147483647, %v1220
        %v1230 = vand.u32 2147483647, %v1221
        %v1231 = vand.u32 2147483647, %v1222
        %v1232 = vand.u32 2147483647, %v1223
        %v1233 = vand.u32 2147483647, %v1224
        %v1234 = vand.u32 2147483647, %v1225
        %s1235 = sld [smem:[#allocation3 + $0x9]]
        %v1236 = vstv %s1235
        %v1237 = vmul.f32 %v1226, %v1236
        %v1238 = vmul.f32 %v1227, %v1236
        %v1239 = vmul.f32 %v1228, %v1236
        %v1240 = vmul.f32 %v1229, %v1236
        %v1241 = vmul.f32 %v1230, %v1236
        %v1242 = vmul.f32 %v1231, %v1236
        %v1243 = vmul.f32 %v1232, %v1236
        %v1244 = vmul.f32 %v1233, %v1236
        %v1245 = vmul.f32 %v1234, %v1236
        %v1246 = vadd.f32 %v1147, %v1237
        %v1247 = vadd.f32 %v1148, %v1238
        %v1248 = vadd.f32 %v1149, %v1239
        %v1249 = vadd.f32 %v1150, %v1240
        %v1250 = vadd.f32 %v1151, %v1241
        %v1251 = vadd.f32 %v1152, %v1242
        %v1252 = vadd.f32 %v1153, %v1243
        %v1253 = vadd.f32 %v1154, %v1244
        %v1254 = vadd.f32 %v1155, %v1245
        %s1255 = sld [smem:[#allocation3 + $0x89]]
        %v1256 = vstv %s1255
        %v1257 = vmul.f32 %v1226, %v1256
        %v1258 = vmul.f32 %v1227, %v1256
        %v1259 = vmul.f32 %v1228, %v1256
        %v1260 = vmul.f32 %v1229, %v1256
        %v1261 = vmul.f32 %v1230, %v1256
        %v1262 = vmul.f32 %v1231, %v1256
        %v1263 = vmul.f32 %v1232, %v1256
        %v1264 = vmul.f32 %v1233, %v1256
        %v1265 = vmul.f32 %v1234, %v1256
        %v1266 = vadd.f32 %v1167, %v1257
        %v1267 = vadd.f32 %v1168, %v1258
        %v1268 = vadd.f32 %v1169, %v1259
        %v1269 = vadd.f32 %v1170, %v1260
        %v1270 = vadd.f32 %v1171, %v1261
        %v1271 = vadd.f32 %v1172, %v1262
        %v1272 = vadd.f32 %v1173, %v1263
        %v1273 = vadd.f32 %v1174, %v1264
        %v1274 = vadd.f32 %v1175, %v1265
        %v1275 = vld [vmem:[%s229 + $0xa] sm:$0x1]
        %1276 = vset.pattern.permute.xlu0 10
        %1277 = vperm.xlu0 %1276, %v267
        %v1278 = vpop.permute.xlu0 %1277
        %1280 = vset.pattern.permute.xlu0 10
        %1281 = vperm.xlu0 %1280, %v268
        %v1282 = vpop.permute.xlu0 %1281
        %1284 = vset.pattern.permute.xlu0 10
        %1285 = vperm.xlu0 %1284, %v269
        %v1286 = vpop.permute.xlu0 %1285
        %1288 = vset.pattern.permute.xlu0 10
        %1289 = vperm.xlu0 %1288, %v270
        %v1290 = vpop.permute.xlu0 %1289
        %1292 = vset.pattern.permute.xlu0 10
        %1293 = vperm.xlu0 %1292, %v271
        %v1294 = vpop.permute.xlu0 %1293
        %1296 = vset.pattern.permute.xlu0 10
        %1297 = vperm.xlu0 %1296, %v272
        %v1298 = vpop.permute.xlu0 %1297
        %1300 = vset.pattern.permute.xlu0 10
        %1301 = vperm.xlu0 %1300, %v273
        %v1302 = vpop.permute.xlu0 %1301
        %1304 = vset.pattern.permute.xlu0 10
        %1305 = vperm.xlu0 %1304, %v274
        %v1306 = vpop.permute.xlu0 %1305
        %1308 = vset.pattern.permute.xlu0 10
        %1309 = vperm.xlu0 %1308, %v275
        %v1310 = vpop.permute.xlu0 %1309
        %v1312 = vlaneseq
        %v1313 = vshrl.u32 %v1312, 7
        %v1314 = vsub.s32 0, %v1313
        %v1315 = vrot.slane %v1275, %v1314
        %v1316 = vsub.f32 %v1278, %v1315
        %v1317 = vsub.f32 %v1282, %v1315
        %v1318 = vsub.f32 %v1286, %v1315
        %v1319 = vsub.f32 %v1290, %v1315
        %v1320 = vsub.f32 %v1294, %v1315
        %v1321 = vsub.f32 %v1298, %v1315
        %v1322 = vsub.f32 %v1302, %v1315
        %v1323 = vsub.f32 %v1306, %v1315
        %v1324 = vsub.f32 %v1310, %v1315
        %v1325 = vand.u32 2147483647, %v1316
        %v1326 = vand.u32 2147483647, %v1317
        %v1327 = vand.u32 2147483647, %v1318
        %v1328 = vand.u32 2147483647, %v1319
        %v1329 = vand.u32 2147483647, %v1320
        %v1330 = vand.u32 2147483647, %v1321
        %v1331 = vand.u32 2147483647, %v1322
        %v1332 = vand.u32 2147483647, %v1323
        %v1333 = vand.u32 2147483647, %v1324
        %s1334 = sld [smem:[#allocation3 + $0xa]]
        %v1335 = vstv %s1334
        %v1336 = vmul.f32 %v1325, %v1335
        %v1337 = vmul.f32 %v1326, %v1335
        %v1338 = vmul.f32 %v1327, %v1335
        %v1339 = vmul.f32 %v1328, %v1335
        %v1340 = vmul.f32 %v1329, %v1335
        %v1341 = vmul.f32 %v1330, %v1335
        %v1342 = vmul.f32 %v1331, %v1335
        %v1343 = vmul.f32 %v1332, %v1335
        %v1344 = vmul.f32 %v1333, %v1335
        %v1345 = vadd.f32 %v1246, %v1336
        %v1346 = vadd.f32 %v1247, %v1337
        %v1347 = vadd.f32 %v1248, %v1338
        %v1348 = vadd.f32 %v1249, %v1339
        %v1349 = vadd.f32 %v1250, %v1340
        %v1350 = vadd.f32 %v1251, %v1341
        %v1351 = vadd.f32 %v1252, %v1342
        %v1352 = vadd.f32 %v1253, %v1343
        %v1353 = vadd.f32 %v1254, %v1344
        %s1354 = sld [smem:[#allocation3 + $0x8a]]
        %v1355 = vstv %s1354
        %v1356 = vmul.f32 %v1325, %v1355
        %v1357 = vmul.f32 %v1326, %v1355
        %v1358 = vmul.f32 %v1327, %v1355
        %v1359 = vmul.f32 %v1328, %v1355
        %v1360 = vmul.f32 %v1329, %v1355
        %v1361 = vmul.f32 %v1330, %v1355
        %v1362 = vmul.f32 %v1331, %v1355
        %v1363 = vmul.f32 %v1332, %v1355
        %v1364 = vmul.f32 %v1333, %v1355
        %v1365 = vadd.f32 %v1266, %v1356
        %v1366 = vadd.f32 %v1267, %v1357
        %v1367 = vadd.f32 %v1268, %v1358
        %v1368 = vadd.f32 %v1269, %v1359
        %v1369 = vadd.f32 %v1270, %v1360
        %v1370 = vadd.f32 %v1271, %v1361
        %v1371 = vadd.f32 %v1272, %v1362
        %v1372 = vadd.f32 %v1273, %v1363
        %v1373 = vadd.f32 %v1274, %v1364
        %v1374 = vld [vmem:[%s229 + $0xb] sm:$0x1]
        %1375 = vset.pattern.permute.xlu0 11
        %1376 = vperm.xlu0 %1375, %v267
        %v1377 = vpop.permute.xlu0 %1376
        %1379 = vset.pattern.permute.xlu0 11
        %1380 = vperm.xlu0 %1379, %v268
        %v1381 = vpop.permute.xlu0 %1380
        %1383 = vset.pattern.permute.xlu0 11
        %1384 = vperm.xlu0 %1383, %v269
        %v1385 = vpop.permute.xlu0 %1384
        %1387 = vset.pattern.permute.xlu0 11
        %1388 = vperm.xlu0 %1387, %v270
        %v1389 = vpop.permute.xlu0 %1388
        %1391 = vset.pattern.permute.xlu0 11
        %1392 = vperm.xlu0 %1391, %v271
        %v1393 = vpop.permute.xlu0 %1392
        %1395 = vset.pattern.permute.xlu0 11
        %1396 = vperm.xlu0 %1395, %v272
        %v1397 = vpop.permute.xlu0 %1396
        %1399 = vset.pattern.permute.xlu0 11
        %1400 = vperm.xlu0 %1399, %v273
        %v1401 = vpop.permute.xlu0 %1400
        %1403 = vset.pattern.permute.xlu0 11
        %1404 = vperm.xlu0 %1403, %v274
        %v1405 = vpop.permute.xlu0 %1404
        %1407 = vset.pattern.permute.xlu0 11
        %1408 = vperm.xlu0 %1407, %v275
        %v1409 = vpop.permute.xlu0 %1408
        %v1411 = vlaneseq
        %v1412 = vshrl.u32 %v1411, 7
        %v1413 = vsub.s32 0, %v1412
        %v1414 = vrot.slane %v1374, %v1413
        %v1415 = vsub.f32 %v1377, %v1414
        %v1416 = vsub.f32 %v1381, %v1414
        %v1417 = vsub.f32 %v1385, %v1414
        %v1418 = vsub.f32 %v1389, %v1414
        %v1419 = vsub.f32 %v1393, %v1414
        %v1420 = vsub.f32 %v1397, %v1414
        %v1421 = vsub.f32 %v1401, %v1414
        %v1422 = vsub.f32 %v1405, %v1414
        %v1423 = vsub.f32 %v1409, %v1414
        %v1424 = vand.u32 2147483647, %v1415
        %v1425 = vand.u32 2147483647, %v1416
        %v1426 = vand.u32 2147483647, %v1417
        %v1427 = vand.u32 2147483647, %v1418
        %v1428 = vand.u32 2147483647, %v1419
        %v1429 = vand.u32 2147483647, %v1420
        %v1430 = vand.u32 2147483647, %v1421
        %v1431 = vand.u32 2147483647, %v1422
        %v1432 = vand.u32 2147483647, %v1423
        %s1433 = sld [smem:[#allocation3 + $0xb]]
        %v1434 = vstv %s1433
        %v1435 = vmul.f32 %v1424, %v1434
        %v1436 = vmul.f32 %v1425, %v1434
        %v1437 = vmul.f32 %v1426, %v1434
        %v1438 = vmul.f32 %v1427, %v1434
        %v1439 = vmul.f32 %v1428, %v1434
        %v1440 = vmul.f32 %v1429, %v1434
        %v1441 = vmul.f32 %v1430, %v1434
        %v1442 = vmul.f32 %v1431, %v1434
        %v1443 = vmul.f32 %v1432, %v1434
        %v1444 = vadd.f32 %v1345, %v1435
        %v1445 = vadd.f32 %v1346, %v1436
        %v1446 = vadd.f32 %v1347, %v1437
        %v1447 = vadd.f32 %v1348, %v1438
        %v1448 = vadd.f32 %v1349, %v1439
        %v1449 = vadd.f32 %v1350, %v1440
        %v1450 = vadd.f32 %v1351, %v1441
        %v1451 = vadd.f32 %v1352, %v1442
        %v1452 = vadd.f32 %v1353, %v1443
        %s1453 = sld [smem:[#allocation3 + $0x8b]]
        %v1454 = vstv %s1453
        %v1455 = vmul.f32 %v1424, %v1454
        %v1456 = vmul.f32 %v1425, %v1454
        %v1457 = vmul.f32 %v1426, %v1454
        %v1458 = vmul.f32 %v1427, %v1454
        %v1459 = vmul.f32 %v1428, %v1454
        %v1460 = vmul.f32 %v1429, %v1454
        %v1461 = vmul.f32 %v1430, %v1454
        %v1462 = vmul.f32 %v1431, %v1454
        %v1463 = vmul.f32 %v1432, %v1454
        %v1464 = vadd.f32 %v1365, %v1455
        %v1465 = vadd.f32 %v1366, %v1456
        %v1466 = vadd.f32 %v1367, %v1457
        %v1467 = vadd.f32 %v1368, %v1458
        %v1468 = vadd.f32 %v1369, %v1459
        %v1469 = vadd.f32 %v1370, %v1460
        %v1470 = vadd.f32 %v1371, %v1461
        %v1471 = vadd.f32 %v1372, %v1462
        %v1472 = vadd.f32 %v1373, %v1463
        %v1473 = vld [vmem:[%s229 + $0xc] sm:$0x1]
        %1474 = vset.pattern.permute.xlu0 12
        %1475 = vperm.xlu0 %1474, %v267
        %v1476 = vpop.permute.xlu0 %1475
        %1478 = vset.pattern.permute.xlu0 12
        %1479 = vperm.xlu0 %1478, %v268
        %v1480 = vpop.permute.xlu0 %1479
        %1482 = vset.pattern.permute.xlu0 12
        %1483 = vperm.xlu0 %1482, %v269
        %v1484 = vpop.permute.xlu0 %1483
        %1486 = vset.pattern.permute.xlu0 12
        %1487 = vperm.xlu0 %1486, %v270
        %v1488 = vpop.permute.xlu0 %1487
        %1490 = vset.pattern.permute.xlu0 12
        %1491 = vperm.xlu0 %1490, %v271
        %v1492 = vpop.permute.xlu0 %1491
        %1494 = vset.pattern.permute.xlu0 12
        %1495 = vperm.xlu0 %1494, %v272
        %v1496 = vpop.permute.xlu0 %1495
        %1498 = vset.pattern.permute.xlu0 12
        %1499 = vperm.xlu0 %1498, %v273
        %v1500 = vpop.permute.xlu0 %1499
        %1502 = vset.pattern.permute.xlu0 12
        %1503 = vperm.xlu0 %1502, %v274
        %v1504 = vpop.permute.xlu0 %1503
        %1506 = vset.pattern.permute.xlu0 12
        %1507 = vperm.xlu0 %1506, %v275
        %v1508 = vpop.permute.xlu0 %1507
        %v1510 = vlaneseq
        %v1511 = vshrl.u32 %v1510, 7
        %v1512 = vsub.s32 0, %v1511
        %v1513 = vrot.slane %v1473, %v1512
        %v1514 = vsub.f32 %v1476, %v1513
        %v1515 = vsub.f32 %v1480, %v1513
        %v1516 = vsub.f32 %v1484, %v1513
        %v1517 = vsub.f32 %v1488, %v1513
        %v1518 = vsub.f32 %v1492, %v1513
        %v1519 = vsub.f32 %v1496, %v1513
        %v1520 = vsub.f32 %v1500, %v1513
        %v1521 = vsub.f32 %v1504, %v1513
        %v1522 = vsub.f32 %v1508, %v1513
        %v1523 = vand.u32 2147483647, %v1514
        %v1524 = vand.u32 2147483647, %v1515
        %v1525 = vand.u32 2147483647, %v1516
        %v1526 = vand.u32 2147483647, %v1517
        %v1527 = vand.u32 2147483647, %v1518
        %v1528 = vand.u32 2147483647, %v1519
        %v1529 = vand.u32 2147483647, %v1520
        %v1530 = vand.u32 2147483647, %v1521
        %v1531 = vand.u32 2147483647, %v1522
        %s1532 = sld [smem:[#allocation3 + $0xc]]
        %v1533 = vstv %s1532
        %v1534 = vmul.f32 %v1523, %v1533
        %v1535 = vmul.f32 %v1524, %v1533
        %v1536 = vmul.f32 %v1525, %v1533
        %v1537 = vmul.f32 %v1526, %v1533
        %v1538 = vmul.f32 %v1527, %v1533
        %v1539 = vmul.f32 %v1528, %v1533
        %v1540 = vmul.f32 %v1529, %v1533
        %v1541 = vmul.f32 %v1530, %v1533
        %v1542 = vmul.f32 %v1531, %v1533
        %v1543 = vadd.f32 %v1444, %v1534
        %v1544 = vadd.f32 %v1445, %v1535
        %v1545 = vadd.f32 %v1446, %v1536
        %v1546 = vadd.f32 %v1447, %v1537
        %v1547 = vadd.f32 %v1448, %v1538
        %v1548 = vadd.f32 %v1449, %v1539
        %v1549 = vadd.f32 %v1450, %v1540
        %v1550 = vadd.f32 %v1451, %v1541
        %v1551 = vadd.f32 %v1452, %v1542
        %s1552 = sld [smem:[#allocation3 + $0x8c]]
        %v1553 = vstv %s1552
        %v1554 = vmul.f32 %v1523, %v1553
        %v1555 = vmul.f32 %v1524, %v1553
        %v1556 = vmul.f32 %v1525, %v1553
        %v1557 = vmul.f32 %v1526, %v1553
        %v1558 = vmul.f32 %v1527, %v1553
        %v1559 = vmul.f32 %v1528, %v1553
        %v1560 = vmul.f32 %v1529, %v1553
        %v1561 = vmul.f32 %v1530, %v1553
        %v1562 = vmul.f32 %v1531, %v1553
        %v1563 = vadd.f32 %v1464, %v1554
        %v1564 = vadd.f32 %v1465, %v1555
        %v1565 = vadd.f32 %v1466, %v1556
        %v1566 = vadd.f32 %v1467, %v1557
        %v1567 = vadd.f32 %v1468, %v1558
        %v1568 = vadd.f32 %v1469, %v1559
        %v1569 = vadd.f32 %v1470, %v1560
        %v1570 = vadd.f32 %v1471, %v1561
        %v1571 = vadd.f32 %v1472, %v1562
        %v1572 = vld [vmem:[%s229 + $0xd] sm:$0x1]
        %1573 = vset.pattern.permute.xlu0 13
        %1574 = vperm.xlu0 %1573, %v267
        %v1575 = vpop.permute.xlu0 %1574
        %1577 = vset.pattern.permute.xlu0 13
        %1578 = vperm.xlu0 %1577, %v268
        %v1579 = vpop.permute.xlu0 %1578
        %1581 = vset.pattern.permute.xlu0 13
        %1582 = vperm.xlu0 %1581, %v269
        %v1583 = vpop.permute.xlu0 %1582
        %1585 = vset.pattern.permute.xlu0 13
        %1586 = vperm.xlu0 %1585, %v270
        %v1587 = vpop.permute.xlu0 %1586
        %1589 = vset.pattern.permute.xlu0 13
        %1590 = vperm.xlu0 %1589, %v271
        %v1591 = vpop.permute.xlu0 %1590
        %1593 = vset.pattern.permute.xlu0 13
        %1594 = vperm.xlu0 %1593, %v272
        %v1595 = vpop.permute.xlu0 %1594
        %1597 = vset.pattern.permute.xlu0 13
        %1598 = vperm.xlu0 %1597, %v273
        %v1599 = vpop.permute.xlu0 %1598
        %1601 = vset.pattern.permute.xlu0 13
        %1602 = vperm.xlu0 %1601, %v274
        %v1603 = vpop.permute.xlu0 %1602
        %1605 = vset.pattern.permute.xlu0 13
        %1606 = vperm.xlu0 %1605, %v275
        %v1607 = vpop.permute.xlu0 %1606
        %v1609 = vlaneseq
        %v1610 = vshrl.u32 %v1609, 7
        %v1611 = vsub.s32 0, %v1610
        %v1612 = vrot.slane %v1572, %v1611
        %v1613 = vsub.f32 %v1575, %v1612
        %v1614 = vsub.f32 %v1579, %v1612
        %v1615 = vsub.f32 %v1583, %v1612
        %v1616 = vsub.f32 %v1587, %v1612
        %v1617 = vsub.f32 %v1591, %v1612
        %v1618 = vsub.f32 %v1595, %v1612
        %v1619 = vsub.f32 %v1599, %v1612
        %v1620 = vsub.f32 %v1603, %v1612
        %v1621 = vsub.f32 %v1607, %v1612
        %v1622 = vand.u32 2147483647, %v1613
        %v1623 = vand.u32 2147483647, %v1614
        %v1624 = vand.u32 2147483647, %v1615
        %v1625 = vand.u32 2147483647, %v1616
        %v1626 = vand.u32 2147483647, %v1617
        %v1627 = vand.u32 2147483647, %v1618
        %v1628 = vand.u32 2147483647, %v1619
        %v1629 = vand.u32 2147483647, %v1620
        %v1630 = vand.u32 2147483647, %v1621
        %s1631 = sld [smem:[#allocation3 + $0xd]]
        %v1632 = vstv %s1631
        %v1633 = vmul.f32 %v1622, %v1632
        %v1634 = vmul.f32 %v1623, %v1632
        %v1635 = vmul.f32 %v1624, %v1632
        %v1636 = vmul.f32 %v1625, %v1632
        %v1637 = vmul.f32 %v1626, %v1632
        %v1638 = vmul.f32 %v1627, %v1632
        %v1639 = vmul.f32 %v1628, %v1632
        %v1640 = vmul.f32 %v1629, %v1632
        %v1641 = vmul.f32 %v1630, %v1632
        %v1642 = vadd.f32 %v1543, %v1633
        %v1643 = vadd.f32 %v1544, %v1634
        %v1644 = vadd.f32 %v1545, %v1635
        %v1645 = vadd.f32 %v1546, %v1636
        %v1646 = vadd.f32 %v1547, %v1637
        %v1647 = vadd.f32 %v1548, %v1638
        %v1648 = vadd.f32 %v1549, %v1639
        %v1649 = vadd.f32 %v1550, %v1640
        %v1650 = vadd.f32 %v1551, %v1641
        %s1651 = sld [smem:[#allocation3 + $0x8d]]
        %v1652 = vstv %s1651
        %v1653 = vmul.f32 %v1622, %v1652
        %v1654 = vmul.f32 %v1623, %v1652
        %v1655 = vmul.f32 %v1624, %v1652
        %v1656 = vmul.f32 %v1625, %v1652
        %v1657 = vmul.f32 %v1626, %v1652
        %v1658 = vmul.f32 %v1627, %v1652
        %v1659 = vmul.f32 %v1628, %v1652
        %v1660 = vmul.f32 %v1629, %v1652
        %v1661 = vmul.f32 %v1630, %v1652
        %v1662 = vadd.f32 %v1563, %v1653
        %v1663 = vadd.f32 %v1564, %v1654
        %v1664 = vadd.f32 %v1565, %v1655
        %v1665 = vadd.f32 %v1566, %v1656
        %v1666 = vadd.f32 %v1567, %v1657
        %v1667 = vadd.f32 %v1568, %v1658
        %v1668 = vadd.f32 %v1569, %v1659
        %v1669 = vadd.f32 %v1570, %v1660
        %v1670 = vadd.f32 %v1571, %v1661
        %v1671 = vld [vmem:[%s229 + $0xe] sm:$0x1]
        %1672 = vset.pattern.permute.xlu0 14
        %1673 = vperm.xlu0 %1672, %v267
        %v1674 = vpop.permute.xlu0 %1673
        %1676 = vset.pattern.permute.xlu0 14
        %1677 = vperm.xlu0 %1676, %v268
        %v1678 = vpop.permute.xlu0 %1677
        %1680 = vset.pattern.permute.xlu0 14
        %1681 = vperm.xlu0 %1680, %v269
        %v1682 = vpop.permute.xlu0 %1681
        %1684 = vset.pattern.permute.xlu0 14
        %1685 = vperm.xlu0 %1684, %v270
        %v1686 = vpop.permute.xlu0 %1685
        %1688 = vset.pattern.permute.xlu0 14
        %1689 = vperm.xlu0 %1688, %v271
        %v1690 = vpop.permute.xlu0 %1689
        %1692 = vset.pattern.permute.xlu0 14
        %1693 = vperm.xlu0 %1692, %v272
        %v1694 = vpop.permute.xlu0 %1693
        %1696 = vset.pattern.permute.xlu0 14
        %1697 = vperm.xlu0 %1696, %v273
        %v1698 = vpop.permute.xlu0 %1697
        %1700 = vset.pattern.permute.xlu0 14
        %1701 = vperm.xlu0 %1700, %v274
        %v1702 = vpop.permute.xlu0 %1701
        %1704 = vset.pattern.permute.xlu0 14
        %1705 = vperm.xlu0 %1704, %v275
        %v1706 = vpop.permute.xlu0 %1705
        %v1708 = vlaneseq
        %v1709 = vshrl.u32 %v1708, 7
        %v1710 = vsub.s32 0, %v1709
        %v1711 = vrot.slane %v1671, %v1710
        %v1712 = vsub.f32 %v1674, %v1711
        %v1713 = vsub.f32 %v1678, %v1711
        %v1714 = vsub.f32 %v1682, %v1711
        %v1715 = vsub.f32 %v1686, %v1711
        %v1716 = vsub.f32 %v1690, %v1711
        %v1717 = vsub.f32 %v1694, %v1711
        %v1718 = vsub.f32 %v1698, %v1711
        %v1719 = vsub.f32 %v1702, %v1711
        %v1720 = vsub.f32 %v1706, %v1711
        %v1721 = vand.u32 2147483647, %v1712
        %v1722 = vand.u32 2147483647, %v1713
        %v1723 = vand.u32 2147483647, %v1714
        %v1724 = vand.u32 2147483647, %v1715
        %v1725 = vand.u32 2147483647, %v1716
        %v1726 = vand.u32 2147483647, %v1717
        %v1727 = vand.u32 2147483647, %v1718
        %v1728 = vand.u32 2147483647, %v1719
        %v1729 = vand.u32 2147483647, %v1720
        %s1730 = sld [smem:[#allocation3 + $0xe]]
        %v1731 = vstv %s1730
        %v1732 = vmul.f32 %v1721, %v1731
        %v1733 = vmul.f32 %v1722, %v1731
        %v1734 = vmul.f32 %v1723, %v1731
        %v1735 = vmul.f32 %v1724, %v1731
        %v1736 = vmul.f32 %v1725, %v1731
        %v1737 = vmul.f32 %v1726, %v1731
        %v1738 = vmul.f32 %v1727, %v1731
        %v1739 = vmul.f32 %v1728, %v1731
        %v1740 = vmul.f32 %v1729, %v1731
        %v1741 = vadd.f32 %v1642, %v1732
        %v1742 = vadd.f32 %v1643, %v1733
        %v1743 = vadd.f32 %v1644, %v1734
        %v1744 = vadd.f32 %v1645, %v1735
        %v1745 = vadd.f32 %v1646, %v1736
        %v1746 = vadd.f32 %v1647, %v1737
        %v1747 = vadd.f32 %v1648, %v1738
        %v1748 = vadd.f32 %v1649, %v1739
        %v1749 = vadd.f32 %v1650, %v1740
        %s1750 = sld [smem:[#allocation3 + $0x8e]]
        %v1751 = vstv %s1750
        %v1752 = vmul.f32 %v1721, %v1751
        %v1753 = vmul.f32 %v1722, %v1751
        %v1754 = vmul.f32 %v1723, %v1751
        %v1755 = vmul.f32 %v1724, %v1751
        %v1756 = vmul.f32 %v1725, %v1751
        %v1757 = vmul.f32 %v1726, %v1751
        %v1758 = vmul.f32 %v1727, %v1751
        %v1759 = vmul.f32 %v1728, %v1751
        %v1760 = vmul.f32 %v1729, %v1751
        %v1761 = vadd.f32 %v1662, %v1752
        %v1762 = vadd.f32 %v1663, %v1753
        %v1763 = vadd.f32 %v1664, %v1754
        %v1764 = vadd.f32 %v1665, %v1755
        %v1765 = vadd.f32 %v1666, %v1756
        %v1766 = vadd.f32 %v1667, %v1757
        %v1767 = vadd.f32 %v1668, %v1758
        %v1768 = vadd.f32 %v1669, %v1759
        %v1769 = vadd.f32 %v1670, %v1760
        %v1770 = vld [vmem:[%s229 + $0xf] sm:$0x1]
        %1771 = vset.pattern.permute.xlu0 15
        %1772 = vperm.xlu0 %1771, %v267
        %v1773 = vpop.permute.xlu0 %1772
        %1775 = vset.pattern.permute.xlu0 15
        %1776 = vperm.xlu0 %1775, %v268
        %v1777 = vpop.permute.xlu0 %1776
        %1779 = vset.pattern.permute.xlu0 15
        %1780 = vperm.xlu0 %1779, %v269
        %v1781 = vpop.permute.xlu0 %1780
        %1783 = vset.pattern.permute.xlu0 15
        %1784 = vperm.xlu0 %1783, %v270
        %v1785 = vpop.permute.xlu0 %1784
        %1787 = vset.pattern.permute.xlu0 15
        %1788 = vperm.xlu0 %1787, %v271
        %v1789 = vpop.permute.xlu0 %1788
        %1791 = vset.pattern.permute.xlu0 15
        %1792 = vperm.xlu0 %1791, %v272
        %v1793 = vpop.permute.xlu0 %1792
        %1795 = vset.pattern.permute.xlu0 15
        %1796 = vperm.xlu0 %1795, %v273
        %v1797 = vpop.permute.xlu0 %1796
        %1799 = vset.pattern.permute.xlu0 15
        %1800 = vperm.xlu0 %1799, %v274
        %v1801 = vpop.permute.xlu0 %1800
        %1803 = vset.pattern.permute.xlu0 15
        %1804 = vperm.xlu0 %1803, %v275
        %v1805 = vpop.permute.xlu0 %1804
        %v1807 = vlaneseq
        %v1808 = vshrl.u32 %v1807, 7
        %v1809 = vsub.s32 0, %v1808
        %v1810 = vrot.slane %v1770, %v1809
        %v1811 = vsub.f32 %v1773, %v1810
        %v1812 = vsub.f32 %v1777, %v1810
        %v1813 = vsub.f32 %v1781, %v1810
        %v1814 = vsub.f32 %v1785, %v1810
        %v1815 = vsub.f32 %v1789, %v1810
        %v1816 = vsub.f32 %v1793, %v1810
        %v1817 = vsub.f32 %v1797, %v1810
        %v1818 = vsub.f32 %v1801, %v1810
        %v1819 = vsub.f32 %v1805, %v1810
        %v1820 = vand.u32 2147483647, %v1811
        %v1821 = vand.u32 2147483647, %v1812
        %v1822 = vand.u32 2147483647, %v1813
        %v1823 = vand.u32 2147483647, %v1814
        %v1824 = vand.u32 2147483647, %v1815
        %v1825 = vand.u32 2147483647, %v1816
        %v1826 = vand.u32 2147483647, %v1817
        %v1827 = vand.u32 2147483647, %v1818
        %v1828 = vand.u32 2147483647, %v1819
        %s1829 = sld [smem:[#allocation3 + $0xf]]
        %v1830 = vstv %s1829
        %v1831 = vmul.f32 %v1820, %v1830
        %v1832 = vmul.f32 %v1821, %v1830
        %v1833 = vmul.f32 %v1822, %v1830
        %v1834 = vmul.f32 %v1823, %v1830
        %v1835 = vmul.f32 %v1824, %v1830
        %v1836 = vmul.f32 %v1825, %v1830
        %v1837 = vmul.f32 %v1826, %v1830
        %v1838 = vmul.f32 %v1827, %v1830
        %v1839 = vmul.f32 %v1828, %v1830
        %v1840 = vadd.f32 %v1741, %v1831
        %v1841 = vadd.f32 %v1742, %v1832
        %v1842 = vadd.f32 %v1743, %v1833
        %v1843 = vadd.f32 %v1744, %v1834
        %v1844 = vadd.f32 %v1745, %v1835
        %v1845 = vadd.f32 %v1746, %v1836
        %v1846 = vadd.f32 %v1747, %v1837
        %v1847 = vadd.f32 %v1748, %v1838
        %v1848 = vadd.f32 %v1749, %v1839
        %s1849 = sld [smem:[#allocation3 + $0x8f]]
        %v1850 = vstv %s1849
        %v1851 = vmul.f32 %v1820, %v1850
        %v1852 = vmul.f32 %v1821, %v1850
        %v1853 = vmul.f32 %v1822, %v1850
        %v1854 = vmul.f32 %v1823, %v1850
        %v1855 = vmul.f32 %v1824, %v1850
        %v1856 = vmul.f32 %v1825, %v1850
        %v1857 = vmul.f32 %v1826, %v1850
        %v1858 = vmul.f32 %v1827, %v1850
        %v1859 = vmul.f32 %v1828, %v1850
        %v1860 = vadd.f32 %v1761, %v1851
        %v1861 = vadd.f32 %v1762, %v1852
        %v1862 = vadd.f32 %v1763, %v1853
        %v1863 = vadd.f32 %v1764, %v1854
        %v1864 = vadd.f32 %v1765, %v1855
        %v1865 = vadd.f32 %v1766, %v1856
        %v1866 = vadd.f32 %v1767, %v1857
        %v1867 = vadd.f32 %v1768, %v1858
        %v1868 = vadd.f32 %v1769, %v1859
        %v1869 = vld [vmem:[%s229 + $0x10] sm:$0x1]
        %1870 = vset.pattern.permute.xlu0 16
        %1871 = vperm.xlu0 %1870, %v267
        %v1872 = vpop.permute.xlu0 %1871
        %1874 = vset.pattern.permute.xlu0 16
        %1875 = vperm.xlu0 %1874, %v268
        %v1876 = vpop.permute.xlu0 %1875
        %1878 = vset.pattern.permute.xlu0 16
        %1879 = vperm.xlu0 %1878, %v269
        %v1880 = vpop.permute.xlu0 %1879
        %1882 = vset.pattern.permute.xlu0 16
        %1883 = vperm.xlu0 %1882, %v270
        %v1884 = vpop.permute.xlu0 %1883
        %1886 = vset.pattern.permute.xlu0 16
        %1887 = vperm.xlu0 %1886, %v271
        %v1888 = vpop.permute.xlu0 %1887
        %1890 = vset.pattern.permute.xlu0 16
        %1891 = vperm.xlu0 %1890, %v272
        %v1892 = vpop.permute.xlu0 %1891
        %1894 = vset.pattern.permute.xlu0 16
        %1895 = vperm.xlu0 %1894, %v273
        %v1896 = vpop.permute.xlu0 %1895
        %1898 = vset.pattern.permute.xlu0 16
        %1899 = vperm.xlu0 %1898, %v274
        %v1900 = vpop.permute.xlu0 %1899
        %1902 = vset.pattern.permute.xlu0 16
        %1903 = vperm.xlu0 %1902, %v275
        %v1904 = vpop.permute.xlu0 %1903
        %v1906 = vlaneseq
        %v1907 = vshrl.u32 %v1906, 7
        %v1908 = vsub.s32 0, %v1907
        %v1909 = vrot.slane %v1869, %v1908
        %v1910 = vsub.f32 %v1872, %v1909
        %v1911 = vsub.f32 %v1876, %v1909
        %v1912 = vsub.f32 %v1880, %v1909
        %v1913 = vsub.f32 %v1884, %v1909
        %v1914 = vsub.f32 %v1888, %v1909
        %v1915 = vsub.f32 %v1892, %v1909
        %v1916 = vsub.f32 %v1896, %v1909
        %v1917 = vsub.f32 %v1900, %v1909
        %v1918 = vsub.f32 %v1904, %v1909
        %v1919 = vand.u32 2147483647, %v1910
        %v1920 = vand.u32 2147483647, %v1911
        %v1921 = vand.u32 2147483647, %v1912
        %v1922 = vand.u32 2147483647, %v1913
        %v1923 = vand.u32 2147483647, %v1914
        %v1924 = vand.u32 2147483647, %v1915
        %v1925 = vand.u32 2147483647, %v1916
        %v1926 = vand.u32 2147483647, %v1917
        %v1927 = vand.u32 2147483647, %v1918
        %s1928 = sld [smem:[#allocation3 + $0x10]]
        %v1929 = vstv %s1928
        %v1930 = vmul.f32 %v1919, %v1929
        %v1931 = vmul.f32 %v1920, %v1929
        %v1932 = vmul.f32 %v1921, %v1929
        %v1933 = vmul.f32 %v1922, %v1929
        %v1934 = vmul.f32 %v1923, %v1929
        %v1935 = vmul.f32 %v1924, %v1929
        %v1936 = vmul.f32 %v1925, %v1929
        %v1937 = vmul.f32 %v1926, %v1929
        %v1938 = vmul.f32 %v1927, %v1929
        %v1939 = vadd.f32 %v1840, %v1930
        %v1940 = vadd.f32 %v1841, %v1931
        %v1941 = vadd.f32 %v1842, %v1932
        %v1942 = vadd.f32 %v1843, %v1933
        %v1943 = vadd.f32 %v1844, %v1934
        %v1944 = vadd.f32 %v1845, %v1935
        %v1945 = vadd.f32 %v1846, %v1936
        %v1946 = vadd.f32 %v1847, %v1937
        %v1947 = vadd.f32 %v1848, %v1938
        %s1948 = sld [smem:[#allocation3 + $0x90]]
        %v1949 = vstv %s1948
        %v1950 = vmul.f32 %v1919, %v1949
        %v1951 = vmul.f32 %v1920, %v1949
        %v1952 = vmul.f32 %v1921, %v1949
        %v1953 = vmul.f32 %v1922, %v1949
        %v1954 = vmul.f32 %v1923, %v1949
        %v1955 = vmul.f32 %v1924, %v1949
        %v1956 = vmul.f32 %v1925, %v1949
        %v1957 = vmul.f32 %v1926, %v1949
        %v1958 = vmul.f32 %v1927, %v1949
        %v1959 = vadd.f32 %v1860, %v1950
        %v1960 = vadd.f32 %v1861, %v1951
        %v1961 = vadd.f32 %v1862, %v1952
        %v1962 = vadd.f32 %v1863, %v1953
        %v1963 = vadd.f32 %v1864, %v1954
        %v1964 = vadd.f32 %v1865, %v1955
        %v1965 = vadd.f32 %v1866, %v1956
        %v1966 = vadd.f32 %v1867, %v1957
        %v1967 = vadd.f32 %v1868, %v1958
        %v1968 = vld [vmem:[%s229 + $0x11] sm:$0x1]
        %1969 = vset.pattern.permute.xlu0 17
        %1970 = vperm.xlu0 %1969, %v267
        %v1971 = vpop.permute.xlu0 %1970
        %1973 = vset.pattern.permute.xlu0 17
        %1974 = vperm.xlu0 %1973, %v268
        %v1975 = vpop.permute.xlu0 %1974
        %1977 = vset.pattern.permute.xlu0 17
        %1978 = vperm.xlu0 %1977, %v269
        %v1979 = vpop.permute.xlu0 %1978
        %1981 = vset.pattern.permute.xlu0 17
        %1982 = vperm.xlu0 %1981, %v270
        %v1983 = vpop.permute.xlu0 %1982
        %1985 = vset.pattern.permute.xlu0 17
        %1986 = vperm.xlu0 %1985, %v271
        %v1987 = vpop.permute.xlu0 %1986
        %1989 = vset.pattern.permute.xlu0 17
        %1990 = vperm.xlu0 %1989, %v272
        %v1991 = vpop.permute.xlu0 %1990
        %1993 = vset.pattern.permute.xlu0 17
        %1994 = vperm.xlu0 %1993, %v273
        %v1995 = vpop.permute.xlu0 %1994
        %1997 = vset.pattern.permute.xlu0 17
        %1998 = vperm.xlu0 %1997, %v274
        %v1999 = vpop.permute.xlu0 %1998
        %2001 = vset.pattern.permute.xlu0 17
        %2002 = vperm.xlu0 %2001, %v275
        %v2003 = vpop.permute.xlu0 %2002
        %v2005 = vlaneseq
        %v2006 = vshrl.u32 %v2005, 7
        %v2007 = vsub.s32 0, %v2006
        %v2008 = vrot.slane %v1968, %v2007
        %v2009 = vsub.f32 %v1971, %v2008
        %v2010 = vsub.f32 %v1975, %v2008
        %v2011 = vsub.f32 %v1979, %v2008
        %v2012 = vsub.f32 %v1983, %v2008
        %v2013 = vsub.f32 %v1987, %v2008
        %v2014 = vsub.f32 %v1991, %v2008
        %v2015 = vsub.f32 %v1995, %v2008
        %v2016 = vsub.f32 %v1999, %v2008
        %v2017 = vsub.f32 %v2003, %v2008
        %v2018 = vand.u32 2147483647, %v2009
        %v2019 = vand.u32 2147483647, %v2010
        %v2020 = vand.u32 2147483647, %v2011
        %v2021 = vand.u32 2147483647, %v2012
        %v2022 = vand.u32 2147483647, %v2013
        %v2023 = vand.u32 2147483647, %v2014
        %v2024 = vand.u32 2147483647, %v2015
        %v2025 = vand.u32 2147483647, %v2016
        %v2026 = vand.u32 2147483647, %v2017
        %s2027 = sld [smem:[#allocation3 + $0x11]]
        %v2028 = vstv %s2027
        %v2029 = vmul.f32 %v2018, %v2028
        %v2030 = vmul.f32 %v2019, %v2028
        %v2031 = vmul.f32 %v2020, %v2028
        %v2032 = vmul.f32 %v2021, %v2028
        %v2033 = vmul.f32 %v2022, %v2028
        %v2034 = vmul.f32 %v2023, %v2028
        %v2035 = vmul.f32 %v2024, %v2028
        %v2036 = vmul.f32 %v2025, %v2028
        %v2037 = vmul.f32 %v2026, %v2028
        %v2038 = vadd.f32 %v1939, %v2029
        %v2039 = vadd.f32 %v1940, %v2030
        %v2040 = vadd.f32 %v1941, %v2031
        %v2041 = vadd.f32 %v1942, %v2032
        %v2042 = vadd.f32 %v1943, %v2033
        %v2043 = vadd.f32 %v1944, %v2034
        %v2044 = vadd.f32 %v1945, %v2035
        %v2045 = vadd.f32 %v1946, %v2036
        %v2046 = vadd.f32 %v1947, %v2037
        %s2047 = sld [smem:[#allocation3 + $0x91]]
        %v2048 = vstv %s2047
        %v2049 = vmul.f32 %v2018, %v2048
        %v2050 = vmul.f32 %v2019, %v2048
        %v2051 = vmul.f32 %v2020, %v2048
        %v2052 = vmul.f32 %v2021, %v2048
        %v2053 = vmul.f32 %v2022, %v2048
        %v2054 = vmul.f32 %v2023, %v2048
        %v2055 = vmul.f32 %v2024, %v2048
        %v2056 = vmul.f32 %v2025, %v2048
        %v2057 = vmul.f32 %v2026, %v2048
        %v2058 = vadd.f32 %v1959, %v2049
        %v2059 = vadd.f32 %v1960, %v2050
        %v2060 = vadd.f32 %v1961, %v2051
        %v2061 = vadd.f32 %v1962, %v2052
        %v2062 = vadd.f32 %v1963, %v2053
        %v2063 = vadd.f32 %v1964, %v2054
        %v2064 = vadd.f32 %v1965, %v2055
        %v2065 = vadd.f32 %v1966, %v2056
        %v2066 = vadd.f32 %v1967, %v2057
        %v2067 = vld [vmem:[%s229 + $0x12] sm:$0x1]
        %2068 = vset.pattern.permute.xlu0 18
        %2069 = vperm.xlu0 %2068, %v267
        %v2070 = vpop.permute.xlu0 %2069
        %2072 = vset.pattern.permute.xlu0 18
        %2073 = vperm.xlu0 %2072, %v268
        %v2074 = vpop.permute.xlu0 %2073
        %2076 = vset.pattern.permute.xlu0 18
        %2077 = vperm.xlu0 %2076, %v269
        %v2078 = vpop.permute.xlu0 %2077
        %2080 = vset.pattern.permute.xlu0 18
        %2081 = vperm.xlu0 %2080, %v270
        %v2082 = vpop.permute.xlu0 %2081
        %2084 = vset.pattern.permute.xlu0 18
        %2085 = vperm.xlu0 %2084, %v271
        %v2086 = vpop.permute.xlu0 %2085
        %2088 = vset.pattern.permute.xlu0 18
        %2089 = vperm.xlu0 %2088, %v272
        %v2090 = vpop.permute.xlu0 %2089
        %2092 = vset.pattern.permute.xlu0 18
        %2093 = vperm.xlu0 %2092, %v273
        %v2094 = vpop.permute.xlu0 %2093
        %2096 = vset.pattern.permute.xlu0 18
        %2097 = vperm.xlu0 %2096, %v274
        %v2098 = vpop.permute.xlu0 %2097
        %2100 = vset.pattern.permute.xlu0 18
        %2101 = vperm.xlu0 %2100, %v275
        %v2102 = vpop.permute.xlu0 %2101
        %v2104 = vlaneseq
        %v2105 = vshrl.u32 %v2104, 7
        %v2106 = vsub.s32 0, %v2105
        %v2107 = vrot.slane %v2067, %v2106
        %v2108 = vsub.f32 %v2070, %v2107
        %v2109 = vsub.f32 %v2074, %v2107
        %v2110 = vsub.f32 %v2078, %v2107
        %v2111 = vsub.f32 %v2082, %v2107
        %v2112 = vsub.f32 %v2086, %v2107
        %v2113 = vsub.f32 %v2090, %v2107
        %v2114 = vsub.f32 %v2094, %v2107
        %v2115 = vsub.f32 %v2098, %v2107
        %v2116 = vsub.f32 %v2102, %v2107
        %v2117 = vand.u32 2147483647, %v2108
        %v2118 = vand.u32 2147483647, %v2109
        %v2119 = vand.u32 2147483647, %v2110
        %v2120 = vand.u32 2147483647, %v2111
        %v2121 = vand.u32 2147483647, %v2112
        %v2122 = vand.u32 2147483647, %v2113
        %v2123 = vand.u32 2147483647, %v2114
        %v2124 = vand.u32 2147483647, %v2115
        %v2125 = vand.u32 2147483647, %v2116
        %s2126 = sld [smem:[#allocation3 + $0x12]]
        %v2127 = vstv %s2126
        %v2128 = vmul.f32 %v2117, %v2127
        %v2129 = vmul.f32 %v2118, %v2127
        %v2130 = vmul.f32 %v2119, %v2127
        %v2131 = vmul.f32 %v2120, %v2127
        %v2132 = vmul.f32 %v2121, %v2127
        %v2133 = vmul.f32 %v2122, %v2127
        %v2134 = vmul.f32 %v2123, %v2127
        %v2135 = vmul.f32 %v2124, %v2127
        %v2136 = vmul.f32 %v2125, %v2127
        %v2137 = vadd.f32 %v2038, %v2128
        %v2138 = vadd.f32 %v2039, %v2129
        %v2139 = vadd.f32 %v2040, %v2130
        %v2140 = vadd.f32 %v2041, %v2131
        %v2141 = vadd.f32 %v2042, %v2132
        %v2142 = vadd.f32 %v2043, %v2133
        %v2143 = vadd.f32 %v2044, %v2134
        %v2144 = vadd.f32 %v2045, %v2135
        %v2145 = vadd.f32 %v2046, %v2136
        %s2146 = sld [smem:[#allocation3 + $0x92]]
        %v2147 = vstv %s2146
        %v2148 = vmul.f32 %v2117, %v2147
        %v2149 = vmul.f32 %v2118, %v2147
        %v2150 = vmul.f32 %v2119, %v2147
        %v2151 = vmul.f32 %v2120, %v2147
        %v2152 = vmul.f32 %v2121, %v2147
        %v2153 = vmul.f32 %v2122, %v2147
        %v2154 = vmul.f32 %v2123, %v2147
        %v2155 = vmul.f32 %v2124, %v2147
        %v2156 = vmul.f32 %v2125, %v2147
        %v2157 = vadd.f32 %v2058, %v2148
        %v2158 = vadd.f32 %v2059, %v2149
        %v2159 = vadd.f32 %v2060, %v2150
        %v2160 = vadd.f32 %v2061, %v2151
        %v2161 = vadd.f32 %v2062, %v2152
        %v2162 = vadd.f32 %v2063, %v2153
        %v2163 = vadd.f32 %v2064, %v2154
        %v2164 = vadd.f32 %v2065, %v2155
        %v2165 = vadd.f32 %v2066, %v2156
        %v2166 = vld [vmem:[%s229 + $0x13] sm:$0x1]
        %2167 = vset.pattern.permute.xlu0 19
        %2168 = vperm.xlu0 %2167, %v267
        %v2169 = vpop.permute.xlu0 %2168
        %2171 = vset.pattern.permute.xlu0 19
        %2172 = vperm.xlu0 %2171, %v268
        %v2173 = vpop.permute.xlu0 %2172
        %2175 = vset.pattern.permute.xlu0 19
        %2176 = vperm.xlu0 %2175, %v269
        %v2177 = vpop.permute.xlu0 %2176
        %2179 = vset.pattern.permute.xlu0 19
        %2180 = vperm.xlu0 %2179, %v270
        %v2181 = vpop.permute.xlu0 %2180
        %2183 = vset.pattern.permute.xlu0 19
        %2184 = vperm.xlu0 %2183, %v271
        %v2185 = vpop.permute.xlu0 %2184
        %2187 = vset.pattern.permute.xlu0 19
        %2188 = vperm.xlu0 %2187, %v272
        %v2189 = vpop.permute.xlu0 %2188
        %2191 = vset.pattern.permute.xlu0 19
        %2192 = vperm.xlu0 %2191, %v273
        %v2193 = vpop.permute.xlu0 %2192
        %2195 = vset.pattern.permute.xlu0 19
        %2196 = vperm.xlu0 %2195, %v274
        %v2197 = vpop.permute.xlu0 %2196
        %2199 = vset.pattern.permute.xlu0 19
        %2200 = vperm.xlu0 %2199, %v275
        %v2201 = vpop.permute.xlu0 %2200
        %v2203 = vlaneseq
        %v2204 = vshrl.u32 %v2203, 7
        %v2205 = vsub.s32 0, %v2204
        %v2206 = vrot.slane %v2166, %v2205
        %v2207 = vsub.f32 %v2169, %v2206
        %v2208 = vsub.f32 %v2173, %v2206
        %v2209 = vsub.f32 %v2177, %v2206
        %v2210 = vsub.f32 %v2181, %v2206
        %v2211 = vsub.f32 %v2185, %v2206
        %v2212 = vsub.f32 %v2189, %v2206
        %v2213 = vsub.f32 %v2193, %v2206
        %v2214 = vsub.f32 %v2197, %v2206
        %v2215 = vsub.f32 %v2201, %v2206
        %v2216 = vand.u32 2147483647, %v2207
        %v2217 = vand.u32 2147483647, %v2208
        %v2218 = vand.u32 2147483647, %v2209
        %v2219 = vand.u32 2147483647, %v2210
        %v2220 = vand.u32 2147483647, %v2211
        %v2221 = vand.u32 2147483647, %v2212
        %v2222 = vand.u32 2147483647, %v2213
        %v2223 = vand.u32 2147483647, %v2214
        %v2224 = vand.u32 2147483647, %v2215
        %s2225 = sld [smem:[#allocation3 + $0x13]]
        %v2226 = vstv %s2225
        %v2227 = vmul.f32 %v2216, %v2226
        %v2228 = vmul.f32 %v2217, %v2226
        %v2229 = vmul.f32 %v2218, %v2226
        %v2230 = vmul.f32 %v2219, %v2226
        %v2231 = vmul.f32 %v2220, %v2226
        %v2232 = vmul.f32 %v2221, %v2226
        %v2233 = vmul.f32 %v2222, %v2226
        %v2234 = vmul.f32 %v2223, %v2226
        %v2235 = vmul.f32 %v2224, %v2226
        %v2236 = vadd.f32 %v2137, %v2227
        %v2237 = vadd.f32 %v2138, %v2228
        %v2238 = vadd.f32 %v2139, %v2229
        %v2239 = vadd.f32 %v2140, %v2230
        %v2240 = vadd.f32 %v2141, %v2231
        %v2241 = vadd.f32 %v2142, %v2232
        %v2242 = vadd.f32 %v2143, %v2233
        %v2243 = vadd.f32 %v2144, %v2234
        %v2244 = vadd.f32 %v2145, %v2235
        %s2245 = sld [smem:[#allocation3 + $0x93]]
        %v2246 = vstv %s2245
        %v2247 = vmul.f32 %v2216, %v2246
        %v2248 = vmul.f32 %v2217, %v2246
        %v2249 = vmul.f32 %v2218, %v2246
        %v2250 = vmul.f32 %v2219, %v2246
        %v2251 = vmul.f32 %v2220, %v2246
        %v2252 = vmul.f32 %v2221, %v2246
        %v2253 = vmul.f32 %v2222, %v2246
        %v2254 = vmul.f32 %v2223, %v2246
        %v2255 = vmul.f32 %v2224, %v2246
        %v2256 = vadd.f32 %v2157, %v2247
        %v2257 = vadd.f32 %v2158, %v2248
        %v2258 = vadd.f32 %v2159, %v2249
        %v2259 = vadd.f32 %v2160, %v2250
        %v2260 = vadd.f32 %v2161, %v2251
        %v2261 = vadd.f32 %v2162, %v2252
        %v2262 = vadd.f32 %v2163, %v2253
        %v2263 = vadd.f32 %v2164, %v2254
        %v2264 = vadd.f32 %v2165, %v2255
        %v2265 = vld [vmem:[%s229 + $0x14] sm:$0x1]
        %2266 = vset.pattern.permute.xlu0 20
        %2267 = vperm.xlu0 %2266, %v267
        %v2268 = vpop.permute.xlu0 %2267
        %2270 = vset.pattern.permute.xlu0 20
        %2271 = vperm.xlu0 %2270, %v268
        %v2272 = vpop.permute.xlu0 %2271
        %2274 = vset.pattern.permute.xlu0 20
        %2275 = vperm.xlu0 %2274, %v269
        %v2276 = vpop.permute.xlu0 %2275
        %2278 = vset.pattern.permute.xlu0 20
        %2279 = vperm.xlu0 %2278, %v270
        %v2280 = vpop.permute.xlu0 %2279
        %2282 = vset.pattern.permute.xlu0 20
        %2283 = vperm.xlu0 %2282, %v271
        %v2284 = vpop.permute.xlu0 %2283
        %2286 = vset.pattern.permute.xlu0 20
        %2287 = vperm.xlu0 %2286, %v272
        %v2288 = vpop.permute.xlu0 %2287
        %2290 = vset.pattern.permute.xlu0 20
        %2291 = vperm.xlu0 %2290, %v273
        %v2292 = vpop.permute.xlu0 %2291
        %2294 = vset.pattern.permute.xlu0 20
        %2295 = vperm.xlu0 %2294, %v274
        %v2296 = vpop.permute.xlu0 %2295
        %2298 = vset.pattern.permute.xlu0 20
        %2299 = vperm.xlu0 %2298, %v275
        %v2300 = vpop.permute.xlu0 %2299
        %v2302 = vlaneseq
        %v2303 = vshrl.u32 %v2302, 7
        %v2304 = vsub.s32 0, %v2303
        %v2305 = vrot.slane %v2265, %v2304
        %v2306 = vsub.f32 %v2268, %v2305
        %v2307 = vsub.f32 %v2272, %v2305
        %v2308 = vsub.f32 %v2276, %v2305
        %v2309 = vsub.f32 %v2280, %v2305
        %v2310 = vsub.f32 %v2284, %v2305
        %v2311 = vsub.f32 %v2288, %v2305
        %v2312 = vsub.f32 %v2292, %v2305
        %v2313 = vsub.f32 %v2296, %v2305
        %v2314 = vsub.f32 %v2300, %v2305
        %v2315 = vand.u32 2147483647, %v2306
        %v2316 = vand.u32 2147483647, %v2307
        %v2317 = vand.u32 2147483647, %v2308
        %v2318 = vand.u32 2147483647, %v2309
        %v2319 = vand.u32 2147483647, %v2310
        %v2320 = vand.u32 2147483647, %v2311
        %v2321 = vand.u32 2147483647, %v2312
        %v2322 = vand.u32 2147483647, %v2313
        %v2323 = vand.u32 2147483647, %v2314
        %s2324 = sld [smem:[#allocation3 + $0x14]]
        %v2325 = vstv %s2324
        %v2326 = vmul.f32 %v2315, %v2325
        %v2327 = vmul.f32 %v2316, %v2325
        %v2328 = vmul.f32 %v2317, %v2325
        %v2329 = vmul.f32 %v2318, %v2325
        %v2330 = vmul.f32 %v2319, %v2325
        %v2331 = vmul.f32 %v2320, %v2325
        %v2332 = vmul.f32 %v2321, %v2325
        %v2333 = vmul.f32 %v2322, %v2325
        %v2334 = vmul.f32 %v2323, %v2325
        %v2335 = vadd.f32 %v2236, %v2326
        %v2336 = vadd.f32 %v2237, %v2327
        %v2337 = vadd.f32 %v2238, %v2328
        %v2338 = vadd.f32 %v2239, %v2329
        %v2339 = vadd.f32 %v2240, %v2330
        %v2340 = vadd.f32 %v2241, %v2331
        %v2341 = vadd.f32 %v2242, %v2332
        %v2342 = vadd.f32 %v2243, %v2333
        %v2343 = vadd.f32 %v2244, %v2334
        %s2344 = sld [smem:[#allocation3 + $0x94]]
        %v2345 = vstv %s2344
        %v2346 = vmul.f32 %v2315, %v2345
        %v2347 = vmul.f32 %v2316, %v2345
        %v2348 = vmul.f32 %v2317, %v2345
        %v2349 = vmul.f32 %v2318, %v2345
        %v2350 = vmul.f32 %v2319, %v2345
        %v2351 = vmul.f32 %v2320, %v2345
        %v2352 = vmul.f32 %v2321, %v2345
        %v2353 = vmul.f32 %v2322, %v2345
        %v2354 = vmul.f32 %v2323, %v2345
        %v2355 = vadd.f32 %v2256, %v2346
        %v2356 = vadd.f32 %v2257, %v2347
        %v2357 = vadd.f32 %v2258, %v2348
        %v2358 = vadd.f32 %v2259, %v2349
        %v2359 = vadd.f32 %v2260, %v2350
        %v2360 = vadd.f32 %v2261, %v2351
        %v2361 = vadd.f32 %v2262, %v2352
        %v2362 = vadd.f32 %v2263, %v2353
        %v2363 = vadd.f32 %v2264, %v2354
        %v2364 = vld [vmem:[%s229 + $0x15] sm:$0x1]
        %2365 = vset.pattern.permute.xlu0 21
        %2366 = vperm.xlu0 %2365, %v267
        %v2367 = vpop.permute.xlu0 %2366
        %2369 = vset.pattern.permute.xlu0 21
        %2370 = vperm.xlu0 %2369, %v268
        %v2371 = vpop.permute.xlu0 %2370
        %2373 = vset.pattern.permute.xlu0 21
        %2374 = vperm.xlu0 %2373, %v269
        %v2375 = vpop.permute.xlu0 %2374
        %2377 = vset.pattern.permute.xlu0 21
        %2378 = vperm.xlu0 %2377, %v270
        %v2379 = vpop.permute.xlu0 %2378
        %2381 = vset.pattern.permute.xlu0 21
        %2382 = vperm.xlu0 %2381, %v271
        %v2383 = vpop.permute.xlu0 %2382
        %2385 = vset.pattern.permute.xlu0 21
        %2386 = vperm.xlu0 %2385, %v272
        %v2387 = vpop.permute.xlu0 %2386
        %2389 = vset.pattern.permute.xlu0 21
        %2390 = vperm.xlu0 %2389, %v273
        %v2391 = vpop.permute.xlu0 %2390
        %2393 = vset.pattern.permute.xlu0 21
        %2394 = vperm.xlu0 %2393, %v274
        %v2395 = vpop.permute.xlu0 %2394
        %2397 = vset.pattern.permute.xlu0 21
        %2398 = vperm.xlu0 %2397, %v275
        %v2399 = vpop.permute.xlu0 %2398
        %v2401 = vlaneseq
        %v2402 = vshrl.u32 %v2401, 7
        %v2403 = vsub.s32 0, %v2402
        %v2404 = vrot.slane %v2364, %v2403
        %v2405 = vsub.f32 %v2367, %v2404
        %v2406 = vsub.f32 %v2371, %v2404
        %v2407 = vsub.f32 %v2375, %v2404
        %v2408 = vsub.f32 %v2379, %v2404
        %v2409 = vsub.f32 %v2383, %v2404
        %v2410 = vsub.f32 %v2387, %v2404
        %v2411 = vsub.f32 %v2391, %v2404
        %v2412 = vsub.f32 %v2395, %v2404
        %v2413 = vsub.f32 %v2399, %v2404
        %v2414 = vand.u32 2147483647, %v2405
        %v2415 = vand.u32 2147483647, %v2406
        %v2416 = vand.u32 2147483647, %v2407
        %v2417 = vand.u32 2147483647, %v2408
        %v2418 = vand.u32 2147483647, %v2409
        %v2419 = vand.u32 2147483647, %v2410
        %v2420 = vand.u32 2147483647, %v2411
        %v2421 = vand.u32 2147483647, %v2412
        %v2422 = vand.u32 2147483647, %v2413
        %s2423 = sld [smem:[#allocation3 + $0x15]]
        %v2424 = vstv %s2423
        %v2425 = vmul.f32 %v2414, %v2424
        %v2426 = vmul.f32 %v2415, %v2424
        %v2427 = vmul.f32 %v2416, %v2424
        %v2428 = vmul.f32 %v2417, %v2424
        %v2429 = vmul.f32 %v2418, %v2424
        %v2430 = vmul.f32 %v2419, %v2424
        %v2431 = vmul.f32 %v2420, %v2424
        %v2432 = vmul.f32 %v2421, %v2424
        %v2433 = vmul.f32 %v2422, %v2424
        %v2434 = vadd.f32 %v2335, %v2425
        %v2435 = vadd.f32 %v2336, %v2426
        %v2436 = vadd.f32 %v2337, %v2427
        %v2437 = vadd.f32 %v2338, %v2428
        %v2438 = vadd.f32 %v2339, %v2429
        %v2439 = vadd.f32 %v2340, %v2430
        %v2440 = vadd.f32 %v2341, %v2431
        %v2441 = vadd.f32 %v2342, %v2432
        %v2442 = vadd.f32 %v2343, %v2433
        %s2443 = sld [smem:[#allocation3 + $0x95]]
        %v2444 = vstv %s2443
        %v2445 = vmul.f32 %v2414, %v2444
        %v2446 = vmul.f32 %v2415, %v2444
        %v2447 = vmul.f32 %v2416, %v2444
        %v2448 = vmul.f32 %v2417, %v2444
        %v2449 = vmul.f32 %v2418, %v2444
        %v2450 = vmul.f32 %v2419, %v2444
        %v2451 = vmul.f32 %v2420, %v2444
        %v2452 = vmul.f32 %v2421, %v2444
        %v2453 = vmul.f32 %v2422, %v2444
        %v2454 = vadd.f32 %v2355, %v2445
        %v2455 = vadd.f32 %v2356, %v2446
        %v2456 = vadd.f32 %v2357, %v2447
        %v2457 = vadd.f32 %v2358, %v2448
        %v2458 = vadd.f32 %v2359, %v2449
        %v2459 = vadd.f32 %v2360, %v2450
        %v2460 = vadd.f32 %v2361, %v2451
        %v2461 = vadd.f32 %v2362, %v2452
        %v2462 = vadd.f32 %v2363, %v2453
        %v2463 = vld [vmem:[%s229 + $0x16] sm:$0x1]
        %2464 = vset.pattern.permute.xlu0 22
        %2465 = vperm.xlu0 %2464, %v267
        %v2466 = vpop.permute.xlu0 %2465
        %2468 = vset.pattern.permute.xlu0 22
        %2469 = vperm.xlu0 %2468, %v268
        %v2470 = vpop.permute.xlu0 %2469
        %2472 = vset.pattern.permute.xlu0 22
        %2473 = vperm.xlu0 %2472, %v269
        %v2474 = vpop.permute.xlu0 %2473
        %2476 = vset.pattern.permute.xlu0 22
        %2477 = vperm.xlu0 %2476, %v270
        %v2478 = vpop.permute.xlu0 %2477
        %2480 = vset.pattern.permute.xlu0 22
        %2481 = vperm.xlu0 %2480, %v271
        %v2482 = vpop.permute.xlu0 %2481
        %2484 = vset.pattern.permute.xlu0 22
        %2485 = vperm.xlu0 %2484, %v272
        %v2486 = vpop.permute.xlu0 %2485
        %2488 = vset.pattern.permute.xlu0 22
        %2489 = vperm.xlu0 %2488, %v273
        %v2490 = vpop.permute.xlu0 %2489
        %2492 = vset.pattern.permute.xlu0 22
        %2493 = vperm.xlu0 %2492, %v274
        %v2494 = vpop.permute.xlu0 %2493
        %2496 = vset.pattern.permute.xlu0 22
        %2497 = vperm.xlu0 %2496, %v275
        %v2498 = vpop.permute.xlu0 %2497
        %v2500 = vlaneseq
        %v2501 = vshrl.u32 %v2500, 7
        %v2502 = vsub.s32 0, %v2501
        %v2503 = vrot.slane %v2463, %v2502
        %v2504 = vsub.f32 %v2466, %v2503
        %v2505 = vsub.f32 %v2470, %v2503
        %v2506 = vsub.f32 %v2474, %v2503
        %v2507 = vsub.f32 %v2478, %v2503
        %v2508 = vsub.f32 %v2482, %v2503
        %v2509 = vsub.f32 %v2486, %v2503
        %v2510 = vsub.f32 %v2490, %v2503
        %v2511 = vsub.f32 %v2494, %v2503
        %v2512 = vsub.f32 %v2498, %v2503
        %v2513 = vand.u32 2147483647, %v2504
        %v2514 = vand.u32 2147483647, %v2505
        %v2515 = vand.u32 2147483647, %v2506
        %v2516 = vand.u32 2147483647, %v2507
        %v2517 = vand.u32 2147483647, %v2508
        %v2518 = vand.u32 2147483647, %v2509
        %v2519 = vand.u32 2147483647, %v2510
        %v2520 = vand.u32 2147483647, %v2511
        %v2521 = vand.u32 2147483647, %v2512
        %s2522 = sld [smem:[#allocation3 + $0x16]]
        %v2523 = vstv %s2522
        %v2524 = vmul.f32 %v2513, %v2523
        %v2525 = vmul.f32 %v2514, %v2523
        %v2526 = vmul.f32 %v2515, %v2523
        %v2527 = vmul.f32 %v2516, %v2523
        %v2528 = vmul.f32 %v2517, %v2523
        %v2529 = vmul.f32 %v2518, %v2523
        %v2530 = vmul.f32 %v2519, %v2523
        %v2531 = vmul.f32 %v2520, %v2523
        %v2532 = vmul.f32 %v2521, %v2523
        %v2533 = vadd.f32 %v2434, %v2524
        %v2534 = vadd.f32 %v2435, %v2525
        %v2535 = vadd.f32 %v2436, %v2526
        %v2536 = vadd.f32 %v2437, %v2527
        %v2537 = vadd.f32 %v2438, %v2528
        %v2538 = vadd.f32 %v2439, %v2529
        %v2539 = vadd.f32 %v2440, %v2530
        %v2540 = vadd.f32 %v2441, %v2531
        %v2541 = vadd.f32 %v2442, %v2532
        %s2542 = sld [smem:[#allocation3 + $0x96]]
        %v2543 = vstv %s2542
        %v2544 = vmul.f32 %v2513, %v2543
        %v2545 = vmul.f32 %v2514, %v2543
        %v2546 = vmul.f32 %v2515, %v2543
        %v2547 = vmul.f32 %v2516, %v2543
        %v2548 = vmul.f32 %v2517, %v2543
        %v2549 = vmul.f32 %v2518, %v2543
        %v2550 = vmul.f32 %v2519, %v2543
        %v2551 = vmul.f32 %v2520, %v2543
        %v2552 = vmul.f32 %v2521, %v2543
        %v2553 = vadd.f32 %v2454, %v2544
        %v2554 = vadd.f32 %v2455, %v2545
        %v2555 = vadd.f32 %v2456, %v2546
        %v2556 = vadd.f32 %v2457, %v2547
        %v2557 = vadd.f32 %v2458, %v2548
        %v2558 = vadd.f32 %v2459, %v2549
        %v2559 = vadd.f32 %v2460, %v2550
        %v2560 = vadd.f32 %v2461, %v2551
        %v2561 = vadd.f32 %v2462, %v2552
        %v2562 = vld [vmem:[%s229 + $0x17] sm:$0x1]
        %2563 = vset.pattern.permute.xlu0 23
        %2564 = vperm.xlu0 %2563, %v267
        %v2565 = vpop.permute.xlu0 %2564
        %2567 = vset.pattern.permute.xlu0 23
        %2568 = vperm.xlu0 %2567, %v268
        %v2569 = vpop.permute.xlu0 %2568
        %2571 = vset.pattern.permute.xlu0 23
        %2572 = vperm.xlu0 %2571, %v269
        %v2573 = vpop.permute.xlu0 %2572
        %2575 = vset.pattern.permute.xlu0 23
        %2576 = vperm.xlu0 %2575, %v270
        %v2577 = vpop.permute.xlu0 %2576
        %2579 = vset.pattern.permute.xlu0 23
        %2580 = vperm.xlu0 %2579, %v271
        %v2581 = vpop.permute.xlu0 %2580
        %2583 = vset.pattern.permute.xlu0 23
        %2584 = vperm.xlu0 %2583, %v272
        %v2585 = vpop.permute.xlu0 %2584
        %2587 = vset.pattern.permute.xlu0 23
        %2588 = vperm.xlu0 %2587, %v273
        %v2589 = vpop.permute.xlu0 %2588
        %2591 = vset.pattern.permute.xlu0 23
        %2592 = vperm.xlu0 %2591, %v274
        %v2593 = vpop.permute.xlu0 %2592
        %2595 = vset.pattern.permute.xlu0 23
        %2596 = vperm.xlu0 %2595, %v275
        %v2597 = vpop.permute.xlu0 %2596
        %v2599 = vlaneseq
        %v2600 = vshrl.u32 %v2599, 7
        %v2601 = vsub.s32 0, %v2600
        %v2602 = vrot.slane %v2562, %v2601
        %v2603 = vsub.f32 %v2565, %v2602
        %v2604 = vsub.f32 %v2569, %v2602
        %v2605 = vsub.f32 %v2573, %v2602
        %v2606 = vsub.f32 %v2577, %v2602
        %v2607 = vsub.f32 %v2581, %v2602
        %v2608 = vsub.f32 %v2585, %v2602
        %v2609 = vsub.f32 %v2589, %v2602
        %v2610 = vsub.f32 %v2593, %v2602
        %v2611 = vsub.f32 %v2597, %v2602
        %v2612 = vand.u32 2147483647, %v2603
        %v2613 = vand.u32 2147483647, %v2604
        %v2614 = vand.u32 2147483647, %v2605
        %v2615 = vand.u32 2147483647, %v2606
        %v2616 = vand.u32 2147483647, %v2607
        %v2617 = vand.u32 2147483647, %v2608
        %v2618 = vand.u32 2147483647, %v2609
        %v2619 = vand.u32 2147483647, %v2610
        %v2620 = vand.u32 2147483647, %v2611
        %s2621 = sld [smem:[#allocation3 + $0x17]]
        %v2622 = vstv %s2621
        %v2623 = vmul.f32 %v2612, %v2622
        %v2624 = vmul.f32 %v2613, %v2622
        %v2625 = vmul.f32 %v2614, %v2622
        %v2626 = vmul.f32 %v2615, %v2622
        %v2627 = vmul.f32 %v2616, %v2622
        %v2628 = vmul.f32 %v2617, %v2622
        %v2629 = vmul.f32 %v2618, %v2622
        %v2630 = vmul.f32 %v2619, %v2622
        %v2631 = vmul.f32 %v2620, %v2622
        %v2632 = vadd.f32 %v2533, %v2623
        %v2633 = vadd.f32 %v2534, %v2624
        %v2634 = vadd.f32 %v2535, %v2625
        %v2635 = vadd.f32 %v2536, %v2626
        %v2636 = vadd.f32 %v2537, %v2627
        %v2637 = vadd.f32 %v2538, %v2628
        %v2638 = vadd.f32 %v2539, %v2629
        %v2639 = vadd.f32 %v2540, %v2630
        %v2640 = vadd.f32 %v2541, %v2631
        %s2641 = sld [smem:[#allocation3 + $0x97]]
        %v2642 = vstv %s2641
        %v2643 = vmul.f32 %v2612, %v2642
        %v2644 = vmul.f32 %v2613, %v2642
        %v2645 = vmul.f32 %v2614, %v2642
        %v2646 = vmul.f32 %v2615, %v2642
        %v2647 = vmul.f32 %v2616, %v2642
        %v2648 = vmul.f32 %v2617, %v2642
        %v2649 = vmul.f32 %v2618, %v2642
        %v2650 = vmul.f32 %v2619, %v2642
        %v2651 = vmul.f32 %v2620, %v2642
        %v2652 = vadd.f32 %v2553, %v2643
        %v2653 = vadd.f32 %v2554, %v2644
        %v2654 = vadd.f32 %v2555, %v2645
        %v2655 = vadd.f32 %v2556, %v2646
        %v2656 = vadd.f32 %v2557, %v2647
        %v2657 = vadd.f32 %v2558, %v2648
        %v2658 = vadd.f32 %v2559, %v2649
        %v2659 = vadd.f32 %v2560, %v2650
        %v2660 = vadd.f32 %v2561, %v2651
        %v2661 = vld [vmem:[%s229 + $0x18] sm:$0x1]
        %2662 = vset.pattern.permute.xlu0 24
        %2663 = vperm.xlu0 %2662, %v267
        %v2664 = vpop.permute.xlu0 %2663
        %2666 = vset.pattern.permute.xlu0 24
        %2667 = vperm.xlu0 %2666, %v268
        %v2668 = vpop.permute.xlu0 %2667
        %2670 = vset.pattern.permute.xlu0 24
        %2671 = vperm.xlu0 %2670, %v269
        %v2672 = vpop.permute.xlu0 %2671
        %2674 = vset.pattern.permute.xlu0 24
        %2675 = vperm.xlu0 %2674, %v270
        %v2676 = vpop.permute.xlu0 %2675
        %2678 = vset.pattern.permute.xlu0 24
        %2679 = vperm.xlu0 %2678, %v271
        %v2680 = vpop.permute.xlu0 %2679
        %2682 = vset.pattern.permute.xlu0 24
        %2683 = vperm.xlu0 %2682, %v272
        %v2684 = vpop.permute.xlu0 %2683
        %2686 = vset.pattern.permute.xlu0 24
        %2687 = vperm.xlu0 %2686, %v273
        %v2688 = vpop.permute.xlu0 %2687
        %2690 = vset.pattern.permute.xlu0 24
        %2691 = vperm.xlu0 %2690, %v274
        %v2692 = vpop.permute.xlu0 %2691
        %2694 = vset.pattern.permute.xlu0 24
        %2695 = vperm.xlu0 %2694, %v275
        %v2696 = vpop.permute.xlu0 %2695
        %v2698 = vlaneseq
        %v2699 = vshrl.u32 %v2698, 7
        %v2700 = vsub.s32 0, %v2699
        %v2701 = vrot.slane %v2661, %v2700
        %v2702 = vsub.f32 %v2664, %v2701
        %v2703 = vsub.f32 %v2668, %v2701
        %v2704 = vsub.f32 %v2672, %v2701
        %v2705 = vsub.f32 %v2676, %v2701
        %v2706 = vsub.f32 %v2680, %v2701
        %v2707 = vsub.f32 %v2684, %v2701
        %v2708 = vsub.f32 %v2688, %v2701
        %v2709 = vsub.f32 %v2692, %v2701
        %v2710 = vsub.f32 %v2696, %v2701
        %v2711 = vand.u32 2147483647, %v2702
        %v2712 = vand.u32 2147483647, %v2703
        %v2713 = vand.u32 2147483647, %v2704
        %v2714 = vand.u32 2147483647, %v2705
        %v2715 = vand.u32 2147483647, %v2706
        %v2716 = vand.u32 2147483647, %v2707
        %v2717 = vand.u32 2147483647, %v2708
        %v2718 = vand.u32 2147483647, %v2709
        %v2719 = vand.u32 2147483647, %v2710
        %s2720 = sld [smem:[#allocation3 + $0x18]]
        %v2721 = vstv %s2720
        %v2722 = vmul.f32 %v2711, %v2721
        %v2723 = vmul.f32 %v2712, %v2721
        %v2724 = vmul.f32 %v2713, %v2721
        %v2725 = vmul.f32 %v2714, %v2721
        %v2726 = vmul.f32 %v2715, %v2721
        %v2727 = vmul.f32 %v2716, %v2721
        %v2728 = vmul.f32 %v2717, %v2721
        %v2729 = vmul.f32 %v2718, %v2721
        %v2730 = vmul.f32 %v2719, %v2721
        %v2731 = vadd.f32 %v2632, %v2722
        %v2732 = vadd.f32 %v2633, %v2723
        %v2733 = vadd.f32 %v2634, %v2724
        %v2734 = vadd.f32 %v2635, %v2725
        %v2735 = vadd.f32 %v2636, %v2726
        %v2736 = vadd.f32 %v2637, %v2727
        %v2737 = vadd.f32 %v2638, %v2728
        %v2738 = vadd.f32 %v2639, %v2729
        %v2739 = vadd.f32 %v2640, %v2730
        %s2740 = sld [smem:[#allocation3 + $0x98]]
        %v2741 = vstv %s2740
        %v2742 = vmul.f32 %v2711, %v2741
        %v2743 = vmul.f32 %v2712, %v2741
        %v2744 = vmul.f32 %v2713, %v2741
        %v2745 = vmul.f32 %v2714, %v2741
        %v2746 = vmul.f32 %v2715, %v2741
        %v2747 = vmul.f32 %v2716, %v2741
        %v2748 = vmul.f32 %v2717, %v2741
        %v2749 = vmul.f32 %v2718, %v2741
        %v2750 = vmul.f32 %v2719, %v2741
        %v2751 = vadd.f32 %v2652, %v2742
        %v2752 = vadd.f32 %v2653, %v2743
        %v2753 = vadd.f32 %v2654, %v2744
        %v2754 = vadd.f32 %v2655, %v2745
        %v2755 = vadd.f32 %v2656, %v2746
        %v2756 = vadd.f32 %v2657, %v2747
        %v2757 = vadd.f32 %v2658, %v2748
        %v2758 = vadd.f32 %v2659, %v2749
        %v2759 = vadd.f32 %v2660, %v2750
        %v2760 = vld [vmem:[%s229 + $0x19] sm:$0x1]
        %2761 = vset.pattern.permute.xlu0 25
        %2762 = vperm.xlu0 %2761, %v267
        %v2763 = vpop.permute.xlu0 %2762
        %2765 = vset.pattern.permute.xlu0 25
        %2766 = vperm.xlu0 %2765, %v268
        %v2767 = vpop.permute.xlu0 %2766
        %2769 = vset.pattern.permute.xlu0 25
        %2770 = vperm.xlu0 %2769, %v269
        %v2771 = vpop.permute.xlu0 %2770
        %2773 = vset.pattern.permute.xlu0 25
        %2774 = vperm.xlu0 %2773, %v270
        %v2775 = vpop.permute.xlu0 %2774
        %2777 = vset.pattern.permute.xlu0 25
        %2778 = vperm.xlu0 %2777, %v271
        %v2779 = vpop.permute.xlu0 %2778
        %2781 = vset.pattern.permute.xlu0 25
        %2782 = vperm.xlu0 %2781, %v272
        %v2783 = vpop.permute.xlu0 %2782
        %2785 = vset.pattern.permute.xlu0 25
        %2786 = vperm.xlu0 %2785, %v273
        %v2787 = vpop.permute.xlu0 %2786
        %2789 = vset.pattern.permute.xlu0 25
        %2790 = vperm.xlu0 %2789, %v274
        %v2791 = vpop.permute.xlu0 %2790
        %2793 = vset.pattern.permute.xlu0 25
        %2794 = vperm.xlu0 %2793, %v275
        %v2795 = vpop.permute.xlu0 %2794
        %v2797 = vlaneseq
        %v2798 = vshrl.u32 %v2797, 7
        %v2799 = vsub.s32 0, %v2798
        %v2800 = vrot.slane %v2760, %v2799
        %v2801 = vsub.f32 %v2763, %v2800
        %v2802 = vsub.f32 %v2767, %v2800
        %v2803 = vsub.f32 %v2771, %v2800
        %v2804 = vsub.f32 %v2775, %v2800
        %v2805 = vsub.f32 %v2779, %v2800
        %v2806 = vsub.f32 %v2783, %v2800
        %v2807 = vsub.f32 %v2787, %v2800
        %v2808 = vsub.f32 %v2791, %v2800
        %v2809 = vsub.f32 %v2795, %v2800
        %v2810 = vand.u32 2147483647, %v2801
        %v2811 = vand.u32 2147483647, %v2802
        %v2812 = vand.u32 2147483647, %v2803
        %v2813 = vand.u32 2147483647, %v2804
        %v2814 = vand.u32 2147483647, %v2805
        %v2815 = vand.u32 2147483647, %v2806
        %v2816 = vand.u32 2147483647, %v2807
        %v2817 = vand.u32 2147483647, %v2808
        %v2818 = vand.u32 2147483647, %v2809
        %s2819 = sld [smem:[#allocation3 + $0x19]]
        %v2820 = vstv %s2819
        %v2821 = vmul.f32 %v2810, %v2820
        %v2822 = vmul.f32 %v2811, %v2820
        %v2823 = vmul.f32 %v2812, %v2820
        %v2824 = vmul.f32 %v2813, %v2820
        %v2825 = vmul.f32 %v2814, %v2820
        %v2826 = vmul.f32 %v2815, %v2820
        %v2827 = vmul.f32 %v2816, %v2820
        %v2828 = vmul.f32 %v2817, %v2820
        %v2829 = vmul.f32 %v2818, %v2820
        %v2830 = vadd.f32 %v2731, %v2821
        %v2831 = vadd.f32 %v2732, %v2822
        %v2832 = vadd.f32 %v2733, %v2823
        %v2833 = vadd.f32 %v2734, %v2824
        %v2834 = vadd.f32 %v2735, %v2825
        %v2835 = vadd.f32 %v2736, %v2826
        %v2836 = vadd.f32 %v2737, %v2827
        %v2837 = vadd.f32 %v2738, %v2828
        %v2838 = vadd.f32 %v2739, %v2829
        %s2839 = sld [smem:[#allocation3 + $0x99]]
        %v2840 = vstv %s2839
        %v2841 = vmul.f32 %v2810, %v2840
        %v2842 = vmul.f32 %v2811, %v2840
        %v2843 = vmul.f32 %v2812, %v2840
        %v2844 = vmul.f32 %v2813, %v2840
        %v2845 = vmul.f32 %v2814, %v2840
        %v2846 = vmul.f32 %v2815, %v2840
        %v2847 = vmul.f32 %v2816, %v2840
        %v2848 = vmul.f32 %v2817, %v2840
        %v2849 = vmul.f32 %v2818, %v2840
        %v2850 = vadd.f32 %v2751, %v2841
        %v2851 = vadd.f32 %v2752, %v2842
        %v2852 = vadd.f32 %v2753, %v2843
        %v2853 = vadd.f32 %v2754, %v2844
        %v2854 = vadd.f32 %v2755, %v2845
        %v2855 = vadd.f32 %v2756, %v2846
        %v2856 = vadd.f32 %v2757, %v2847
        %v2857 = vadd.f32 %v2758, %v2848
        %v2858 = vadd.f32 %v2759, %v2849
        %v2859 = vld [vmem:[%s229 + $0x1a] sm:$0x1]
        %2860 = vset.pattern.permute.xlu0 26
        %2861 = vperm.xlu0 %2860, %v267
        %v2862 = vpop.permute.xlu0 %2861
        %2864 = vset.pattern.permute.xlu0 26
        %2865 = vperm.xlu0 %2864, %v268
        %v2866 = vpop.permute.xlu0 %2865
        %2868 = vset.pattern.permute.xlu0 26
        %2869 = vperm.xlu0 %2868, %v269
        %v2870 = vpop.permute.xlu0 %2869
        %2872 = vset.pattern.permute.xlu0 26
        %2873 = vperm.xlu0 %2872, %v270
        %v2874 = vpop.permute.xlu0 %2873
        %2876 = vset.pattern.permute.xlu0 26
        %2877 = vperm.xlu0 %2876, %v271
        %v2878 = vpop.permute.xlu0 %2877
        %2880 = vset.pattern.permute.xlu0 26
        %2881 = vperm.xlu0 %2880, %v272
        %v2882 = vpop.permute.xlu0 %2881
        %2884 = vset.pattern.permute.xlu0 26
        %2885 = vperm.xlu0 %2884, %v273
        %v2886 = vpop.permute.xlu0 %2885
        %2888 = vset.pattern.permute.xlu0 26
        %2889 = vperm.xlu0 %2888, %v274
        %v2890 = vpop.permute.xlu0 %2889
        %2892 = vset.pattern.permute.xlu0 26
        %2893 = vperm.xlu0 %2892, %v275
        %v2894 = vpop.permute.xlu0 %2893
        %v2896 = vlaneseq
        %v2897 = vshrl.u32 %v2896, 7
        %v2898 = vsub.s32 0, %v2897
        %v2899 = vrot.slane %v2859, %v2898
        %v2900 = vsub.f32 %v2862, %v2899
        %v2901 = vsub.f32 %v2866, %v2899
        %v2902 = vsub.f32 %v2870, %v2899
        %v2903 = vsub.f32 %v2874, %v2899
        %v2904 = vsub.f32 %v2878, %v2899
        %v2905 = vsub.f32 %v2882, %v2899
        %v2906 = vsub.f32 %v2886, %v2899
        %v2907 = vsub.f32 %v2890, %v2899
        %v2908 = vsub.f32 %v2894, %v2899
        %v2909 = vand.u32 2147483647, %v2900
        %v2910 = vand.u32 2147483647, %v2901
        %v2911 = vand.u32 2147483647, %v2902
        %v2912 = vand.u32 2147483647, %v2903
        %v2913 = vand.u32 2147483647, %v2904
        %v2914 = vand.u32 2147483647, %v2905
        %v2915 = vand.u32 2147483647, %v2906
        %v2916 = vand.u32 2147483647, %v2907
        %v2917 = vand.u32 2147483647, %v2908
        %s2918 = sld [smem:[#allocation3 + $0x1a]]
        %v2919 = vstv %s2918
        %v2920 = vmul.f32 %v2909, %v2919
        %v2921 = vmul.f32 %v2910, %v2919
        %v2922 = vmul.f32 %v2911, %v2919
        %v2923 = vmul.f32 %v2912, %v2919
        %v2924 = vmul.f32 %v2913, %v2919
        %v2925 = vmul.f32 %v2914, %v2919
        %v2926 = vmul.f32 %v2915, %v2919
        %v2927 = vmul.f32 %v2916, %v2919
        %v2928 = vmul.f32 %v2917, %v2919
        %v2929 = vadd.f32 %v2830, %v2920
        %v2930 = vadd.f32 %v2831, %v2921
        %v2931 = vadd.f32 %v2832, %v2922
        %v2932 = vadd.f32 %v2833, %v2923
        %v2933 = vadd.f32 %v2834, %v2924
        %v2934 = vadd.f32 %v2835, %v2925
        %v2935 = vadd.f32 %v2836, %v2926
        %v2936 = vadd.f32 %v2837, %v2927
        %v2937 = vadd.f32 %v2838, %v2928
        %s2938 = sld [smem:[#allocation3 + $0x9a]]
        %v2939 = vstv %s2938
        %v2940 = vmul.f32 %v2909, %v2939
        %v2941 = vmul.f32 %v2910, %v2939
        %v2942 = vmul.f32 %v2911, %v2939
        %v2943 = vmul.f32 %v2912, %v2939
        %v2944 = vmul.f32 %v2913, %v2939
        %v2945 = vmul.f32 %v2914, %v2939
        %v2946 = vmul.f32 %v2915, %v2939
        %v2947 = vmul.f32 %v2916, %v2939
        %v2948 = vmul.f32 %v2917, %v2939
        %v2949 = vadd.f32 %v2850, %v2940
        %v2950 = vadd.f32 %v2851, %v2941
        %v2951 = vadd.f32 %v2852, %v2942
        %v2952 = vadd.f32 %v2853, %v2943
        %v2953 = vadd.f32 %v2854, %v2944
        %v2954 = vadd.f32 %v2855, %v2945
        %v2955 = vadd.f32 %v2856, %v2946
        %v2956 = vadd.f32 %v2857, %v2947
        %v2957 = vadd.f32 %v2858, %v2948
        %v2958 = vld [vmem:[%s229 + $0x1b] sm:$0x1]
        %2959 = vset.pattern.permute.xlu0 27
        %2960 = vperm.xlu0 %2959, %v267
        %v2961 = vpop.permute.xlu0 %2960
        %2963 = vset.pattern.permute.xlu0 27
        %2964 = vperm.xlu0 %2963, %v268
        %v2965 = vpop.permute.xlu0 %2964
        %2967 = vset.pattern.permute.xlu0 27
        %2968 = vperm.xlu0 %2967, %v269
        %v2969 = vpop.permute.xlu0 %2968
        %2971 = vset.pattern.permute.xlu0 27
        %2972 = vperm.xlu0 %2971, %v270
        %v2973 = vpop.permute.xlu0 %2972
        %2975 = vset.pattern.permute.xlu0 27
        %2976 = vperm.xlu0 %2975, %v271
        %v2977 = vpop.permute.xlu0 %2976
        %2979 = vset.pattern.permute.xlu0 27
        %2980 = vperm.xlu0 %2979, %v272
        %v2981 = vpop.permute.xlu0 %2980
        %2983 = vset.pattern.permute.xlu0 27
        %2984 = vperm.xlu0 %2983, %v273
        %v2985 = vpop.permute.xlu0 %2984
        %2987 = vset.pattern.permute.xlu0 27
        %2988 = vperm.xlu0 %2987, %v274
        %v2989 = vpop.permute.xlu0 %2988
        %2991 = vset.pattern.permute.xlu0 27
        %2992 = vperm.xlu0 %2991, %v275
        %v2993 = vpop.permute.xlu0 %2992
        %v2995 = vlaneseq
        %v2996 = vshrl.u32 %v2995, 7
        %v2997 = vsub.s32 0, %v2996
        %v2998 = vrot.slane %v2958, %v2997
        %v2999 = vsub.f32 %v2961, %v2998
        %v3000 = vsub.f32 %v2965, %v2998
        %v3001 = vsub.f32 %v2969, %v2998
        %v3002 = vsub.f32 %v2973, %v2998
        %v3003 = vsub.f32 %v2977, %v2998
        %v3004 = vsub.f32 %v2981, %v2998
        %v3005 = vsub.f32 %v2985, %v2998
        %v3006 = vsub.f32 %v2989, %v2998
        %v3007 = vsub.f32 %v2993, %v2998
        %v3008 = vand.u32 2147483647, %v2999
        %v3009 = vand.u32 2147483647, %v3000
        %v3010 = vand.u32 2147483647, %v3001
        %v3011 = vand.u32 2147483647, %v3002
        %v3012 = vand.u32 2147483647, %v3003
        %v3013 = vand.u32 2147483647, %v3004
        %v3014 = vand.u32 2147483647, %v3005
        %v3015 = vand.u32 2147483647, %v3006
        %v3016 = vand.u32 2147483647, %v3007
        %s3017 = sld [smem:[#allocation3 + $0x1b]]
        %v3018 = vstv %s3017
        %v3019 = vmul.f32 %v3008, %v3018
        %v3020 = vmul.f32 %v3009, %v3018
        %v3021 = vmul.f32 %v3010, %v3018
        %v3022 = vmul.f32 %v3011, %v3018
        %v3023 = vmul.f32 %v3012, %v3018
        %v3024 = vmul.f32 %v3013, %v3018
        %v3025 = vmul.f32 %v3014, %v3018
        %v3026 = vmul.f32 %v3015, %v3018
        %v3027 = vmul.f32 %v3016, %v3018
        %v3028 = vadd.f32 %v2929, %v3019
        %v3029 = vadd.f32 %v2930, %v3020
        %v3030 = vadd.f32 %v2931, %v3021
        %v3031 = vadd.f32 %v2932, %v3022
        %v3032 = vadd.f32 %v2933, %v3023
        %v3033 = vadd.f32 %v2934, %v3024
        %v3034 = vadd.f32 %v2935, %v3025
        %v3035 = vadd.f32 %v2936, %v3026
        %v3036 = vadd.f32 %v2937, %v3027
        %s3037 = sld [smem:[#allocation3 + $0x9b]]
        %v3038 = vstv %s3037
        %v3039 = vmul.f32 %v3008, %v3038
        %v3040 = vmul.f32 %v3009, %v3038
        %v3041 = vmul.f32 %v3010, %v3038
        %v3042 = vmul.f32 %v3011, %v3038
        %v3043 = vmul.f32 %v3012, %v3038
        %v3044 = vmul.f32 %v3013, %v3038
        %v3045 = vmul.f32 %v3014, %v3038
        %v3046 = vmul.f32 %v3015, %v3038
        %v3047 = vmul.f32 %v3016, %v3038
        %v3048 = vadd.f32 %v2949, %v3039
        %v3049 = vadd.f32 %v2950, %v3040
        %v3050 = vadd.f32 %v2951, %v3041
        %v3051 = vadd.f32 %v2952, %v3042
        %v3052 = vadd.f32 %v2953, %v3043
        %v3053 = vadd.f32 %v2954, %v3044
        %v3054 = vadd.f32 %v2955, %v3045
        %v3055 = vadd.f32 %v2956, %v3046
        %v3056 = vadd.f32 %v2957, %v3047
        %v3057 = vld [vmem:[%s229 + $0x1c] sm:$0x1]
        %3058 = vset.pattern.permute.xlu0 28
        %3059 = vperm.xlu0 %3058, %v267
        %v3060 = vpop.permute.xlu0 %3059
        %3062 = vset.pattern.permute.xlu0 28
        %3063 = vperm.xlu0 %3062, %v268
        %v3064 = vpop.permute.xlu0 %3063
        %3066 = vset.pattern.permute.xlu0 28
        %3067 = vperm.xlu0 %3066, %v269
        %v3068 = vpop.permute.xlu0 %3067
        %3070 = vset.pattern.permute.xlu0 28
        %3071 = vperm.xlu0 %3070, %v270
        %v3072 = vpop.permute.xlu0 %3071
        %3074 = vset.pattern.permute.xlu0 28
        %3075 = vperm.xlu0 %3074, %v271
        %v3076 = vpop.permute.xlu0 %3075
        %3078 = vset.pattern.permute.xlu0 28
        %3079 = vperm.xlu0 %3078, %v272
        %v3080 = vpop.permute.xlu0 %3079
        %3082 = vset.pattern.permute.xlu0 28
        %3083 = vperm.xlu0 %3082, %v273
        %v3084 = vpop.permute.xlu0 %3083
        %3086 = vset.pattern.permute.xlu0 28
        %3087 = vperm.xlu0 %3086, %v274
        %v3088 = vpop.permute.xlu0 %3087
        %3090 = vset.pattern.permute.xlu0 28
        %3091 = vperm.xlu0 %3090, %v275
        %v3092 = vpop.permute.xlu0 %3091
        %v3094 = vlaneseq
        %v3095 = vshrl.u32 %v3094, 7
        %v3096 = vsub.s32 0, %v3095
        %v3097 = vrot.slane %v3057, %v3096
        %v3098 = vsub.f32 %v3060, %v3097
        %v3099 = vsub.f32 %v3064, %v3097
        %v3100 = vsub.f32 %v3068, %v3097
        %v3101 = vsub.f32 %v3072, %v3097
        %v3102 = vsub.f32 %v3076, %v3097
        %v3103 = vsub.f32 %v3080, %v3097
        %v3104 = vsub.f32 %v3084, %v3097
        %v3105 = vsub.f32 %v3088, %v3097
        %v3106 = vsub.f32 %v3092, %v3097
        %v3107 = vand.u32 2147483647, %v3098
        %v3108 = vand.u32 2147483647, %v3099
        %v3109 = vand.u32 2147483647, %v3100
        %v3110 = vand.u32 2147483647, %v3101
        %v3111 = vand.u32 2147483647, %v3102
        %v3112 = vand.u32 2147483647, %v3103
        %v3113 = vand.u32 2147483647, %v3104
        %v3114 = vand.u32 2147483647, %v3105
        %v3115 = vand.u32 2147483647, %v3106
        %s3116 = sld [smem:[#allocation3 + $0x1c]]
        %v3117 = vstv %s3116
        %v3118 = vmul.f32 %v3107, %v3117
        %v3119 = vmul.f32 %v3108, %v3117
        %v3120 = vmul.f32 %v3109, %v3117
        %v3121 = vmul.f32 %v3110, %v3117
        %v3122 = vmul.f32 %v3111, %v3117
        %v3123 = vmul.f32 %v3112, %v3117
        %v3124 = vmul.f32 %v3113, %v3117
        %v3125 = vmul.f32 %v3114, %v3117
        %v3126 = vmul.f32 %v3115, %v3117
        %v3127 = vadd.f32 %v3028, %v3118
        %v3128 = vadd.f32 %v3029, %v3119
        %v3129 = vadd.f32 %v3030, %v3120
        %v3130 = vadd.f32 %v3031, %v3121
        %v3131 = vadd.f32 %v3032, %v3122
        %v3132 = vadd.f32 %v3033, %v3123
        %v3133 = vadd.f32 %v3034, %v3124
        %v3134 = vadd.f32 %v3035, %v3125
        %v3135 = vadd.f32 %v3036, %v3126
        %s3136 = sld [smem:[#allocation3 + $0x9c]]
        %v3137 = vstv %s3136
        %v3138 = vmul.f32 %v3107, %v3137
        %v3139 = vmul.f32 %v3108, %v3137
        %v3140 = vmul.f32 %v3109, %v3137
        %v3141 = vmul.f32 %v3110, %v3137
        %v3142 = vmul.f32 %v3111, %v3137
        %v3143 = vmul.f32 %v3112, %v3137
        %v3144 = vmul.f32 %v3113, %v3137
        %v3145 = vmul.f32 %v3114, %v3137
        %v3146 = vmul.f32 %v3115, %v3137
        %v3147 = vadd.f32 %v3048, %v3138
        %v3148 = vadd.f32 %v3049, %v3139
        %v3149 = vadd.f32 %v3050, %v3140
        %v3150 = vadd.f32 %v3051, %v3141
        %v3151 = vadd.f32 %v3052, %v3142
        %v3152 = vadd.f32 %v3053, %v3143
        %v3153 = vadd.f32 %v3054, %v3144
        %v3154 = vadd.f32 %v3055, %v3145
        %v3155 = vadd.f32 %v3056, %v3146
        %v3156 = vld [vmem:[%s229 + $0x1d] sm:$0x1]
        %3157 = vset.pattern.permute.xlu0 29
        %3158 = vperm.xlu0 %3157, %v267
        %v3159 = vpop.permute.xlu0 %3158
        %3161 = vset.pattern.permute.xlu0 29
        %3162 = vperm.xlu0 %3161, %v268
        %v3163 = vpop.permute.xlu0 %3162
        %3165 = vset.pattern.permute.xlu0 29
        %3166 = vperm.xlu0 %3165, %v269
        %v3167 = vpop.permute.xlu0 %3166
        %3169 = vset.pattern.permute.xlu0 29
        %3170 = vperm.xlu0 %3169, %v270
        %v3171 = vpop.permute.xlu0 %3170
        %3173 = vset.pattern.permute.xlu0 29
        %3174 = vperm.xlu0 %3173, %v271
        %v3175 = vpop.permute.xlu0 %3174
        %3177 = vset.pattern.permute.xlu0 29
        %3178 = vperm.xlu0 %3177, %v272
        %v3179 = vpop.permute.xlu0 %3178
        %3181 = vset.pattern.permute.xlu0 29
        %3182 = vperm.xlu0 %3181, %v273
        %v3183 = vpop.permute.xlu0 %3182
        %3185 = vset.pattern.permute.xlu0 29
        %3186 = vperm.xlu0 %3185, %v274
        %v3187 = vpop.permute.xlu0 %3186
        %3189 = vset.pattern.permute.xlu0 29
        %3190 = vperm.xlu0 %3189, %v275
        %v3191 = vpop.permute.xlu0 %3190
        %v3193 = vlaneseq
        %v3194 = vshrl.u32 %v3193, 7
        %v3195 = vsub.s32 0, %v3194
        %v3196 = vrot.slane %v3156, %v3195
        %v3197 = vsub.f32 %v3159, %v3196
        %v3198 = vsub.f32 %v3163, %v3196
        %v3199 = vsub.f32 %v3167, %v3196
        %v3200 = vsub.f32 %v3171, %v3196
        %v3201 = vsub.f32 %v3175, %v3196
        %v3202 = vsub.f32 %v3179, %v3196
        %v3203 = vsub.f32 %v3183, %v3196
        %v3204 = vsub.f32 %v3187, %v3196
        %v3205 = vsub.f32 %v3191, %v3196
        %v3206 = vand.u32 2147483647, %v3197
        %v3207 = vand.u32 2147483647, %v3198
        %v3208 = vand.u32 2147483647, %v3199
        %v3209 = vand.u32 2147483647, %v3200
        %v3210 = vand.u32 2147483647, %v3201
        %v3211 = vand.u32 2147483647, %v3202
        %v3212 = vand.u32 2147483647, %v3203
        %v3213 = vand.u32 2147483647, %v3204
        %v3214 = vand.u32 2147483647, %v3205
        %s3215 = sld [smem:[#allocation3 + $0x1d]]
        %v3216 = vstv %s3215
        %v3217 = vmul.f32 %v3206, %v3216
        %v3218 = vmul.f32 %v3207, %v3216
        %v3219 = vmul.f32 %v3208, %v3216
        %v3220 = vmul.f32 %v3209, %v3216
        %v3221 = vmul.f32 %v3210, %v3216
        %v3222 = vmul.f32 %v3211, %v3216
        %v3223 = vmul.f32 %v3212, %v3216
        %v3224 = vmul.f32 %v3213, %v3216
        %v3225 = vmul.f32 %v3214, %v3216
        %v3226 = vadd.f32 %v3127, %v3217
        %v3227 = vadd.f32 %v3128, %v3218
        %v3228 = vadd.f32 %v3129, %v3219
        %v3229 = vadd.f32 %v3130, %v3220
        %v3230 = vadd.f32 %v3131, %v3221
        %v3231 = vadd.f32 %v3132, %v3222
        %v3232 = vadd.f32 %v3133, %v3223
        %v3233 = vadd.f32 %v3134, %v3224
        %v3234 = vadd.f32 %v3135, %v3225
        %s3235 = sld [smem:[#allocation3 + $0x9d]]
        %v3236 = vstv %s3235
        %v3237 = vmul.f32 %v3206, %v3236
        %v3238 = vmul.f32 %v3207, %v3236
        %v3239 = vmul.f32 %v3208, %v3236
        %v3240 = vmul.f32 %v3209, %v3236
        %v3241 = vmul.f32 %v3210, %v3236
        %v3242 = vmul.f32 %v3211, %v3236
        %v3243 = vmul.f32 %v3212, %v3236
        %v3244 = vmul.f32 %v3213, %v3236
        %v3245 = vmul.f32 %v3214, %v3236
        %v3246 = vadd.f32 %v3147, %v3237
        %v3247 = vadd.f32 %v3148, %v3238
        %v3248 = vadd.f32 %v3149, %v3239
        %v3249 = vadd.f32 %v3150, %v3240
        %v3250 = vadd.f32 %v3151, %v3241
        %v3251 = vadd.f32 %v3152, %v3242
        %v3252 = vadd.f32 %v3153, %v3243
        %v3253 = vadd.f32 %v3154, %v3244
        %v3254 = vadd.f32 %v3155, %v3245
        %v3255 = vld [vmem:[%s229 + $0x1e] sm:$0x1]
        %3256 = vset.pattern.permute.xlu0 30
        %3257 = vperm.xlu0 %3256, %v267
        %v3258 = vpop.permute.xlu0 %3257
        %3260 = vset.pattern.permute.xlu0 30
        %3261 = vperm.xlu0 %3260, %v268
        %v3262 = vpop.permute.xlu0 %3261
        %3264 = vset.pattern.permute.xlu0 30
        %3265 = vperm.xlu0 %3264, %v269
        %v3266 = vpop.permute.xlu0 %3265
        %3268 = vset.pattern.permute.xlu0 30
        %3269 = vperm.xlu0 %3268, %v270
        %v3270 = vpop.permute.xlu0 %3269
        %3272 = vset.pattern.permute.xlu0 30
        %3273 = vperm.xlu0 %3272, %v271
        %v3274 = vpop.permute.xlu0 %3273
        %3276 = vset.pattern.permute.xlu0 30
        %3277 = vperm.xlu0 %3276, %v272
        %v3278 = vpop.permute.xlu0 %3277
        %3280 = vset.pattern.permute.xlu0 30
        %3281 = vperm.xlu0 %3280, %v273
        %v3282 = vpop.permute.xlu0 %3281
        %3284 = vset.pattern.permute.xlu0 30
        %3285 = vperm.xlu0 %3284, %v274
        %v3286 = vpop.permute.xlu0 %3285
        %3288 = vset.pattern.permute.xlu0 30
        %3289 = vperm.xlu0 %3288, %v275
        %v3290 = vpop.permute.xlu0 %3289
        %v3292 = vlaneseq
        %v3293 = vshrl.u32 %v3292, 7
        %v3294 = vsub.s32 0, %v3293
        %v3295 = vrot.slane %v3255, %v3294
        %v3296 = vsub.f32 %v3258, %v3295
        %v3297 = vsub.f32 %v3262, %v3295
        %v3298 = vsub.f32 %v3266, %v3295
        %v3299 = vsub.f32 %v3270, %v3295
        %v3300 = vsub.f32 %v3274, %v3295
        %v3301 = vsub.f32 %v3278, %v3295
        %v3302 = vsub.f32 %v3282, %v3295
        %v3303 = vsub.f32 %v3286, %v3295
        %v3304 = vsub.f32 %v3290, %v3295
        %v3305 = vand.u32 2147483647, %v3296
        %v3306 = vand.u32 2147483647, %v3297
        %v3307 = vand.u32 2147483647, %v3298
        %v3308 = vand.u32 2147483647, %v3299
        %v3309 = vand.u32 2147483647, %v3300
        %v3310 = vand.u32 2147483647, %v3301
        %v3311 = vand.u32 2147483647, %v3302
        %v3312 = vand.u32 2147483647, %v3303
        %v3313 = vand.u32 2147483647, %v3304
        %s3314 = sld [smem:[#allocation3 + $0x1e]]
        %v3315 = vstv %s3314
        %v3316 = vmul.f32 %v3305, %v3315
        %v3317 = vmul.f32 %v3306, %v3315
        %v3318 = vmul.f32 %v3307, %v3315
        %v3319 = vmul.f32 %v3308, %v3315
        %v3320 = vmul.f32 %v3309, %v3315
        %v3321 = vmul.f32 %v3310, %v3315
        %v3322 = vmul.f32 %v3311, %v3315
        %v3323 = vmul.f32 %v3312, %v3315
        %v3324 = vmul.f32 %v3313, %v3315
        %v3325 = vadd.f32 %v3226, %v3316
        %v3326 = vadd.f32 %v3227, %v3317
        %v3327 = vadd.f32 %v3228, %v3318
        %v3328 = vadd.f32 %v3229, %v3319
        %v3329 = vadd.f32 %v3230, %v3320
        %v3330 = vadd.f32 %v3231, %v3321
        %v3331 = vadd.f32 %v3232, %v3322
        %v3332 = vadd.f32 %v3233, %v3323
        %v3333 = vadd.f32 %v3234, %v3324
        %s3334 = sld [smem:[#allocation3 + $0x9e]]
        %v3335 = vstv %s3334
        %v3336 = vmul.f32 %v3305, %v3335
        %v3337 = vmul.f32 %v3306, %v3335
        %v3338 = vmul.f32 %v3307, %v3335
        %v3339 = vmul.f32 %v3308, %v3335
        %v3340 = vmul.f32 %v3309, %v3335
        %v3341 = vmul.f32 %v3310, %v3335
        %v3342 = vmul.f32 %v3311, %v3335
        %v3343 = vmul.f32 %v3312, %v3335
        %v3344 = vmul.f32 %v3313, %v3335
        %v3345 = vadd.f32 %v3246, %v3336
        %v3346 = vadd.f32 %v3247, %v3337
        %v3347 = vadd.f32 %v3248, %v3338
        %v3348 = vadd.f32 %v3249, %v3339
        %v3349 = vadd.f32 %v3250, %v3340
        %v3350 = vadd.f32 %v3251, %v3341
        %v3351 = vadd.f32 %v3252, %v3342
        %v3352 = vadd.f32 %v3253, %v3343
        %v3353 = vadd.f32 %v3254, %v3344
        %v3354 = vld [vmem:[%s229 + $0x1f] sm:$0x1]
        %3355 = vset.pattern.permute.xlu0 31
        %3356 = vperm.xlu0 %3355, %v267
        %v3357 = vpop.permute.xlu0 %3356
        %3359 = vset.pattern.permute.xlu0 31
        %3360 = vperm.xlu0 %3359, %v268
        %v3361 = vpop.permute.xlu0 %3360
        %3363 = vset.pattern.permute.xlu0 31
        %3364 = vperm.xlu0 %3363, %v269
        %v3365 = vpop.permute.xlu0 %3364
        %3367 = vset.pattern.permute.xlu0 31
        %3368 = vperm.xlu0 %3367, %v270
        %v3369 = vpop.permute.xlu0 %3368
        %3371 = vset.pattern.permute.xlu0 31
        %3372 = vperm.xlu0 %3371, %v271
        %v3373 = vpop.permute.xlu0 %3372
        %3375 = vset.pattern.permute.xlu0 31
        %3376 = vperm.xlu0 %3375, %v272
        %v3377 = vpop.permute.xlu0 %3376
        %3379 = vset.pattern.permute.xlu0 31
        %3380 = vperm.xlu0 %3379, %v273
        %v3381 = vpop.permute.xlu0 %3380
        %3383 = vset.pattern.permute.xlu0 31
        %3384 = vperm.xlu0 %3383, %v274
        %v3385 = vpop.permute.xlu0 %3384
        %3387 = vset.pattern.permute.xlu0 31
        %3388 = vperm.xlu0 %3387, %v275
        %v3389 = vpop.permute.xlu0 %3388
        %v3391 = vlaneseq
        %v3392 = vshrl.u32 %v3391, 7
        %v3393 = vsub.s32 0, %v3392
        %v3394 = vrot.slane %v3354, %v3393
        %v3395 = vsub.f32 %v3357, %v3394
        %v3396 = vsub.f32 %v3361, %v3394
        %v3397 = vsub.f32 %v3365, %v3394
        %v3398 = vsub.f32 %v3369, %v3394
        %v3399 = vsub.f32 %v3373, %v3394
        %v3400 = vsub.f32 %v3377, %v3394
        %v3401 = vsub.f32 %v3381, %v3394
        %v3402 = vsub.f32 %v3385, %v3394
        %v3403 = vsub.f32 %v3389, %v3394
        %v3404 = vand.u32 2147483647, %v3395
        %v3405 = vand.u32 2147483647, %v3396
        %v3406 = vand.u32 2147483647, %v3397
        %v3407 = vand.u32 2147483647, %v3398
        %v3408 = vand.u32 2147483647, %v3399
        %v3409 = vand.u32 2147483647, %v3400
        %v3410 = vand.u32 2147483647, %v3401
        %v3411 = vand.u32 2147483647, %v3402
        %v3412 = vand.u32 2147483647, %v3403
        %s3413 = sld [smem:[#allocation3 + $0x1f]]
        %v3414 = vstv %s3413
        %v3415 = vmul.f32 %v3404, %v3414
        %v3416 = vmul.f32 %v3405, %v3414
        %v3417 = vmul.f32 %v3406, %v3414
        %v3418 = vmul.f32 %v3407, %v3414
        %v3419 = vmul.f32 %v3408, %v3414
        %v3420 = vmul.f32 %v3409, %v3414
        %v3421 = vmul.f32 %v3410, %v3414
        %v3422 = vmul.f32 %v3411, %v3414
        %v3423 = vmul.f32 %v3412, %v3414
        %v3424 = vadd.f32 %v3325, %v3415
        %v3425 = vadd.f32 %v3326, %v3416
        %v3426 = vadd.f32 %v3327, %v3417
        %v3427 = vadd.f32 %v3328, %v3418
        %v3428 = vadd.f32 %v3329, %v3419
        %v3429 = vadd.f32 %v3330, %v3420
        %v3430 = vadd.f32 %v3331, %v3421
        %v3431 = vadd.f32 %v3332, %v3422
        %v3432 = vadd.f32 %v3333, %v3423
        %s3433 = sld [smem:[#allocation3 + $0x9f]]
        %v3434 = vstv %s3433
        %v3435 = vmul.f32 %v3404, %v3434
        %v3436 = vmul.f32 %v3405, %v3434
        %v3437 = vmul.f32 %v3406, %v3434
        %v3438 = vmul.f32 %v3407, %v3434
        %v3439 = vmul.f32 %v3408, %v3434
        %v3440 = vmul.f32 %v3409, %v3434
        %v3441 = vmul.f32 %v3410, %v3434
        %v3442 = vmul.f32 %v3411, %v3434
        %v3443 = vmul.f32 %v3412, %v3434
        %v3444 = vadd.f32 %v3345, %v3435
        %v3445 = vadd.f32 %v3346, %v3436
        %v3446 = vadd.f32 %v3347, %v3437
        %v3447 = vadd.f32 %v3348, %v3438
        %v3448 = vadd.f32 %v3349, %v3439
        %v3449 = vadd.f32 %v3350, %v3440
        %v3450 = vadd.f32 %v3351, %v3441
        %v3451 = vadd.f32 %v3352, %v3442
        %v3452 = vadd.f32 %v3353, %v3443
        %3453 = vst [vmem:[%s259] sm:$0xff] %v3424
        %3454 = vst [vmem:[%s259 + $0x8] sm:$0xff] %v3425
        %3455 = vst [vmem:[%s259 + $0x10] sm:$0xff] %v3426
        %3456 = vst [vmem:[%s259 + $0x18] sm:$0xff] %v3427
        %3457 = vst [vmem:[%s259 + $0x20] sm:$0xff] %v3428
        %3458 = vst [vmem:[%s259 + $0x28] sm:$0xff] %v3429
        %3459 = vst [vmem:[%s259 + $0x30] sm:$0xff] %v3430
        %3460 = vst [vmem:[%s259 + $0x38] sm:$0xff] %v3431
        %3461 = vst [vmem:[%s259 + $0x40] sm:$0xff] %v3432
        %s3462 = scalar_lea.vmem %s259, 72 [#allocation6]
        %3463 = vst [vmem:[%s3462] sm:$0xff] %v3444
        %3464 = vst [vmem:[%s3462 + $0x8] sm:$0xff] %v3445
        %3465 = vst [vmem:[%s3462 + $0x10] sm:$0xff] %v3446
        %3466 = vst [vmem:[%s3462 + $0x18] sm:$0xff] %v3447
        %3467 = vst [vmem:[%s3462 + $0x20] sm:$0xff] %v3448
        %3468 = vst [vmem:[%s3462 + $0x28] sm:$0xff] %v3449
        %3469 = vst [vmem:[%s3462 + $0x30] sm:$0xff] %v3450
        %3470 = vst [vmem:[%s3462 + $0x38] sm:$0xff] %v3451
        %3471 = vst [vmem:[%s3462 + $0x40] sm:$0xff] %v3452
        %s3472 = sand.u32 %s113, 1
        %s3473 = scalar_lea.sflag [#allocation4], %s3472
        %s3474 = sand.u32 %s113, 1
        %s3475 = smul.addr %s3474, 144
        %s3476 = scalar_lea.vmem [#allocation6], %s3475
        // Predicated region
        $region75: #{tpu_custom_call.1} parent=65 // pred_check
          %p3477 = pneg %p123
        $region76: #{tpu_custom_call.1} parent=65 // pred_check_branch
          %3479 = sbr.rel (%p3477) target = $region78
        $region77: #{tpu_custom_call.1} parent=65 // pred_region
          %s3480 = smul.u32 9, %s22
          %s3482 = ssub.s32 2304, 2304
          %3483 = vsyncadd %s3473, %s3482
          %s3484 = smul.addr %s3480, 3
          %s3485 = sadd.s32 %s23, %s3484
          %s3486 = smul.addr %s3485, 128
          %s3487 = scalar_lea.hbm %s3, %s3486
          %s3488 = sshll.u32 %s3476, 4
          %s3489 = int_to_ptr.vmem [resolvable:$true] %s3488
          %3494 = dma.vmem_to_hbm [thread:$0]  %s3489, 2304, %s3487, %s3473, 128, 384, 8
        $region78: #{tpu_custom_call.1} parent=65 // pred_fallthru
          _
      $region66: #{tpu_custom_call.1} parent=5 // pred_fallthru
        _
      %p3495 = scmp.le.s32.totalorder 2, %s13
      // Predicated region
      $region79: #{tpu_custom_call.1} parent=5 // pred_check
        %p3496 = pneg %p3495
      $region80: #{tpu_custom_call.1} parent=5 // pred_check_branch
        %3498 = sbr.rel (%p3496) target = $region82
      $region81: #{tpu_custom_call.1} parent=5 // pred_region
        %s3499 = ssub.s32 %s13, 2
        // Predicated region
        $region83: #{tpu_custom_call.1} parent=81 // pred_check
          %p3500 = pneg %p129
        $region84: #{tpu_custom_call.1} parent=81 // pred_check_branch
          %3502 = sbr.rel (%p3500) target = $region86
        $region85: #{tpu_custom_call.1} parent=81 // pred_region
          %s3503 = sand.u32 %s114, 1
          %s3504 = scalar_lea.sflag [#allocation4], %s3503
          %s3505 = sand.u32 %s114, 1
          %s3506 = smul.addr %s3505, 144
          %s3507 = scalar_lea.vmem [#allocation6], %s3506
          %3508 = dma.done %s3504, 2304
        $region86: #{tpu_custom_call.1} parent=81 // pred_fallthru
          _
      $region82: #{tpu_custom_call.1} parent=5 // pred_fallthru
        _
    $region6: #{tpu_custom_call.1} parent=1 // loop_footer
      %s17 = sadd.s32 1, %s13
    $region7: #{tpu_custom_call.1} parent=1 // loop_footer_branch
      %12 = sbr.rel target = $region3
    $region8: #{tpu_custom_call.1} parent=1 // loop_exit
      _
    %3509 = vsyncpa [#allocation4], 1
    %s3510 = scalar_lea.sflag [#allocation4], 1
    %3511 = vsyncpa %s3510, 1
    %3512 = vsyncpa [#allocation5], 1
    %s3513 = scalar_lea.sflag [#allocation5], 1
    %3514 = vsyncpa %s3513, 1

</llo_original>
